<compile_context>
chip_gen: v7x
topology: tpu7x:2x2x1
jax: 0.10.0
libtpu: 0.0.40
codegen_flags: <defaults>
</compile_context>

<pallas_src>
import functools

import jax
import jax.numpy as jnp
from jax.experimental import pallas as pl
from jax.experimental.pallas import tpu as pltpu


# ---------------------------------------------------------------------------
# Fused kernel: embedding (step 0) + one transformer layer per grid step
# (activations resident in VMEM scratch) + classification head (last step).
# ---------------------------------------------------------------------------
def _fused_forward_kernel(
    # constant inputs (same block every step)
    xp_ref,        # (B*N, C*P)  zero-padded patch rows (cls rows are zero)
    extra_ref,     # (B*N, D)    cls token + positional embedding + embed bias
    w_emb_ref,     # (C*P, D)
    # per-layer inputs (leading depth axis, streamed one layer per step)
    ln1_g_ref, ln1_b_ref,            # (1, 1, D)
    wq_ref, wk_ref, wv_ref,          # (1, H, D, hd)
    wo_ref,                          # (1, H, hd, D)
    bo_ref,                          # (1, 1, D)
    ln2_g_ref, ln2_b_ref,            # (1, 1, D)
    w1_ref, b1_ref, w2_ref, b2_ref,  # (1, D, M), (1, 1, M), (1, M, D), (1, 1, D)
    # constant head inputs
    lnh_g_ref, lnh_b_ref,            # (1, D)
    wh_ref, bh_ref,                  # (D, num_classes), (1, num_classes)
    # output
    out_ref,                         # (B*N, num_classes) per-position logits
    # scratch
    xs_ref,                          # (B*N, D) resident activations
    *, batch, seq, heads, head_dim):

    layer = pl.program_id(0)
    n_layers = pl.num_programs(0)
    B, N = batch, seq
    scale = float(head_dim) ** -0.5

    def layer_norm(v, g, b):
        mu = jnp.mean(v, axis=-1, keepdims=True)
        var = jnp.mean(v * v, axis=-1, keepdims=True) - mu * mu   # one-pass variance
        return (v - mu) * jax.lax.rsqrt(var + 1e-5) * g + b

    # ---- grid step 0: patch embedding + cls/pos assembly -> VMEM scratch -----
    @pl.when(layer == 0)
    def _():
        emb = jnp.dot(xp_ref[...], w_emb_ref[...],
                      preferred_element_type=jnp.float32)
        xs_ref[...] = emb + extra_ref[...]

    x = xs_ref[...]                                  # (B*N, D), fp32, VMEM-resident

    # ---- PreNorm + multi-head attention (heads batched via dot_general) ------
    xn = layer_norm(x, ln1_g_ref[0], ln1_b_ref[0])
    wq, wk, wv, wo = wq_ref[0], wk_ref[0], wv_ref[0], wo_ref[0]
    d_model = xn.shape[-1]

    attn_rows = []
    for b in range(B):                               # static unroll; B is small
        # N is a multiple of 8 here, so this row slice stays sublane-aligned.
        xb = jnp.broadcast_to(xn[b * N:(b + 1) * N, :], (heads, N, d_model))
        q = jnp.einsum('hnd,hde->hne', xb, wq, preferred_element_type=jnp.float32)
        k = jnp.einsum('hnd,hde->hne', xb, wk, preferred_element_type=jnp.float32)
        v = jnp.einsum('hnd,hde->hne', xb, wv, preferred_element_type=jnp.float32)
        s = jnp.einsum('hqd,hkd->hqk', q, k, preferred_element_type=jnp.float32) * scale
        s = s - jnp.max(s, axis=-1, keepdims=True)
        e = jnp.exp(s)
        attn = e * pl.reciprocal(jnp.sum(e, axis=-1, keepdims=True), approx=True)
        o = jnp.einsum('hqk,hkd->hqd', attn, v, preferred_element_type=jnp.float32)
        # per-head output projection, summed over heads == ('b n (h d)') @ W_o
        op = jnp.einsum('hnd,hdk->hnk', o, wo, preferred_element_type=jnp.float32)
        acc = op[0]
        for h in range(1, heads):
            acc = acc + op[h]
        attn_rows.append(acc)
    attn_out = jnp.concatenate(attn_rows, axis=0) + bo_ref[0]
    x = x + attn_out                                 # residual 1

    # ---- PreNorm + FeedForward ------------------------------------------------
    xn2 = layer_norm(x, ln2_g_ref[0], ln2_b_ref[0])
    h1 = jnp.dot(xn2, w1_ref[0], preferred_element_type=jnp.float32) + b1_ref[0]
    h1 = 0.5 * h1 * (1.0 + jax.lax.erf(h1 * (2.0 ** -0.5)))       # exact (erf) GELU
    ff = jnp.dot(h1, w2_ref[0], preferred_element_type=jnp.float32) + b2_ref[0]
    x = x + ff                                       # residual 2

    xs_ref[...] = x                                  # stays in VMEM for next layer

    # ---- last step: classification head (LayerNorm + Linear) per position ----
    # (cls-row selection is a pure indexing op, done in the wrapper)
    @pl.when(layer == n_layers - 1)
    def _():
        xh = layer_norm(x, lnh_g_ref[...], lnh_b_ref[...])
        out_ref[...] = (jnp.dot(xh, wh_ref[...], preferred_element_type=jnp.float32)
                        + bh_ref[...]).astype(out_ref.dtype)


# ---------------------------------------------------------------------------
# Wrapper: layout-only preprocessing + single fused pallas_call.
# ---------------------------------------------------------------------------
def lfp_transformer_forward_pallas(x, params, *, t_patch_size, heads,
                                   head_channels, num_classes):
    """Full forward of LFP_Transformer_LARGE (pool_func='cls', dropout=0)."""
    B, C, T = x.shape
    P = t_patch_size
    assert T % P == 0
    W = T // P
    N = W + 1                                  # +1 cls token
    CP = C * P
    D = params["w_emb"].shape[1]
    depth = len(params["layers"])
    hd = head_channels

    # ---- data-layout-only preprocessing (wrapper / XLA) -----------------------
    # rearrange 'b c (w p) -> b w (c p)'
    patches = x.reshape(B, C, W, P).transpose(0, 2, 1, 3).reshape(B, W, CP)
    # zero placeholder row per batch at the cls position, rows flattened b-major
    xp = jnp.concatenate([jnp.zeros((B, 1, CP), x.dtype), patches], axis=1)
    xp = xp.reshape(B * N, CP)
    # additive per-row term: cls row -> cls_token + pos[0]; patch row n -> b_emb + pos[n]
    extra_one = jnp.concatenate(
        [params["cls"] + params["pos"][0:1],
         params["b_emb"] + params["pos"][1:N]], axis=0)            # (N, D)
    extra = jnp.tile(extra_one, (B, 1))                            # (B*N, D)

    # ---- stack per-layer weights over depth; pre-split q/k/v/out per head -----
    layers = params["layers"]

    def stack(key):
        return jnp.stack([p[key] for p in layers])

    wqkv = jnp.stack([p["w_qkv"].reshape(D, 3, heads, hd).transpose(1, 2, 0, 3)
                      for p in layers])                            # (depth, 3, H, D, hd)
    wq, wk, wv = wqkv[:, 0], wqkv[:, 1], wqkv[:, 2]                # (depth, H, D, hd)
    wo = jnp.stack([p["w_o"].reshape(heads, hd, D) for p in layers])  # (depth, H, hd, D)
    ln1_g, ln1_b = stack("ln1_g"), stack("ln1_b")                  # (depth, 1, D)
    bo = stack("b_o")
    ln2_g, ln2_b = stack("ln2_g"), stack("ln2_b")
    w1, b1 = stack("w1"), stack("b1")                              # (depth, D, M), (depth, 1, M)
    w2, b2 = stack("w2"), stack("b2")                              # (depth, M, D), (depth, 1, D)

    const_in = [xp, extra, params["w_emb"]]
    layer_in = [ln1_g, ln1_b, wq, wk, wv, wo, bo, ln2_g, ln2_b, w1, b1, w2, b2]
    head_in = [params["lnh_g"], params["lnh_b"], params["w_head"], params["b_head"]]

    def const_spec(a):
        nd = a.ndim
        return pl.BlockSpec(a.shape, lambda l, _nd=nd: (0,) * _nd)

    def layer_spec(a):
        nd = a.ndim
        return pl.BlockSpec((1,) + a.shape[1:],
                            lambda l, _nd=nd: (l,) + (0,) * (_nd - 1))

    kernel = functools.partial(_fused_forward_kernel, batch=B, seq=N,
                               heads=heads, head_dim=hd)

    logits_all = pl.pallas_call(
        kernel,
        out_shape=jax.ShapeDtypeStruct((B * N, num_classes), jnp.float32),
        grid_spec=pltpu.PrefetchScalarGridSpec(
            num_scalar_prefetch=0,
            grid=(depth,),                       # one grid step per transformer layer
            in_specs=([const_spec(a) for a in const_in]
                      + [layer_spec(a) for a in layer_in]
                      + [const_spec(a) for a in head_in]),
            out_specs=pl.BlockSpec((B * N, num_classes), lambda l: (0, 0)),
            scratch_shapes=[pltpu.VMEM((B * N, D), jnp.float32)],
        ),
        compiler_params=pltpu.CompilerParams(
            dimension_semantics=("arbitrary",)),  # carried dependency across layers
    )(*const_in, *layer_in, *head_in)

    # pool_func='cls': select the cls-position logits of each batch element.
    # TODO(synk): pool_func='mean' would need mean-over-positions before the head
    # (LayerNorm is nonlinear), i.e. a small extra branch in the last grid step.
    return logits_all.reshape(B, N, num_classes)[:, 0, :]


# ---------------------------------------------------------------------------
# Pure-JAX reference mirroring the PyTorch forward (for correctness check).
# ---------------------------------------------------------------------------
def _reference_forward(x, params, *, t_patch_size, heads, head_channels):
    B, C, T = x.shape
    P = t_patch_size
    W = T // P
    N = W + 1
    D = params["w_emb"].shape[1]
    hd = head_channels
    inner = heads * hd
    scale = float(hd) ** -0.5

    def ln(v, g, b):
        mu = jnp.mean(v, axis=-1, keepdims=True)
        var = jnp.mean(jnp.square(v - mu), axis=-1, keepdims=True)
        return (v - mu) * jax.lax.rsqrt(var + 1e-5) * g + b

    h = x.reshape(B, C, W, P).transpose(0, 2, 1, 3).reshape(B, W, C * P)
    h = h @ params["w_emb"] + params["b_emb"]
    cls = jnp.broadcast_to(params["cls"][None], (B, 1, D))
    h = jnp.concatenate([cls, h], axis=1) + params["pos"][None, :N]

    for p in params["layers"]:
        xn = ln(h, p["ln1_g"], p["ln1_b"])
        qkv = xn @ p["w_qkv"]
        q, k, v = jnp.split(qkv, 3, axis=-1)
        reh = lambda t: t.reshape(B, N, heads, hd).transpose(0, 2, 1, 3)
        q, k, v = reh(q), reh(k), reh(v)
        dots = jnp.einsum("bhnd,bhmd->bhnm", q, k) * scale
        attn = jax.nn.softmax(dots, axis=-1)
        o = jnp.einsum("bhnm,bhmd->bhnd", attn, v)
        o = o.transpose(0, 2, 1, 3).reshape(B, N, inner)
        h = h + (o @ p["w_o"] + p["b_o"])
        xn2 = ln(h, p["ln2_g"], p["ln2_b"])
        f = xn2 @ p["w1"] + p["b1"]
        f = 0.5 * f * (1.0 + jax.lax.erf(f * (2.0 ** -0.5)))
        h = h + (f @ p["w2"] + p["b2"])

    cls_out = h[:, 0]                                  # pool_func='cls'
    cls_out = ln(cls_out, params["lnh_g"], params["lnh_b"])
    return cls_out @ params["w_head"] + params["b_head"]


# ---------------------------------------------------------------------------
# Deterministic synthetic parameter init (not a checkpoint load).
# ---------------------------------------------------------------------------
def init_params(key, *, num_electrodes, chunk_size, t_patch_size, hid_channels,
                depth, heads, head_channels, mlp_channels, num_classes):
    D = hid_channels
    inner = heads * head_channels
    W = chunk_size // t_patch_size
    N = W + 1
    CP = num_electrodes * t_patch_size

    keys = iter(jax.random.split(key, 8 + 11 * depth))

    def nrm(shape, s):
        return s * jax.random.normal(next(keys), shape, jnp.float32)

    params = {
        "w_emb": nrm((CP, D), 0.05),
        "b_emb": nrm((1, D), 0.01),
        "cls":   nrm((1, D), 0.5),
        "pos":   nrm((N, D), 0.5),
        "lnh_g": 1.0 + nrm((1, D), 0.1),
        "lnh_b": nrm((1, D), 0.1),
        "w_head": nrm((D, num_classes), 0.05),
        "b_head": nrm((1, num_classes), 0.01),
        "layers": [],
    }
    for _ in range(depth):
        params["layers"].append({
            "ln1_g": 1.0 + nrm((1, D), 0.1),
            "ln1_b": nrm((1, D), 0.1),
            "w_qkv": nrm((D, 3 * inner), 0.05),
            "w_o":   nrm((inner, D), 0.05),
            "b_o":   nrm((1, D), 0.01),
            "ln2_g": 1.0 + nrm((1, D), 0.1),
            "ln2_b": nrm((1, D), 0.1),
            "w1":    nrm((D, mlp_channels), 0.05),
            "b1":    nrm((1, mlp_channels), 0.01),
            "w2":    nrm((mlp_channels, D), 0.05),
            "b2":    nrm((1, D), 0.01),
        })
    return params


if __name__ == "__main__":
    # Small config consistent with LFP_Transformer_LARGE: hid_channels / heads /
    # head_channels / mlp_channels / num_classes keep the module defaults; the
    # chunk is shortened (224 = 7 patches of 32 samples) so the demo stays tiny,
    # giving sequence length N = 8 (7 patches + cls token).
    B = 2
    num_electrodes, chunk_size, t_patch_size = 3, 224, 32
    hid_channels, depth, heads, head_channels = 128, 2, 4, 64
    mlp_channels, num_classes = 64, 2

    root = jax.random.PRNGKey(0)
    kx, kp = jax.random.split(root)
    x = jax.random.normal(kx, (B, num_electrodes, chunk_size), jnp.float32)
    params = init_params(kp, num_electrodes=num_electrodes, chunk_size=chunk_size,
                         t_patch_size=t_patch_size, hid_channels=hid_channels,
                         depth=depth, heads=heads, head_channels=head_channels,
                         mlp_channels=mlp_channels, num_classes=num_classes)

    out = lfp_transformer_forward_pallas(
        x, params, t_patch_size=t_patch_size, heads=heads,
        head_channels=head_channels, num_classes=num_classes)
    out = jax.block_until_ready(out)

    ref = _reference_forward(
        x, params, t_patch_size=t_patch_size, heads=heads,
        head_channels=head_channels)

    assert out.shape == (B, num_classes)
    # tolerance covers the approximate EUP reciprocal used in the softmax denom
    assert jnp.allclose(out, ref, atol=3e-3, rtol=3e-3), "mismatch vs reference"
    print("KERNEL_OK")
</pallas_src>

<mosaic_0001>
module attributes {stable_mosaic.version = 11 : i64} {
  func.func @_fused_forward_kernel(%arg0: i32, %arg1: memref<16x96xf32, #tpu.memory_space<vmem>>, %arg2: memref<16x128xf32, #tpu.memory_space<vmem>>, %arg3: memref<96x128xf32, #tpu.memory_space<vmem>>, %arg4: memref<1x1x128xf32, #tpu.memory_space<vmem>>, %arg5: memref<1x1x128xf32, #tpu.memory_space<vmem>>, %arg6: memref<1x4x128x64xf32, #tpu.memory_space<vmem>>, %arg7: memref<1x4x128x64xf32, #tpu.memory_space<vmem>>, %arg8: memref<1x4x128x64xf32, #tpu.memory_space<vmem>>, %arg9: memref<1x4x64x128xf32, #tpu.memory_space<vmem>>, %arg10: memref<1x1x128xf32, #tpu.memory_space<vmem>>, %arg11: memref<1x1x128xf32, #tpu.memory_space<vmem>>, %arg12: memref<1x1x128xf32, #tpu.memory_space<vmem>>, %arg13: memref<1x128x64xf32, #tpu.memory_space<vmem>>, %arg14: memref<1x1x64xf32, #tpu.memory_space<vmem>>, %arg15: memref<1x64x128xf32, #tpu.memory_space<vmem>>, %arg16: memref<1x1x128xf32, #tpu.memory_space<vmem>>, %arg17: memref<1x128xf32, #tpu.memory_space<vmem>>, %arg18: memref<1x128xf32, #tpu.memory_space<vmem>>, %arg19: memref<128x2xf32, #tpu.memory_space<vmem>>, %arg20: memref<1x2xf32, #tpu.memory_space<vmem>>, %arg21: memref<16x2xf32, #tpu.memory_space<vmem>>, %arg22: memref<16x128xf32, #tpu.memory_space<vmem>>) attributes {dimension_semantics = [#tpu.dimension_semantics<arbitrary>], iteration_bounds = array<i64: 2>, scalar_prefetch = 0 : i64, scratch_operands = 1 : i64, tpu.core_type = #tpu.core_type<tc>, window_params = [{pipeline_mode = #tpu.pipeline_mode<synchronous>, transform_indices = @transform_0, window_bounds = array<i64: 16, 96>}, {pipeline_mode = #tpu.pipeline_mode<synchronous>, transform_indices = @transform_1, window_bounds = array<i64: 16, 128>}, {pipeline_mode = #tpu.pipeline_mode<synchronous>, transform_indices = @transform_2, window_bounds = array<i64: 96, 128>}, {transform_indices = @transform_3, window_bounds = array<i64: 1, 1, 128>}, {transform_indices = @transform_4, window_bounds = array<i64: 1, 1, 128>}, {transform_indices = @transform_5, window_bounds = array<i64: 1, 4, 128, 64>}, {transform_indices = @transform_6, window_bounds = array<i64: 1, 4, 128, 64>}, {transform_indices = @transform_7, window_bounds = array<i64: 1, 4, 128, 64>}, {transform_indices = @transform_8, window_bounds = array<i64: 1, 4, 64, 128>}, {transform_indices = @transform_9, window_bounds = array<i64: 1, 1, 128>}, {transform_indices = @transform_10, window_bounds = array<i64: 1, 1, 128>}, {transform_indices = @transform_11, window_bounds = array<i64: 1, 1, 128>}, {transform_indices = @transform_12, window_bounds = array<i64: 1, 128, 64>}, {transform_indices = @transform_13, window_bounds = array<i64: 1, 1, 64>}, {transform_indices = @transform_14, window_bounds = array<i64: 1, 64, 128>}, {transform_indices = @transform_15, window_bounds = array<i64: 1, 1, 128>}, {pipeline_mode = #tpu.pipeline_mode<synchronous>, transform_indices = @transform_16, window_bounds = array<i64: 1, 128>}, {pipeline_mode = #tpu.pipeline_mode<synchronous>, transform_indices = @transform_17, window_bounds = array<i64: 1, 128>}, {pipeline_mode = #tpu.pipeline_mode<synchronous>, transform_indices = @transform_18, window_bounds = array<i64: 128, 2>}, {pipeline_mode = #tpu.pipeline_mode<synchronous>, transform_indices = @transform_19, window_bounds = array<i64: 1, 2>}, {pipeline_mode = #tpu.pipeline_mode<synchronous>, transform_indices = @transform_20, window_bounds = array<i64: 16, 2>}]} {
    %c0_i32 = arith.constant 0 : i32
    %0 = arith.cmpi eq, %arg0, %c0_i32 : i32
    %1 = arith.extui %0 : i1 to i32
    %c0_i32_0 = arith.constant 0 : i32
    %2 = arith.cmpi ne, %1, %c0_i32_0 : i32
    scf.if %2 {
      %c0_80 = arith.constant 0 : index
      %c0_81 = arith.constant 0 : index
      %161 = vector.load %arg1[%c0_80, %c0_81] : memref<16x96xf32, #tpu.memory_space<vmem>>, vector<16x96xf32>
      %c0_82 = arith.constant 0 : index
      %c0_83 = arith.constant 0 : index
      %162 = vector.load %arg3[%c0_82, %c0_83] : memref<96x128xf32, #tpu.memory_space<vmem>>, vector<96x128xf32>
      %cst_84 = arith.constant dense<0.000000e+00> : vector<16x128xf32>
      %163 = tpu.matmul %161, %162, %cst_84 {dimension_numbers = #tpu.dot_dimension_numbers<[1], [0], [0], [1], [0, 0, 1, 1], [], []>} : vector<16x96xf32>, vector<96x128xf32>, vector<16x128xf32> -> vector<16x128xf32>
      %c0_85 = arith.constant 0 : index
      %c0_86 = arith.constant 0 : index
      %164 = vector.load %arg2[%c0_85, %c0_86] : memref<16x128xf32, #tpu.memory_space<vmem>>, vector<16x128xf32>
      %165 = arith.addf %163, %164 : vector<16x128xf32>
      %c0_87 = arith.constant 0 : index
      %c0_88 = arith.constant 0 : index
      %166 = vector.load %arg22[%c0_87, %c0_88] : memref<16x128xf32, #tpu.memory_space<vmem>>, vector<16x128xf32>
      tpu.vector_store %arg22[%c0_87, %c0_88], %165 {strides = array<i32>} : memref<16x128xf32, #tpu.memory_space<vmem>>, vector<16x128xf32>,
    } else {
    }
    %c0 = arith.constant 0 : index
    %c0_1 = arith.constant 0 : index
    %3 = vector.load %arg22[%c0, %c0_1] : memref<16x128xf32, #tpu.memory_space<vmem>>, vector<16x128xf32>
    %c0_2 = arith.constant 0 : index
    %c0_3 = arith.constant 0 : index
    %c0_4 = arith.constant 0 : index
    %4 = vector.load %arg4[%c0_2, %c0_3, %c0_4] : memref<1x1x128xf32, #tpu.memory_space<vmem>>, vector<1x1x128xf32>
    %5 = vector.shape_cast %4 : vector<1x1x128xf32> to vector<1x128xf32>
    %c0_5 = arith.constant 0 : index
    %c0_6 = arith.constant 0 : index
    %c0_7 = arith.constant 0 : index
    %6 = vector.load %arg5[%c0_5, %c0_6, %c0_7] : memref<1x1x128xf32, #tpu.memory_space<vmem>>, vector<1x1x128xf32>
    %7 = vector.shape_cast %6 : vector<1x1x128xf32> to vector<1x128xf32>
    %cst = arith.constant dense<0.000000e+00> : vector<16xf32>
    %8 = vector.multi_reduction <add>, %3, %cst [1] : vector<16x128xf32> to vector<16xf32>
    %9 = vector.shape_cast %8 : vector<16xf32> to vector<16x1xf32>
    %cst_8 = arith.constant 1.280000e+02 : f32
    %10 = vector.broadcast %cst_8 : f32 to vector<16x1xf32>
    %11 = arith.divf %9, %10 : vector<16x1xf32>
    %12 = arith.mulf %3, %3 : vector<16x128xf32>
    %cst_9 = arith.constant dense<0.000000e+00> : vector<16xf32>
    %13 = vector.multi_reduction <add>, %12, %cst_9 [1] : vector<16x128xf32> to vector<16xf32>
    %14 = vector.shape_cast %13 : vector<16xf32> to vector<16x1xf32>
    %cst_10 = arith.constant 1.280000e+02 : f32
    %15 = vector.broadcast %cst_10 : f32 to vector<16x1xf32>
    %16 = arith.divf %14, %15 : vector<16x1xf32>
    %17 = arith.mulf %11, %11 : vector<16x1xf32>
    %18 = arith.subf %16, %17 : vector<16x1xf32>
    %19 = vector.broadcast %11 : vector<16x1xf32> to vector<16x128xf32>
    %20 = arith.subf %3, %19 : vector<16x128xf32>
    %cst_11 = arith.constant 9.99999974E-6 : f32
    %21 = vector.broadcast %cst_11 : f32 to vector<16x1xf32>
    %22 = arith.addf %18, %21 : vector<16x1xf32>
    %23 = math.rsqrt %22 : vector<16x1xf32>
    %24 = vector.broadcast %23 : vector<16x1xf32> to vector<16x128xf32>
    %25 = arith.mulf %20, %24 : vector<16x128xf32>
    %26 = vector.broadcast %5 : vector<1x128xf32> to vector<16x128xf32>
    %27 = arith.mulf %25, %26 : vector<16x128xf32>
    %28 = vector.broadcast %7 : vector<1x128xf32> to vector<16x128xf32>
    %29 = arith.addf %27, %28 : vector<16x128xf32>
    %c0_12 = arith.constant 0 : index
    %c0_13 = arith.constant 0 : index
    %c0_14 = arith.constant 0 : index
    %c0_15 = arith.constant 0 : index
    %30 = vector.load %arg6[%c0_12, %c0_13, %c0_14, %c0_15] : memref<1x4x128x64xf32, #tpu.memory_space<vmem>>, vector<1x4x128x64xf32>
    %31 = vector.shape_cast %30 : vector<1x4x128x64xf32> to vector<4x128x64xf32>
    %c0_16 = arith.constant 0 : index
    %c0_17 = arith.constant 0 : index
    %c0_18 = arith.constant 0 : index
    %c0_19 = arith.constant 0 : index
    %32 = vector.load %arg7[%c0_16, %c0_17, %c0_18, %c0_19] : memref<1x4x128x64xf32, #tpu.memory_space<vmem>>, vector<1x4x128x64xf32>
    %33 = vector.shape_cast %32 : vector<1x4x128x64xf32> to vector<4x128x64xf32>
    %c0_20 = arith.constant 0 : index
    %c0_21 = arith.constant 0 : index
    %c0_22 = arith.constant 0 : index
    %c0_23 = arith.constant 0 : index
    %34 = vector.load %arg8[%c0_20, %c0_21, %c0_22, %c0_23] : memref<1x4x128x64xf32, #tpu.memory_space<vmem>>, vector<1x4x128x64xf32>
    %35 = vector.shape_cast %34 : vector<1x4x128x64xf32> to vector<4x128x64xf32>
    %c0_24 = arith.constant 0 : index
    %c0_25 = arith.constant 0 : index
    %c0_26 = arith.constant 0 : index
    %c0_27 = arith.constant 0 : index
    %36 = vector.load %arg9[%c0_24, %c0_25, %c0_26, %c0_27] : memref<1x4x64x128xf32, #tpu.memory_space<vmem>>, vector<1x4x64x128xf32>
    %37 = vector.shape_cast %36 : vector<1x4x64x128xf32> to vector<4x64x128xf32>
    %38 = vector.extract_strided_slice %29 {offsets = [0, 0], sizes = [8, 128], strides = [1, 1]} : vector<16x128xf32> to vector<8x128xf32>
    %39 = vector.shape_cast %38 : vector<8x128xf32> to vector<1x8x128xf32>
    %40 = vector.broadcast %39 : vector<1x8x128xf32> to vector<4x8x128xf32>
    "tpu.trace_start"() <{level = 10 : i32, message = "hnd,hde->hne"}> : () -> ()
    %cst_28 = arith.constant dense<0.000000e+00> : vector<4x8x64xf32>
    %41 = tpu.matmul %40, %31, %cst_28 {dimension_numbers = #tpu.dot_dimension_numbers<[2], [1], [1], [2], [0, 0, 0, 1, 1, 2], [0], [0]>} : vector<4x8x128xf32>, vector<4x128x64xf32>, vector<4x8x64xf32> -> vector<4x8x64xf32>
    %cst_29 = arith.constant dense<0.000000e+00> : vector<4x8x64xf32>
    %42 = tpu.matmul %40, %33, %cst_29 {dimension_numbers = #tpu.dot_dimension_numbers<[2], [1], [1], [2], [0, 0, 0, 1, 1, 2], [0], [0]>} : vector<4x8x128xf32>, vector<4x128x64xf32>, vector<4x8x64xf32> -> vector<4x8x64xf32>
    %cst_30 = arith.constant dense<0.000000e+00> : vector<4x8x64xf32>
    %43 = tpu.matmul %40, %35, %cst_30 {dimension_numbers = #tpu.dot_dimension_numbers<[2], [1], [1], [2], [0, 0, 0, 1, 1, 2], [0], [0]>} : vector<4x8x128xf32>, vector<4x128x64xf32>, vector<4x8x64xf32> -> vector<4x8x64xf32>
    "tpu.trace_stop"() : () -> ()
    "tpu.trace_start"() <{level = 10 : i32, message = "hqd,hkd->hqk"}> : () -> ()
    %cst_31 = arith.constant dense<0.000000e+00> : vector<4x8x8xf32>
    %44 = tpu.matmul %41, %42, %cst_31 {dimension_numbers = #tpu.dot_dimension_numbers<[2], [2], [1], [1], [0, 0, 0, 1, 1, 1], [0], [0]>} : vector<4x8x64xf32>, vector<4x8x64xf32>, vector<4x8x8xf32> -> vector<4x8x8xf32>
    "tpu.trace_stop"() : () -> ()
    %cst_32 = arith.constant 1.250000e-01 : f32
    %45 = vector.broadcast %cst_32 : f32 to vector<4x8x8xf32>
    %46 = arith.mulf %44, %45 : vector<4x8x8xf32>
    %cst_33 = arith.constant dense<0xFF800000> : vector<4x8xf32>
    %47 = vector.multi_reduction <maximumf>, %46, %cst_33 [2] : vector<4x8x8xf32> to vector<4x8xf32>
    %48 = vector.shape_cast %47 : vector<4x8xf32> to vector<4x8x1xf32>
    %49 = vector.broadcast %48 : vector<4x8x1xf32> to vector<4x8x8xf32>
    %50 = arith.subf %46, %49 : vector<4x8x8xf32>
    %51 = math.exp %50 : vector<4x8x8xf32>
    %cst_34 = arith.constant dense<0.000000e+00> : vector<4x8xf32>
    %52 = vector.multi_reduction <add>, %51, %cst_34 [2] : vector<4x8x8xf32> to vector<4x8xf32>
    %53 = vector.shape_cast %52 : vector<4x8xf32> to vector<4x8x1xf32>
    %54 = tpu.reciprocal %53 {approx = true} : vector<4x8x1xf32> -> vector<4x8x1xf32>
    %55 = vector.broadcast %54 : vector<4x8x1xf32> to vector<4x8x8xf32>
    %56 = arith.mulf %51, %55 : vector<4x8x8xf32>
    "tpu.trace_start"() <{level = 10 : i32, message = "hqk,hkd->hqd"}> : () -> ()
    %cst_35 = arith.constant dense<0.000000e+00> : vector<4x8x64xf32>
    %57 = tpu.matmul %56, %43, %cst_35 {dimension_numbers = #tpu.dot_dimension_numbers<[2], [1], [1], [2], [0, 0, 0, 1, 1, 2], [0], [0]>} : vector<4x8x8xf32>, vector<4x8x64xf32>, vector<4x8x64xf32> -> vector<4x8x64xf32>
    "tpu.trace_stop"() : () -> ()
    "tpu.trace_start"() <{level = 10 : i32, message = "hnd,hdk->hnk"}> : () -> ()
    %cst_36 = arith.constant dense<0.000000e+00> : vector<4x8x128xf32>
    %58 = tpu.matmul %57, %37, %cst_36 {dimension_numbers = #tpu.dot_dimension_numbers<[2], [1], [1], [2], [0, 0, 0, 1, 1, 2], [0], [0]>} : vector<4x8x64xf32>, vector<4x64x128xf32>, vector<4x8x128xf32> -> vector<4x8x128xf32>
    "tpu.trace_stop"() : () -> ()
    %59 = vector.extract_strided_slice %58 {offsets = [0, 0, 0], sizes = [1, 8, 128], strides = [1, 1, 1]} : vector<4x8x128xf32> to vector<1x8x128xf32>
    %60 = vector.shape_cast %59 : vector<1x8x128xf32> to vector<8x128xf32>
    %61 = vector.extract_strided_slice %58 {offsets = [1, 0, 0], sizes = [1, 8, 128], strides = [1, 1, 1]} : vector<4x8x128xf32> to vector<1x8x128xf32>
    %62 = vector.shape_cast %61 : vector<1x8x128xf32> to vector<8x128xf32>
    %63 = arith.addf %60, %62 : vector<8x128xf32>
    %64 = vector.extract_strided_slice %58 {offsets = [2, 0, 0], sizes = [1, 8, 128], strides = [1, 1, 1]} : vector<4x8x128xf32> to vector<1x8x128xf32>
    %65 = vector.shape_cast %64 : vector<1x8x128xf32> to vector<8x128xf32>
    %66 = arith.addf %63, %65 : vector<8x128xf32>
    %67 = vector.extract_strided_slice %58 {offsets = [3, 0, 0], sizes = [1, 8, 128], strides = [1, 1, 1]} : vector<4x8x128xf32> to vector<1x8x128xf32>
    %68 = vector.shape_cast %67 : vector<1x8x128xf32> to vector<8x128xf32>
    %69 = arith.addf %66, %68 : vector<8x128xf32>
    %70 = vector.extract_strided_slice %29 {offsets = [8, 0], sizes = [8, 128], strides = [1, 1]} : vector<16x128xf32> to vector<8x128xf32>
    %71 = vector.shape_cast %70 : vector<8x128xf32> to vector<1x8x128xf32>
    %72 = vector.broadcast %71 : vector<1x8x128xf32> to vector<4x8x128xf32>
    "tpu.trace_start"() <{level = 10 : i32, message = "hnd,hde->hne"}> : () -> ()
    %cst_37 = arith.constant dense<0.000000e+00> : vector<4x8x64xf32>
    %73 = tpu.matmul %72, %31, %cst_37 {dimension_numbers = #tpu.dot_dimension_numbers<[2], [1], [1], [2], [0, 0, 0, 1, 1, 2], [0], [0]>} : vector<4x8x128xf32>, vector<4x128x64xf32>, vector<4x8x64xf32> -> vector<4x8x64xf32>
    %cst_38 = arith.constant dense<0.000000e+00> : vector<4x8x64xf32>
    %74 = tpu.matmul %72, %33, %cst_38 {dimension_numbers = #tpu.dot_dimension_numbers<[2], [1], [1], [2], [0, 0, 0, 1, 1, 2], [0], [0]>} : vector<4x8x128xf32>, vector<4x128x64xf32>, vector<4x8x64xf32> -> vector<4x8x64xf32>
    %cst_39 = arith.constant dense<0.000000e+00> : vector<4x8x64xf32>
    %75 = tpu.matmul %72, %35, %cst_39 {dimension_numbers = #tpu.dot_dimension_numbers<[2], [1], [1], [2], [0, 0, 0, 1, 1, 2], [0], [0]>} : vector<4x8x128xf32>, vector<4x128x64xf32>, vector<4x8x64xf32> -> vector<4x8x64xf32>
    "tpu.trace_stop"() : () -> ()
    "tpu.trace_start"() <{level = 10 : i32, message = "hqd,hkd->hqk"}> : () -> ()
    %cst_40 = arith.constant dense<0.000000e+00> : vector<4x8x8xf32>
    %76 = tpu.matmul %73, %74, %cst_40 {dimension_numbers = #tpu.dot_dimension_numbers<[2], [2], [1], [1], [0, 0, 0, 1, 1, 1], [0], [0]>} : vector<4x8x64xf32>, vector<4x8x64xf32>, vector<4x8x8xf32> -> vector<4x8x8xf32>
    "tpu.trace_stop"() : () -> ()
    %cst_41 = arith.constant 1.250000e-01 : f32
    %77 = vector.broadcast %cst_41 : f32 to vector<4x8x8xf32>
    %78 = arith.mulf %76, %77 : vector<4x8x8xf32>
    %cst_42 = arith.constant dense<0xFF800000> : vector<4x8xf32>
    %79 = vector.multi_reduction <maximumf>, %78, %cst_42 [2] : vector<4x8x8xf32> to vector<4x8xf32>
    %80 = vector.shape_cast %79 : vector<4x8xf32> to vector<4x8x1xf32>
    %81 = vector.broadcast %80 : vector<4x8x1xf32> to vector<4x8x8xf32>
    %82 = arith.subf %78, %81 : vector<4x8x8xf32>
    %83 = math.exp %82 : vector<4x8x8xf32>
    %cst_43 = arith.constant dense<0.000000e+00> : vector<4x8xf32>
    %84 = vector.multi_reduction <add>, %83, %cst_43 [2] : vector<4x8x8xf32> to vector<4x8xf32>
    %85 = vector.shape_cast %84 : vector<4x8xf32> to vector<4x8x1xf32>
    %86 = tpu.reciprocal %85 {approx = true} : vector<4x8x1xf32> -> vector<4x8x1xf32>
    %87 = vector.broadcast %86 : vector<4x8x1xf32> to vector<4x8x8xf32>
    %88 = arith.mulf %83, %87 : vector<4x8x8xf32>
    "tpu.trace_start"() <{level = 10 : i32, message = "hqk,hkd->hqd"}> : () -> ()
    %cst_44 = arith.constant dense<0.000000e+00> : vector<4x8x64xf32>
    %89 = tpu.matmul %88, %75, %cst_44 {dimension_numbers = #tpu.dot_dimension_numbers<[2], [1], [1], [2], [0, 0, 0, 1, 1, 2], [0], [0]>} : vector<4x8x8xf32>, vector<4x8x64xf32>, vector<4x8x64xf32> -> vector<4x8x64xf32>
    "tpu.trace_stop"() : () -> ()
    "tpu.trace_start"() <{level = 10 : i32, message = "hnd,hdk->hnk"}> : () -> ()
    %cst_45 = arith.constant dense<0.000000e+00> : vector<4x8x128xf32>
    %90 = tpu.matmul %89, %37, %cst_45 {dimension_numbers = #tpu.dot_dimension_numbers<[2], [1], [1], [2], [0, 0, 0, 1, 1, 2], [0], [0]>} : vector<4x8x64xf32>, vector<4x64x128xf32>, vector<4x8x128xf32> -> vector<4x8x128xf32>
    "tpu.trace_stop"() : () -> ()
    %91 = vector.extract_strided_slice %90 {offsets = [0, 0, 0], sizes = [1, 8, 128], strides = [1, 1, 1]} : vector<4x8x128xf32> to vector<1x8x128xf32>
    %92 = vector.shape_cast %91 : vector<1x8x128xf32> to vector<8x128xf32>
    %93 = vector.extract_strided_slice %90 {offsets = [1, 0, 0], sizes = [1, 8, 128], strides = [1, 1, 1]} : vector<4x8x128xf32> to vector<1x8x128xf32>
    %94 = vector.shape_cast %93 : vector<1x8x128xf32> to vector<8x128xf32>
    %95 = arith.addf %92, %94 : vector<8x128xf32>
    %96 = vector.extract_strided_slice %90 {offsets = [2, 0, 0], sizes = [1, 8, 128], strides = [1, 1, 1]} : vector<4x8x128xf32> to vector<1x8x128xf32>
    %97 = vector.shape_cast %96 : vector<1x8x128xf32> to vector<8x128xf32>
    %98 = arith.addf %95, %97 : vector<8x128xf32>
    %99 = vector.extract_strided_slice %90 {offsets = [3, 0, 0], sizes = [1, 8, 128], strides = [1, 1, 1]} : vector<4x8x128xf32> to vector<1x8x128xf32>
    %100 = vector.shape_cast %99 : vector<1x8x128xf32> to vector<8x128xf32>
    %101 = arith.addf %98, %100 : vector<8x128xf32>
    %102 = tpu.concatenate %69, %101 in 0 : vector<8x128xf32>, vector<8x128xf32> -> vector<16x128xf32>
    %c0_46 = arith.constant 0 : index
    %c0_47 = arith.constant 0 : index
    %c0_48 = arith.constant 0 : index
    %103 = vector.load %arg10[%c0_46, %c0_47, %c0_48] : memref<1x1x128xf32, #tpu.memory_space<vmem>>, vector<1x1x128xf32>
    %104 = vector.shape_cast %103 : vector<1x1x128xf32> to vector<1x128xf32>
    %105 = vector.broadcast %104 : vector<1x128xf32> to vector<16x128xf32>
    %106 = arith.addf %102, %105 : vector<16x128xf32>
    %107 = arith.addf %3, %106 : vector<16x128xf32>
    %c0_49 = arith.constant 0 : index
    %c0_50 = arith.constant 0 : index
    %c0_51 = arith.constant 0 : index
    %108 = vector.load %arg11[%c0_49, %c0_50, %c0_51] : memref<1x1x128xf32, #tpu.memory_space<vmem>>, vector<1x1x128xf32>
    %109 = vector.shape_cast %108 : vector<1x1x128xf32> to vector<1x128xf32>
    %c0_52 = arith.constant 0 : index
    %c0_53 = arith.constant 0 : index
    %c0_54 = arith.constant 0 : index
    %110 = vector.load %arg12[%c0_52, %c0_53, %c0_54] : memref<1x1x128xf32, #tpu.memory_space<vmem>>, vector<1x1x128xf32>
    %111 = vector.shape_cast %110 : vector<1x1x128xf32> to vector<1x128xf32>
    %cst_55 = arith.constant dense<0.000000e+00> : vector<16xf32>
    %112 = vector.multi_reduction <add>, %107, %cst_55 [1] : vector<16x128xf32> to vector<16xf32>
    %113 = vector.shape_cast %112 : vector<16xf32> to vector<16x1xf32>
    %cst_56 = arith.constant 1.280000e+02 : f32
    %114 = vector.broadcast %cst_56 : f32 to vector<16x1xf32>
    %115 = arith.divf %113, %114 : vector<16x1xf32>
    %116 = arith.mulf %107, %107 : vector<16x128xf32>
    %cst_57 = arith.constant dense<0.000000e+00> : vector<16xf32>
    %117 = vector.multi_reduction <add>, %116, %cst_57 [1] : vector<16x128xf32> to vector<16xf32>
    %118 = vector.shape_cast %117 : vector<16xf32> to vector<16x1xf32>
    %cst_58 = arith.constant 1.280000e+02 : f32
    %119 = vector.broadcast %cst_58 : f32 to vector<16x1xf32>
    %120 = arith.divf %118, %119 : vector<16x1xf32>
    %121 = arith.mulf %115, %115 : vector<16x1xf32>
    %122 = arith.subf %120, %121 : vector<16x1xf32>
    %123 = vector.broadcast %115 : vector<16x1xf32> to vector<16x128xf32>
    %124 = arith.subf %107, %123 : vector<16x128xf32>
    %cst_59 = arith.constant 9.99999974E-6 : f32
    %125 = vector.broadcast %cst_59 : f32 to vector<16x1xf32>
    %126 = arith.addf %122, %125 : vector<16x1xf32>
    %127 = math.rsqrt %126 : vector<16x1xf32>
    %128 = vector.broadcast %127 : vector<16x1xf32> to vector<16x128xf32>
    %129 = arith.mulf %124, %128 : vector<16x128xf32>
    %130 = vector.broadcast %109 : vector<1x128xf32> to vector<16x128xf32>
    %131 = arith.mulf %129, %130 : vector<16x128xf32>
    %132 = vector.broadcast %111 : vector<1x128xf32> to vector<16x128xf32>
    %133 = arith.addf %131, %132 : vector<16x128xf32>
    %c0_60 = arith.constant 0 : index
    %c0_61 = arith.constant 0 : index
    %c0_62 = arith.constant 0 : index
    %134 = vector.load %arg13[%c0_60, %c0_61, %c0_62] : memref<1x128x64xf32, #tpu.memory_space<vmem>>, vector<1x128x64xf32>
    %135 = vector.shape_cast %134 : vector<1x128x64xf32> to vector<128x64xf32>
    %cst_63 = arith.constant dense<0.000000e+00> : vector<16x64xf32>
    %136 = tpu.matmul %133, %135, %cst_63 {dimension_numbers = #tpu.dot_dimension_numbers<[1], [0], [0], [1], [0, 0, 1, 1], [], []>} : vector<16x128xf32>, vector<128x64xf32>, vector<16x64xf32> -> vector<16x64xf32>
    %c0_64 = arith.constant 0 : index
    %c0_65 = arith.constant 0 : index
    %c0_66 = arith.constant 0 : index
    %137 = vector.load %arg14[%c0_64, %c0_65, %c0_66] : memref<1x1x64xf32, #tpu.memory_space<vmem>>, vector<1x1x64xf32>
    %138 = vector.shape_cast %137 : vector<1x1x64xf32> to vector<1x64xf32>
    %139 = vector.broadcast %138 : vector<1x64xf32> to vector<16x64xf32>
    %140 = arith.addf %136, %139 : vector<16x64xf32>
    %cst_67 = arith.constant 5.000000e-01 : f32
    %141 = vector.broadcast %cst_67 : f32 to vector<16x64xf32>
    %142 = arith.mulf %141, %140 : vector<16x64xf32>
    %cst_68 = arith.constant 0.707106769 : f32
    %143 = vector.broadcast %cst_68 : f32 to vector<16x64xf32>
    %144 = arith.mulf %140, %143 : vector<16x64xf32>
    %145 = math.erf %144 : vector<16x64xf32>
    %cst_69 = arith.constant 1.000000e+00 : f32
    %146 = vector.broadcast %cst_69 : f32 to vector<16x64xf32>
    %147 = arith.addf %146, %145 : vector<16x64xf32>
    %148 = arith.mulf %142, %147 : vector<16x64xf32>
    %c0_70 = arith.constant 0 : index
    %c0_71 = arith.constant 0 : index
    %c0_72 = arith.constant 0 : index
    %149 = vector.load %arg15[%c0_70, %c0_71, %c0_72] : memref<1x64x128xf32, #tpu.memory_space<vmem>>, vector<1x64x128xf32>
    %150 = vector.shape_cast %149 : vector<1x64x128xf32> to vector<64x128xf32>
    %cst_73 = arith.constant dense<0.000000e+00> : vector<16x128xf32>
    %151 = tpu.matmul %148, %150, %cst_73 {dimension_numbers = #tpu.dot_dimension_numbers<[1], [0], [0], [1], [0, 0, 1, 1], [], []>} : vector<16x64xf32>, vector<64x128xf32>, vector<16x128xf32> -> vector<16x128xf32>
    %c0_74 = arith.constant 0 : index
    %c0_75 = arith.constant 0 : index
    %c0_76 = arith.constant 0 : index
    %152 = vector.load %arg16[%c0_74, %c0_75, %c0_76] : memref<1x1x128xf32, #tpu.memory_space<vmem>>, vector<1x1x128xf32>
    %153 = vector.shape_cast %152 : vector<1x1x128xf32> to vector<1x128xf32>
    %154 = vector.broadcast %153 : vector<1x128xf32> to vector<16x128xf32>
    %155 = arith.addf %151, %154 : vector<16x128xf32>
    %156 = arith.addf %107, %155 : vector<16x128xf32>
    %c0_77 = arith.constant 0 : index
    %c0_78 = arith.constant 0 : index
    %157 = vector.load %arg22[%c0_77, %c0_78] : memref<16x128xf32, #tpu.memory_space<vmem>>, vector<16x128xf32>
    tpu.vector_store %arg22[%c0_77, %c0_78], %156 {strides = array<i32>} : memref<16x128xf32, #tpu.memory_space<vmem>>, vector<16x128xf32>,
    %c1_i32 = arith.constant 1 : i32
    %158 = arith.cmpi eq, %arg0, %c1_i32 : i32
    %159 = arith.extui %158 : i1 to i32
    %c0_i32_79 = arith.constant 0 : i32
    %160 = arith.cmpi ne, %159, %c0_i32_79 : i32
    scf.if %160 {
      %c0_80 = arith.constant 0 : index
      %c0_81 = arith.constant 0 : index
      %161 = vector.load %arg17[%c0_80, %c0_81] : memref<1x128xf32, #tpu.memory_space<vmem>>, vector<1x128xf32>
      %c0_82 = arith.constant 0 : index
      %c0_83 = arith.constant 0 : index
      %162 = vector.load %arg18[%c0_82, %c0_83] : memref<1x128xf32, #tpu.memory_space<vmem>>, vector<1x128xf32>
      %cst_84 = arith.constant dense<0.000000e+00> : vector<16xf32>
      %163 = vector.multi_reduction <add>, %156, %cst_84 [1] : vector<16x128xf32> to vector<16xf32>
      %164 = vector.shape_cast %163 : vector<16xf32> to vector<16x1xf32>
      %cst_85 = arith.constant 1.280000e+02 : f32
      %165 = vector.broadcast %cst_85 : f32 to vector<16x1xf32>
      %166 = arith.divf %164, %165 : vector<16x1xf32>
      %167 = arith.mulf %156, %156 : vector<16x128xf32>
      %cst_86 = arith.constant dense<0.000000e+00> : vector<16xf32>
      %168 = vector.multi_reduction <add>, %167, %cst_86 [1] : vector<16x128xf32> to vector<16xf32>
      %169 = vector.shape_cast %168 : vector<16xf32> to vector<16x1xf32>
      %cst_87 = arith.constant 1.280000e+02 : f32
      %170 = vector.broadcast %cst_87 : f32 to vector<16x1xf32>
      %171 = arith.divf %169, %170 : vector<16x1xf32>
      %172 = arith.mulf %166, %166 : vector<16x1xf32>
      %173 = arith.subf %171, %172 : vector<16x1xf32>
      %174 = vector.broadcast %166 : vector<16x1xf32> to vector<16x128xf32>
      %175 = arith.subf %156, %174 : vector<16x128xf32>
      %cst_88 = arith.constant 9.99999974E-6 : f32
      %176 = vector.broadcast %cst_88 : f32 to vector<16x1xf32>
      %177 = arith.addf %173, %176 : vector<16x1xf32>
      %178 = math.rsqrt %177 : vector<16x1xf32>
      %179 = vector.broadcast %178 : vector<16x1xf32> to vector<16x128xf32>
      %180 = arith.mulf %175, %179 : vector<16x128xf32>
      %181 = vector.broadcast %161 : vector<1x128xf32> to vector<16x128xf32>
      %182 = arith.mulf %180, %181 : vector<16x128xf32>
      %183 = vector.broadcast %162 : vector<1x128xf32> to vector<16x128xf32>
      %184 = arith.addf %182, %183 : vector<16x128xf32>
      %c0_89 = arith.constant 0 : index
      %c0_90 = arith.constant 0 : index
      %185 = vector.load %arg19[%c0_89, %c0_90] : memref<128x2xf32, #tpu.memory_space<vmem>>, vector<128x2xf32>
      %cst_91 = arith.constant dense<0.000000e+00> : vector<16x2xf32>
      %186 = tpu.matmul %184, %185, %cst_91 {dimension_numbers = #tpu.dot_dimension_numbers<[1], [0], [0], [1], [0, 0, 1, 1], [], []>} : vector<16x128xf32>, vector<128x2xf32>, vector<16x2xf32> -> vector<16x2xf32>
      %c0_92 = arith.constant 0 : index
      %c0_93 = arith.constant 0 : index
      %187 = vector.load %arg20[%c0_92, %c0_93] : memref<1x2xf32, #tpu.memory_space<vmem>>, vector<1x2xf32>
      %188 = vector.broadcast %187 : vector<1x2xf32> to vector<16x2xf32>
      %189 = arith.addf %186, %188 : vector<16x2xf32>
      %c0_94 = arith.constant 0 : index
      %c0_95 = arith.constant 0 : index
      %190 = vector.load %arg21[%c0_94, %c0_95] : memref<16x2xf32, #tpu.memory_space<vmem>>, vector<16x2xf32>
      tpu.vector_store %arg21[%c0_94, %c0_95], %189 {strides = array<i32>} : memref<16x2xf32, #tpu.memory_space<vmem>>, vector<16x2xf32>,
    } else {
    }
    return
  }
  func.func @transform_0(%arg0: i32) -> (i32, i32) {
    %c0_i32 = arith.constant 0 : i32
    %c0_i32_0 = arith.constant 0 : i32
    %c0_i32_1 = arith.constant 0 : i32
    return %c0_i32, %c0_i32_0 : i32, i32
  }
  func.func @transform_1(%arg0: i32) -> (i32, i32) {
    %c0_i32 = arith.constant 0 : i32
    %c0_i32_0 = arith.constant 0 : i32
    %c0_i32_1 = arith.constant 0 : i32
    return %c0_i32, %c0_i32_0 : i32, i32
  }
  func.func @transform_2(%arg0: i32) -> (i32, i32) {
    %c0_i32 = arith.constant 0 : i32
    %c0_i32_0 = arith.constant 0 : i32
    %c0_i32_1 = arith.constant 0 : i32
    return %c0_i32, %c0_i32_0 : i32, i32
  }
  func.func @transform_3(%arg0: i32) -> (i32, i32, i32) {
    %c0_i32 = arith.constant 0 : i32
    %c0_i32_0 = arith.constant 0 : i32
    %c0_i32_1 = arith.constant 0 : i32
    return %arg0, %c0_i32, %c0_i32_0 : i32, i32, i32
  }
  func.func @transform_4(%arg0: i32) -> (i32, i32, i32) {
    %c0_i32 = arith.constant 0 : i32
    %c0_i32_0 = arith.constant 0 : i32
    %c0_i32_1 = arith.constant 0 : i32
    return %arg0, %c0_i32, %c0_i32_0 : i32, i32, i32
  }
  func.func @transform_5(%arg0: i32) -> (i32, i32, i32, i32) {
    %c0_i32 = arith.constant 0 : i32
    %c0_i32_0 = arith.constant 0 : i32
    %c0_i32_1 = arith.constant 0 : i32
    %c0_i32_2 = arith.constant 0 : i32
    return %arg0, %c0_i32, %c0_i32_0, %c0_i32_1 : i32, i32, i32, i32
  }
  func.func @transform_6(%arg0: i32) -> (i32, i32, i32, i32) {
    %c0_i32 = arith.constant 0 : i32
    %c0_i32_0 = arith.constant 0 : i32
    %c0_i32_1 = arith.constant 0 : i32
    %c0_i32_2 = arith.constant 0 : i32
    return %arg0, %c0_i32, %c0_i32_0, %c0_i32_1 : i32, i32, i32, i32
  }
  func.func @transform_7(%arg0: i32) -> (i32, i32, i32, i32) {
    %c0_i32 = arith.constant 0 : i32
    %c0_i32_0 = arith.constant 0 : i32
    %c0_i32_1 = arith.constant 0 : i32
    %c0_i32_2 = arith.constant 0 : i32
    return %arg0, %c0_i32, %c0_i32_0, %c0_i32_1 : i32, i32, i32, i32
  }
  func.func @transform_8(%arg0: i32) -> (i32, i32, i32, i32) {
    %c0_i32 = arith.constant 0 : i32
    %c0_i32_0 = arith.constant 0 : i32
    %c0_i32_1 = arith.constant 0 : i32
    %c0_i32_2 = arith.constant 0 : i32
    return %arg0, %c0_i32, %c0_i32_0, %c0_i32_1 : i32, i32, i32, i32
  }
  func.func @transform_9(%arg0: i32) -> (i32, i32, i32) {
    %c0_i32 = arith.constant 0 : i32
    %c0_i32_0 = arith.constant 0 : i32
    %c0_i32_1 = arith.constant 0 : i32
    return %arg0, %c0_i32, %c0_i32_0 : i32, i32, i32
  }
  func.func @transform_10(%arg0: i32) -> (i32, i32, i32) {
    %c0_i32 = arith.constant 0 : i32
    %c0_i32_0 = arith.constant 0 : i32
    %c0_i32_1 = arith.constant 0 : i32
    return %arg0, %c0_i32, %c0_i32_0 : i32, i32, i32
  }
  func.func @transform_11(%arg0: i32) -> (i32, i32, i32) {
    %c0_i32 = arith.constant 0 : i32
    %c0_i32_0 = arith.constant 0 : i32
    %c0_i32_1 = arith.constant 0 : i32
    return %arg0, %c0_i32, %c0_i32_0 : i32, i32, i32
  }
  func.func @transform_12(%arg0: i32) -> (i32, i32, i32) {
    %c0_i32 = arith.constant 0 : i32
    %c0_i32_0 = arith.constant 0 : i32
    %c0_i32_1 = arith.constant 0 : i32
    return %arg0, %c0_i32, %c0_i32_0 : i32, i32, i32
  }
  func.func @transform_13(%arg0: i32) -> (i32, i32, i32) {
    %c0_i32 = arith.constant 0 : i32
    %c0_i32_0 = arith.constant 0 : i32
    %c0_i32_1 = arith.constant 0 : i32
    return %arg0, %c0_i32, %c0_i32_0 : i32, i32, i32
  }
  func.func @transform_14(%arg0: i32) -> (i32, i32, i32) {
    %c0_i32 = arith.constant 0 : i32
    %c0_i32_0 = arith.constant 0 : i32
    %c0_i32_1 = arith.constant 0 : i32
    return %arg0, %c0_i32, %c0_i32_0 : i32, i32, i32
  }
  func.func @transform_15(%arg0: i32) -> (i32, i32, i32) {
    %c0_i32 = arith.constant 0 : i32
    %c0_i32_0 = arith.constant 0 : i32
    %c0_i32_1 = arith.constant 0 : i32
    return %arg0, %c0_i32, %c0_i32_0 : i32, i32, i32
  }
  func.func @transform_16(%arg0: i32) -> (i32, i32) {
    %c0_i32 = arith.constant 0 : i32
    %c0_i32_0 = arith.constant 0 : i32
    %c0_i32_1 = arith.constant 0 : i32
    return %c0_i32, %c0_i32_0 : i32, i32
  }
  func.func @transform_17(%arg0: i32) -> (i32, i32) {
    %c0_i32 = arith.constant 0 : i32
    %c0_i32_0 = arith.constant 0 : i32
    %c0_i32_1 = arith.constant 0 : i32
    return %c0_i32, %c0_i32_0 : i32, i32
  }
  func.func @transform_18(%arg0: i32) -> (i32, i32) {
    %c0_i32 = arith.constant 0 : i32
    %c0_i32_0 = arith.constant 0 : i32
    %c0_i32_1 = arith.constant 0 : i32
    return %c0_i32, %c0_i32_0 : i32, i32
  }
  func.func @transform_19(%arg0: i32) -> (i32, i32) {
    %c0_i32 = arith.constant 0 : i32
    %c0_i32_0 = arith.constant 0 : i32
    %c0_i32_1 = arith.constant 0 : i32
    return %c0_i32, %c0_i32_0 : i32, i32
  }
  func.func @transform_20(%arg0: i32) -> (i32, i32) {
    %c0_i32 = arith.constant 0 : i32
    %c0_i32_0 = arith.constant 0 : i32
    %c0_i32_1 = arith.constant 0 : i32
    return %c0_i32, %c0_i32_0 : i32, i32
  }
}

</mosaic_0001>

<llo_original>
// kernel: tpu_custom_call.1
$region0: #{tpu_custom_call.1}
  #allocation0 [shape = 'u32[]', space=smem, size = 0x4, offset = 0x4, fixed_abs, tag = 'smem constant byte address 0x4 - core index']
  #allocation1 [shape = 'u32[144,128]{1,0:T(1,128)}', space=vmem, size = 0x12000, scoped, tag = 'internal scratch']
  #allocation2 [shape = 'f32[16,128]{1,0:T(8,128)}', space=vmem, size = 0x2000, scoped, tag = 'scratch operand']
  %s0 = inlined_call_operand.vmem [shape: f32[16,96], index: 0, kind: input, shape index: {}]
  %s1 = inlined_call_operand.vmem [shape: f32[16,128], index: 1, kind: input, shape index: {}]
  %s2 = inlined_call_operand.vmem [shape: f32[96,128], index: 2, kind: input, shape index: {}]
  %s3 = inlined_call_operand.vmem [shape: f32[2,1,128], index: 3, kind: input, shape index: {}]
  %s4 = inlined_call_operand.vmem [shape: f32[2,1,128], index: 4, kind: input, shape index: {}]
  %s5 = inlined_call_operand.vmem [shape: f32[2,4,128,64], index: 5, kind: input, shape index: {}]
  %s6 = inlined_call_operand.vmem [shape: f32[2,4,128,64], index: 6, kind: input, shape index: {}]
  %s7 = inlined_call_operand.vmem [shape: f32[2,4,128,64], index: 7, kind: input, shape index: {}]
  %s8 = inlined_call_operand.vmem [shape: f32[2,4,64,128], index: 8, kind: input, shape index: {}]
  %s9 = inlined_call_operand.vmem [shape: f32[2,1,128], index: 9, kind: input, shape index: {}]
  %s10 = inlined_call_operand.vmem [shape: f32[2,1,128], index: 10, kind: input, shape index: {}]
  %s11 = inlined_call_operand.vmem [shape: f32[2,1,128], index: 11, kind: input, shape index: {}]
  %s12 = inlined_call_operand.vmem [shape: f32[2,128,64], index: 12, kind: input, shape index: {}]
  %s13 = inlined_call_operand.vmem [shape: f32[2,1,64], index: 13, kind: input, shape index: {}]
  %s14 = inlined_call_operand.vmem [shape: f32[2,64,128], index: 14, kind: input, shape index: {}]
  %s15 = inlined_call_operand.vmem [shape: f32[2,1,128], index: 15, kind: input, shape index: {}]
  %s16 = inlined_call_operand.vmem [shape: f32[1,128], index: 16, kind: input, shape index: {}]
  %s17 = inlined_call_operand.vmem [shape: f32[1,128], index: 17, kind: input, shape index: {}]
  %s18 = inlined_call_operand.vmem [shape: f32[128,2], index: 18, kind: input, shape index: {}]
  %s19 = inlined_call_operand.vmem [shape: f32[1,2], index: 19, kind: input, shape index: {}]
  %s20 = inlined_call_operand.vmem [shape: f32[16,2], index: 20, kind: output, shape index: {}]
  %s21 = sld [smem:[#allocation0]]
  $region121: #{tpu_custom_call.1} parent=0
    _
  %s23 = ssub.s32 1, %s21
  %s24 = scalar_select 0, %s23, %s21
  loop: start=0, step=1, limit=4
  $region2: #{tpu_custom_call.1} parent=0 // loop_pre_header
    _
  $region3: #{tpu_custom_call.1} parent=0 // loop_header
    %s26 = sphi 0, %s30
    %p27 = scmp.ge.s32.totalorder %s26, 4
    %s34 = sphi 0, %s34
    %s36 = sphi 0, %s34
    %s37 = sphi 0, %s36
    %s51 = sphi 0, %s37
    %s55 = sphi 0, %s55
    %s57 = sphi 0, %s55
    %s58 = sphi 0, %s57
    %s72 = sphi 0, %s58
    %s76 = sphi 0, %s76
    %s78 = sphi 0, %s76
    %s79 = sphi 0, %s78
    %s93 = sphi 0, %s79
    %s99 = sphi 0, %s101
    %s102 = sphi 0, %s99
    %s103 = sphi 0, %s102
    %s119 = sphi 0, %s103
    %s125 = sphi 0, %s127
    %s128 = sphi 0, %s125
    %s129 = sphi 0, %s128
    %s145 = sphi 0, %s129
    %s151 = sphi 0, %s153
    %s154 = sphi 0, %s151
    %s155 = sphi 0, %s154
    %s171 = sphi 0, %s155
    %s177 = sphi 0, %s179
    %s180 = sphi 0, %s177
    %s181 = sphi 0, %s180
    %s197 = sphi 0, %s181
    %s203 = sphi 0, %s205
    %s206 = sphi 0, %s203
    %s207 = sphi 0, %s206
    %s223 = sphi 0, %s207
    %s229 = sphi 0, %s231
    %s232 = sphi 0, %s229
    %s233 = sphi 0, %s232
    %s249 = sphi 0, %s233
    %s255 = sphi 0, %s257
    %s258 = sphi 0, %s255
    %s259 = sphi 0, %s258
    %s275 = sphi 0, %s259
    %s281 = sphi 0, %s283
    %s284 = sphi 0, %s281
    %s285 = sphi 0, %s284
    %s301 = sphi 0, %s285
    %s307 = sphi 0, %s309
    %s310 = sphi 0, %s307
    %s311 = sphi 0, %s310
    %s327 = sphi 0, %s311
    %s333 = sphi 0, %s335
    %s336 = sphi 0, %s333
    %s337 = sphi 0, %s336
    %s353 = sphi 0, %s337
    %s359 = sphi 0, %s361
    %s362 = sphi 0, %s359
    %s363 = sphi 0, %s362
    %s379 = sphi 0, %s363
    %s385 = sphi 0, %s387
    %s388 = sphi 0, %s385
    %s389 = sphi 0, %s388
    %s405 = sphi 0, %s389
    %s411 = sphi 0, %s413
    %s414 = sphi 0, %s411
    %s415 = sphi 0, %s414
    %s431 = sphi 0, %s415
    %s435 = sphi 0, %s435
    %s437 = sphi 0, %s435
    %s438 = sphi 0, %s437
    %s452 = sphi 0, %s438
    %s456 = sphi 0, %s456
    %s458 = sphi 0, %s456
    %s459 = sphi 0, %s458
    %s473 = sphi 0, %s459
    %s477 = sphi 0, %s477
    %s479 = sphi 0, %s477
    %s480 = sphi 0, %s479
    %s494 = sphi 0, %s480
    %s498 = sphi 0, %s498
    %s500 = sphi 0, %s498
    %s501 = sphi 0, %s500
    %s515 = sphi 0, %s501
    %s519 = sphi 0, %s519
    %s521 = sphi 0, %s519
    %s522 = sphi 0, %s521
    %s536 = sphi 0, %s522
  $region4: #{tpu_custom_call.1} parent=0 // loop_header_branch
    %29 = sbr.rel (%p27) target = $region8
  $region5: #{tpu_custom_call.1} parent=0 // loop_body
    %s31 = ssub.s32 %s26, 1
    %s32 = ssub.s32 %s26, 2
    %s33 = sadd.s32 %s26, 1
    %s35 = sadd.s32 %s34, 1
    %p38 = scmp.eq.s32.totalorder %s26, 1
    %p39 = scmp.ne.s32.totalorder %s34, %s36
    %p40 = scmp.eq.s32.totalorder %s26, 0
    %p41 = por %p39, %p40
    %p42 = scmp.ne.s32.totalorder %s34, %s36
    %p43 = scmp.eq.s32.totalorder %s31, 1
    %p44 = por %p42, %p43
    %p45 = scmp.ne.s32.totalorder %s36, %s37
    %p46 = scmp.eq.s32.totalorder %s31, 0
    %p47 = por %p45, %p46
    %p48 = scmp.ne.s32.totalorder %s36, %s37
    %p49 = scmp.eq.s32.totalorder %s32, 1
    %p50 = por %p48, %p49
    %p52 = scmp.ne.s32.totalorder %s37, %s51
    %p53 = scmp.eq.s32.totalorder %s32, 0
    %p54 = por %p52, %p53
    %s56 = sadd.s32 %s55, 1
    %p59 = scmp.eq.s32.totalorder %s26, 1
    %p60 = scmp.ne.s32.totalorder %s55, %s57
    %p61 = scmp.eq.s32.totalorder %s26, 0
    %p62 = por %p60, %p61
    %p63 = scmp.ne.s32.totalorder %s55, %s57
    %p64 = scmp.eq.s32.totalorder %s31, 1
    %p65 = por %p63, %p64
    %p66 = scmp.ne.s32.totalorder %s57, %s58
    %p67 = scmp.eq.s32.totalorder %s31, 0
    %p68 = por %p66, %p67
    %p69 = scmp.ne.s32.totalorder %s57, %s58
    %p70 = scmp.eq.s32.totalorder %s32, 1
    %p71 = por %p69, %p70
    %p73 = scmp.ne.s32.totalorder %s58, %s72
    %p74 = scmp.eq.s32.totalorder %s32, 0
    %p75 = por %p73, %p74
    %s77 = sadd.s32 %s76, 1
    %p80 = scmp.eq.s32.totalorder %s26, 1
    %p81 = scmp.ne.s32.totalorder %s76, %s78
    %p82 = scmp.eq.s32.totalorder %s26, 0
    %p83 = por %p81, %p82
    %p84 = scmp.ne.s32.totalorder %s76, %s78
    %p85 = scmp.eq.s32.totalorder %s31, 1
    %p86 = por %p84, %p85
    %p87 = scmp.ne.s32.totalorder %s78, %s79
    %p88 = scmp.eq.s32.totalorder %s31, 0
    %p89 = por %p87, %p88
    %p90 = scmp.ne.s32.totalorder %s78, %s79
    %p91 = scmp.eq.s32.totalorder %s32, 1
    %p92 = por %p90, %p91
    %p94 = scmp.ne.s32.totalorder %s79, %s93
    %p95 = scmp.eq.s32.totalorder %s32, 0
    %p96 = por %p94, %p95
    %s97 = ssub.s32 %s26, %s33
    %p98 = scmp.eq.s32.totalorder %s97, 0
    %s100 = sadd.s32 %s99, 1
    %s101 = scalar_select %p98, %s99, %s100
    %p104 = pneg %p98
    %p105 = scmp.eq.s32.totalorder %s26, 1
    %p106 = por %p104, %p105
    %p107 = scmp.ne.s32.totalorder %s99, %s102
    %p108 = scmp.eq.s32.totalorder %s26, 0
    %p109 = por %p107, %p108
    %p110 = scmp.ne.s32.totalorder %s99, %s102
    %p111 = scmp.eq.s32.totalorder %s31, 1
    %p112 = por %p110, %p111
    %p113 = scmp.ne.s32.totalorder %s102, %s103
    %p114 = scmp.eq.s32.totalorder %s31, 0
    %p115 = por %p113, %p114
    %p116 = scmp.ne.s32.totalorder %s102, %s103
    %p117 = scmp.eq.s32.totalorder %s32, 1
    %p118 = por %p116, %p117
    %p120 = scmp.ne.s32.totalorder %s103, %s119
    %p121 = scmp.eq.s32.totalorder %s32, 0
    %p122 = por %p120, %p121
    %s123 = ssub.s32 %s26, %s33
    %p124 = scmp.eq.s32.totalorder %s123, 0
    %s126 = sadd.s32 %s125, 1
    %s127 = scalar_select %p124, %s125, %s126
    %p130 = pneg %p124
    %p131 = scmp.eq.s32.totalorder %s26, 1
    %p132 = por %p130, %p131
    %p133 = scmp.ne.s32.totalorder %s125, %s128
    %p134 = scmp.eq.s32.totalorder %s26, 0
    %p135 = por %p133, %p134
    %p136 = scmp.ne.s32.totalorder %s125, %s128
    %p137 = scmp.eq.s32.totalorder %s31, 1
    %p138 = por %p136, %p137
    %p139 = scmp.ne.s32.totalorder %s128, %s129
    %p140 = scmp.eq.s32.totalorder %s31, 0
    %p141 = por %p139, %p140
    %p142 = scmp.ne.s32.totalorder %s128, %s129
    %p143 = scmp.eq.s32.totalorder %s32, 1
    %p144 = por %p142, %p143
    %p146 = scmp.ne.s32.totalorder %s129, %s145
    %p147 = scmp.eq.s32.totalorder %s32, 0
    %p148 = por %p146, %p147
    %s149 = ssub.s32 %s26, %s33
    %p150 = scmp.eq.s32.totalorder %s149, 0
    %s152 = sadd.s32 %s151, 1
    %s153 = scalar_select %p150, %s151, %s152
    %p156 = pneg %p150
    %p157 = scmp.eq.s32.totalorder %s26, 1
    %p158 = por %p156, %p157
    %p159 = scmp.ne.s32.totalorder %s151, %s154
    %p160 = scmp.eq.s32.totalorder %s26, 0
    %p161 = por %p159, %p160
    %p162 = scmp.ne.s32.totalorder %s151, %s154
    %p163 = scmp.eq.s32.totalorder %s31, 1
    %p164 = por %p162, %p163
    %p165 = scmp.ne.s32.totalorder %s154, %s155
    %p166 = scmp.eq.s32.totalorder %s31, 0
    %p167 = por %p165, %p166
    %p168 = scmp.ne.s32.totalorder %s154, %s155
    %p169 = scmp.eq.s32.totalorder %s32, 1
    %p170 = por %p168, %p169
    %p172 = scmp.ne.s32.totalorder %s155, %s171
    %p173 = scmp.eq.s32.totalorder %s32, 0
    %p174 = por %p172, %p173
    %s175 = ssub.s32 %s26, %s33
    %p176 = scmp.eq.s32.totalorder %s175, 0
    %s178 = sadd.s32 %s177, 1
    %s179 = scalar_select %p176, %s177, %s178
    %p182 = pneg %p176
    %p183 = scmp.eq.s32.totalorder %s26, 1
    %p184 = por %p182, %p183
    %p185 = scmp.ne.s32.totalorder %s177, %s180
    %p186 = scmp.eq.s32.totalorder %s26, 0
    %p187 = por %p185, %p186
    %p188 = scmp.ne.s32.totalorder %s177, %s180
    %p189 = scmp.eq.s32.totalorder %s31, 1
    %p190 = por %p188, %p189
    %p191 = scmp.ne.s32.totalorder %s180, %s181
    %p192 = scmp.eq.s32.totalorder %s31, 0
    %p193 = por %p191, %p192
    %p194 = scmp.ne.s32.totalorder %s180, %s181
    %p195 = scmp.eq.s32.totalorder %s32, 1
    %p196 = por %p194, %p195
    %p198 = scmp.ne.s32.totalorder %s181, %s197
    %p199 = scmp.eq.s32.totalorder %s32, 0
    %p200 = por %p198, %p199
    %s201 = ssub.s32 %s26, %s33
    %p202 = scmp.eq.s32.totalorder %s201, 0
    %s204 = sadd.s32 %s203, 1
    %s205 = scalar_select %p202, %s203, %s204
    %p208 = pneg %p202
    %p209 = scmp.eq.s32.totalorder %s26, 1
    %p210 = por %p208, %p209
    %p211 = scmp.ne.s32.totalorder %s203, %s206
    %p212 = scmp.eq.s32.totalorder %s26, 0
    %p213 = por %p211, %p212
    %p214 = scmp.ne.s32.totalorder %s203, %s206
    %p215 = scmp.eq.s32.totalorder %s31, 1
    %p216 = por %p214, %p215
    %p217 = scmp.ne.s32.totalorder %s206, %s207
    %p218 = scmp.eq.s32.totalorder %s31, 0
    %p219 = por %p217, %p218
    %p220 = scmp.ne.s32.totalorder %s206, %s207
    %p221 = scmp.eq.s32.totalorder %s32, 1
    %p222 = por %p220, %p221
    %p224 = scmp.ne.s32.totalorder %s207, %s223
    %p225 = scmp.eq.s32.totalorder %s32, 0
    %p226 = por %p224, %p225
    %s227 = ssub.s32 %s26, %s33
    %p228 = scmp.eq.s32.totalorder %s227, 0
    %s230 = sadd.s32 %s229, 1
    %s231 = scalar_select %p228, %s229, %s230
    %p234 = pneg %p228
    %p235 = scmp.eq.s32.totalorder %s26, 1
    %p236 = por %p234, %p235
    %p237 = scmp.ne.s32.totalorder %s229, %s232
    %p238 = scmp.eq.s32.totalorder %s26, 0
    %p239 = por %p237, %p238
    %p240 = scmp.ne.s32.totalorder %s229, %s232
    %p241 = scmp.eq.s32.totalorder %s31, 1
    %p242 = por %p240, %p241
    %p243 = scmp.ne.s32.totalorder %s232, %s233
    %p244 = scmp.eq.s32.totalorder %s31, 0
    %p245 = por %p243, %p244
    %p246 = scmp.ne.s32.totalorder %s232, %s233
    %p247 = scmp.eq.s32.totalorder %s32, 1
    %p248 = por %p246, %p247
    %p250 = scmp.ne.s32.totalorder %s233, %s249
    %p251 = scmp.eq.s32.totalorder %s32, 0
    %p252 = por %p250, %p251
    %s253 = ssub.s32 %s26, %s33
    %p254 = scmp.eq.s32.totalorder %s253, 0
    %s256 = sadd.s32 %s255, 1
    %s257 = scalar_select %p254, %s255, %s256
    %p260 = pneg %p254
    %p261 = scmp.eq.s32.totalorder %s26, 1
    %p262 = por %p260, %p261
    %p263 = scmp.ne.s32.totalorder %s255, %s258
    %p264 = scmp.eq.s32.totalorder %s26, 0
    %p265 = por %p263, %p264
    %p266 = scmp.ne.s32.totalorder %s255, %s258
    %p267 = scmp.eq.s32.totalorder %s31, 1
    %p268 = por %p266, %p267
    %p269 = scmp.ne.s32.totalorder %s258, %s259
    %p270 = scmp.eq.s32.totalorder %s31, 0
    %p271 = por %p269, %p270
    %p272 = scmp.ne.s32.totalorder %s258, %s259
    %p273 = scmp.eq.s32.totalorder %s32, 1
    %p274 = por %p272, %p273
    %p276 = scmp.ne.s32.totalorder %s259, %s275
    %p277 = scmp.eq.s32.totalorder %s32, 0
    %p278 = por %p276, %p277
    %s279 = ssub.s32 %s26, %s33
    %p280 = scmp.eq.s32.totalorder %s279, 0
    %s282 = sadd.s32 %s281, 1
    %s283 = scalar_select %p280, %s281, %s282
    %p286 = pneg %p280
    %p287 = scmp.eq.s32.totalorder %s26, 1
    %p288 = por %p286, %p287
    %p289 = scmp.ne.s32.totalorder %s281, %s284
    %p290 = scmp.eq.s32.totalorder %s26, 0
    %p291 = por %p289, %p290
    %p292 = scmp.ne.s32.totalorder %s281, %s284
    %p293 = scmp.eq.s32.totalorder %s31, 1
    %p294 = por %p292, %p293
    %p295 = scmp.ne.s32.totalorder %s284, %s285
    %p296 = scmp.eq.s32.totalorder %s31, 0
    %p297 = por %p295, %p296
    %p298 = scmp.ne.s32.totalorder %s284, %s285
    %p299 = scmp.eq.s32.totalorder %s32, 1
    %p300 = por %p298, %p299
    %p302 = scmp.ne.s32.totalorder %s285, %s301
    %p303 = scmp.eq.s32.totalorder %s32, 0
    %p304 = por %p302, %p303
    %s305 = ssub.s32 %s26, %s33
    %p306 = scmp.eq.s32.totalorder %s305, 0
    %s308 = sadd.s32 %s307, 1
    %s309 = scalar_select %p306, %s307, %s308
    %p312 = pneg %p306
    %p313 = scmp.eq.s32.totalorder %s26, 1
    %p314 = por %p312, %p313
    %p315 = scmp.ne.s32.totalorder %s307, %s310
    %p316 = scmp.eq.s32.totalorder %s26, 0
    %p317 = por %p315, %p316
    %p318 = scmp.ne.s32.totalorder %s307, %s310
    %p319 = scmp.eq.s32.totalorder %s31, 1
    %p320 = por %p318, %p319
    %p321 = scmp.ne.s32.totalorder %s310, %s311
    %p322 = scmp.eq.s32.totalorder %s31, 0
    %p323 = por %p321, %p322
    %p324 = scmp.ne.s32.totalorder %s310, %s311
    %p325 = scmp.eq.s32.totalorder %s32, 1
    %p326 = por %p324, %p325
    %p328 = scmp.ne.s32.totalorder %s311, %s327
    %p329 = scmp.eq.s32.totalorder %s32, 0
    %p330 = por %p328, %p329
    %s331 = ssub.s32 %s26, %s33
    %p332 = scmp.eq.s32.totalorder %s331, 0
    %s334 = sadd.s32 %s333, 1
    %s335 = scalar_select %p332, %s333, %s334
    %p338 = pneg %p332
    %p339 = scmp.eq.s32.totalorder %s26, 1
    %p340 = por %p338, %p339
    %p341 = scmp.ne.s32.totalorder %s333, %s336
    %p342 = scmp.eq.s32.totalorder %s26, 0
    %p343 = por %p341, %p342
    %p344 = scmp.ne.s32.totalorder %s333, %s336
    %p345 = scmp.eq.s32.totalorder %s31, 1
    %p346 = por %p344, %p345
    %p347 = scmp.ne.s32.totalorder %s336, %s337
    %p348 = scmp.eq.s32.totalorder %s31, 0
    %p349 = por %p347, %p348
    %p350 = scmp.ne.s32.totalorder %s336, %s337
    %p351 = scmp.eq.s32.totalorder %s32, 1
    %p352 = por %p350, %p351
    %p354 = scmp.ne.s32.totalorder %s337, %s353
    %p355 = scmp.eq.s32.totalorder %s32, 0
    %p356 = por %p354, %p355
    %s357 = ssub.s32 %s26, %s33
    %p358 = scmp.eq.s32.totalorder %s357, 0
    %s360 = sadd.s32 %s359, 1
    %s361 = scalar_select %p358, %s359, %s360
    %p364 = pneg %p358
    %p365 = scmp.eq.s32.totalorder %s26, 1
    %p366 = por %p364, %p365
    %p367 = scmp.ne.s32.totalorder %s359, %s362
    %p368 = scmp.eq.s32.totalorder %s26, 0
    %p369 = por %p367, %p368
    %p370 = scmp.ne.s32.totalorder %s359, %s362
    %p371 = scmp.eq.s32.totalorder %s31, 1
    %p372 = por %p370, %p371
    %p373 = scmp.ne.s32.totalorder %s362, %s363
    %p374 = scmp.eq.s32.totalorder %s31, 0
    %p375 = por %p373, %p374
    %p376 = scmp.ne.s32.totalorder %s362, %s363
    %p377 = scmp.eq.s32.totalorder %s32, 1
    %p378 = por %p376, %p377
    %p380 = scmp.ne.s32.totalorder %s363, %s379
    %p381 = scmp.eq.s32.totalorder %s32, 0
    %p382 = por %p380, %p381
    %s383 = ssub.s32 %s26, %s33
    %p384 = scmp.eq.s32.totalorder %s383, 0
    %s386 = sadd.s32 %s385, 1
    %s387 = scalar_select %p384, %s385, %s386
    %p390 = pneg %p384
    %p391 = scmp.eq.s32.totalorder %s26, 1
    %p392 = por %p390, %p391
    %p393 = scmp.ne.s32.totalorder %s385, %s388
    %p394 = scmp.eq.s32.totalorder %s26, 0
    %p395 = por %p393, %p394
    %p396 = scmp.ne.s32.totalorder %s385, %s388
    %p397 = scmp.eq.s32.totalorder %s31, 1
    %p398 = por %p396, %p397
    %p399 = scmp.ne.s32.totalorder %s388, %s389
    %p400 = scmp.eq.s32.totalorder %s31, 0
    %p401 = por %p399, %p400
    %p402 = scmp.ne.s32.totalorder %s388, %s389
    %p403 = scmp.eq.s32.totalorder %s32, 1
    %p404 = por %p402, %p403
    %p406 = scmp.ne.s32.totalorder %s389, %s405
    %p407 = scmp.eq.s32.totalorder %s32, 0
    %p408 = por %p406, %p407
    %s409 = ssub.s32 %s26, %s33
    %p410 = scmp.eq.s32.totalorder %s409, 0
    %s412 = sadd.s32 %s411, 1
    %s413 = scalar_select %p410, %s411, %s412
    %p416 = pneg %p410
    %p417 = scmp.eq.s32.totalorder %s26, 1
    %p418 = por %p416, %p417
    %p419 = scmp.ne.s32.totalorder %s411, %s414
    %p420 = scmp.eq.s32.totalorder %s26, 0
    %p421 = por %p419, %p420
    %p422 = scmp.ne.s32.totalorder %s411, %s414
    %p423 = scmp.eq.s32.totalorder %s31, 1
    %p424 = por %p422, %p423
    %p425 = scmp.ne.s32.totalorder %s414, %s415
    %p426 = scmp.eq.s32.totalorder %s31, 0
    %p427 = por %p425, %p426
    %p428 = scmp.ne.s32.totalorder %s414, %s415
    %p429 = scmp.eq.s32.totalorder %s32, 1
    %p430 = por %p428, %p429
    %p432 = scmp.ne.s32.totalorder %s415, %s431
    %p433 = scmp.eq.s32.totalorder %s32, 0
    %p434 = por %p432, %p433
    %s436 = sadd.s32 %s435, 1
    %p439 = scmp.eq.s32.totalorder %s26, 1
    %p440 = scmp.ne.s32.totalorder %s435, %s437
    %p441 = scmp.eq.s32.totalorder %s26, 0
    %p442 = por %p440, %p441
    %p443 = scmp.ne.s32.totalorder %s435, %s437
    %p444 = scmp.eq.s32.totalorder %s31, 1
    %p445 = por %p443, %p444
    %p446 = scmp.ne.s32.totalorder %s437, %s438
    %p447 = scmp.eq.s32.totalorder %s31, 0
    %p448 = por %p446, %p447
    %p449 = scmp.ne.s32.totalorder %s437, %s438
    %p450 = scmp.eq.s32.totalorder %s32, 1
    %p451 = por %p449, %p450
    %p453 = scmp.ne.s32.totalorder %s438, %s452
    %p454 = scmp.eq.s32.totalorder %s32, 0
    %p455 = por %p453, %p454
    %s457 = sadd.s32 %s456, 1
    %p460 = scmp.eq.s32.totalorder %s26, 1
    %p461 = scmp.ne.s32.totalorder %s456, %s458
    %p462 = scmp.eq.s32.totalorder %s26, 0
    %p463 = por %p461, %p462
    %p464 = scmp.ne.s32.totalorder %s456, %s458
    %p465 = scmp.eq.s32.totalorder %s31, 1
    %p466 = por %p464, %p465
    %p467 = scmp.ne.s32.totalorder %s458, %s459
    %p468 = scmp.eq.s32.totalorder %s31, 0
    %p469 = por %p467, %p468
    %p470 = scmp.ne.s32.totalorder %s458, %s459
    %p471 = scmp.eq.s32.totalorder %s32, 1
    %p472 = por %p470, %p471
    %p474 = scmp.ne.s32.totalorder %s459, %s473
    %p475 = scmp.eq.s32.totalorder %s32, 0
    %p476 = por %p474, %p475
    %s478 = sadd.s32 %s477, 1
    %p481 = scmp.eq.s32.totalorder %s26, 1
    %p482 = scmp.ne.s32.totalorder %s477, %s479
    %p483 = scmp.eq.s32.totalorder %s26, 0
    %p484 = por %p482, %p483
    %p485 = scmp.ne.s32.totalorder %s477, %s479
    %p486 = scmp.eq.s32.totalorder %s31, 1
    %p487 = por %p485, %p486
    %p488 = scmp.ne.s32.totalorder %s479, %s480
    %p489 = scmp.eq.s32.totalorder %s31, 0
    %p490 = por %p488, %p489
    %p491 = scmp.ne.s32.totalorder %s479, %s480
    %p492 = scmp.eq.s32.totalorder %s32, 1
    %p493 = por %p491, %p492
    %p495 = scmp.ne.s32.totalorder %s480, %s494
    %p496 = scmp.eq.s32.totalorder %s32, 0
    %p497 = por %p495, %p496
    %s499 = sadd.s32 %s498, 1
    %p502 = scmp.eq.s32.totalorder %s26, 1
    %p503 = scmp.ne.s32.totalorder %s498, %s500
    %p504 = scmp.eq.s32.totalorder %s26, 0
    %p505 = por %p503, %p504
    %p506 = scmp.ne.s32.totalorder %s498, %s500
    %p507 = scmp.eq.s32.totalorder %s31, 1
    %p508 = por %p506, %p507
    %p509 = scmp.ne.s32.totalorder %s500, %s501
    %p510 = scmp.eq.s32.totalorder %s31, 0
    %p511 = por %p509, %p510
    %p512 = scmp.ne.s32.totalorder %s500, %s501
    %p513 = scmp.eq.s32.totalorder %s32, 1
    %p514 = por %p512, %p513
    %p516 = scmp.ne.s32.totalorder %s501, %s515
    %p517 = scmp.eq.s32.totalorder %s32, 0
    %p518 = por %p516, %p517
    %s520 = sadd.s32 %s519, 1
    %p523 = scmp.eq.s32.totalorder %s26, 1
    %p524 = scmp.ne.s32.totalorder %s519, %s521
    %p525 = scmp.eq.s32.totalorder %s26, 0
    %p526 = por %p524, %p525
    %p527 = scmp.ne.s32.totalorder %s519, %s521
    %p528 = scmp.eq.s32.totalorder %s31, 1
    %p529 = por %p527, %p528
    %p530 = scmp.ne.s32.totalorder %s521, %s522
    %p531 = scmp.eq.s32.totalorder %s31, 0
    %p532 = por %p530, %p531
    %p533 = scmp.ne.s32.totalorder %s521, %s522
    %p534 = scmp.eq.s32.totalorder %s32, 1
    %p535 = por %p533, %p534
    %p537 = scmp.ne.s32.totalorder %s522, %s536
    %p538 = scmp.eq.s32.totalorder %s32, 0
    %p539 = por %p537, %p538
    %p540 = scmp.le.s32.totalorder 1, %s26
    %p541 = scmp.lt.s32.totalorder %s26, 3
    %p542 = pnand %p540, %p541
    %p543 = pneg %p542
    // Predicated region
    $region9: #{tpu_custom_call.1} parent=5 // pred_check
      _
    $region10: #{tpu_custom_call.1} parent=5 // pred_check_branch
      %545 = sbr.rel (%p542) target = $region12
    $region11: #{tpu_custom_call.1} parent=5 // pred_region
      %s546 = ssub.s32 %s26, 1
      // Predicated region
      $region13: #{tpu_custom_call.1} parent=11 // pred_check
        %p547 = pneg %p47
      $region14: #{tpu_custom_call.1} parent=11 // pred_check_branch
        %549 = sbr.rel (%p547) target = $region16
      $region15: #{tpu_custom_call.1} parent=11 // pred_region
        _
      $region16: #{tpu_custom_call.1} parent=11 // pred_fallthru
        _
      // Predicated region
      $region17: #{tpu_custom_call.1} parent=11 // pred_check
        %p550 = pneg %p68
      $region18: #{tpu_custom_call.1} parent=11 // pred_check_branch
        %552 = sbr.rel (%p550) target = $region20
      $region19: #{tpu_custom_call.1} parent=11 // pred_region
        _
      $region20: #{tpu_custom_call.1} parent=11 // pred_fallthru
        _
      // Predicated region
      $region21: #{tpu_custom_call.1} parent=11 // pred_check
        %p553 = pneg %p89
      $region22: #{tpu_custom_call.1} parent=11 // pred_check_branch
        %555 = sbr.rel (%p553) target = $region24
      $region23: #{tpu_custom_call.1} parent=11 // pred_region
        _
      $region24: #{tpu_custom_call.1} parent=11 // pred_fallthru
        _
      // Predicated region
      $region25: #{tpu_custom_call.1} parent=11 // pred_check
        %p556 = pneg %p448
      $region26: #{tpu_custom_call.1} parent=11 // pred_check_branch
        %558 = sbr.rel (%p556) target = $region28
      $region27: #{tpu_custom_call.1} parent=11 // pred_region
        _
      $region28: #{tpu_custom_call.1} parent=11 // pred_fallthru
        _
      // Predicated region
      $region29: #{tpu_custom_call.1} parent=11 // pred_check
        %p559 = pneg %p469
      $region30: #{tpu_custom_call.1} parent=11 // pred_check_branch
        %561 = sbr.rel (%p559) target = $region32
      $region31: #{tpu_custom_call.1} parent=11 // pred_region
        _
      $region32: #{tpu_custom_call.1} parent=11 // pred_fallthru
        _
      // Predicated region
      $region33: #{tpu_custom_call.1} parent=11 // pred_check
        %p562 = pneg %p490
      $region34: #{tpu_custom_call.1} parent=11 // pred_check_branch
        %564 = sbr.rel (%p562) target = $region36
      $region35: #{tpu_custom_call.1} parent=11 // pred_region
        _
      $region36: #{tpu_custom_call.1} parent=11 // pred_fallthru
        _
      // Predicated region
      $region37: #{tpu_custom_call.1} parent=11 // pred_check
        %p565 = pneg %p511
      $region38: #{tpu_custom_call.1} parent=11 // pred_check_branch
        %567 = sbr.rel (%p565) target = $region40
      $region39: #{tpu_custom_call.1} parent=11 // pred_region
        _
      $region40: #{tpu_custom_call.1} parent=11 // pred_fallthru
        _
    $region12: #{tpu_custom_call.1} parent=5 // pred_fallthru
      _
    %p568 = scmp.lt.s32.totalorder %s26, 2
    // Predicated region
    $region41: #{tpu_custom_call.1} parent=5 // pred_check
      %p569 = pneg %p568
    $region42: #{tpu_custom_call.1} parent=5 // pred_check_branch
      %571 = sbr.rel (%p569) target = $region44
    $region43: #{tpu_custom_call.1} parent=5 // pred_region
      // Predicated region
      $region45: #{tpu_custom_call.1} parent=43 // pred_check
        %p572 = pneg %p109
      $region46: #{tpu_custom_call.1} parent=43 // pred_check_branch
        %574 = sbr.rel (%p572) target = $region48
      $region47: #{tpu_custom_call.1} parent=43 // pred_region
        %p575 = scmp.lt.s32.totalorder %s26, 1
        %s576 = scalar_select %p575, %s26, 1
        %s577 = scalar_lea.vmem %s3, %s576
      $region48: #{tpu_custom_call.1} parent=43 // pred_fallthru
        _
      // Predicated region
      $region49: #{tpu_custom_call.1} parent=43 // pred_check
        %p578 = pneg %p135
      $region50: #{tpu_custom_call.1} parent=43 // pred_check_branch
        %580 = sbr.rel (%p578) target = $region52
      $region51: #{tpu_custom_call.1} parent=43 // pred_region
        %p581 = scmp.lt.s32.totalorder %s26, 1
        %s582 = scalar_select %p581, %s26, 1
        %s583 = scalar_lea.vmem %s4, %s582
      $region52: #{tpu_custom_call.1} parent=43 // pred_fallthru
        _
      // Predicated region
      $region53: #{tpu_custom_call.1} parent=43 // pred_check
        %p584 = pneg %p161
      $region54: #{tpu_custom_call.1} parent=43 // pred_check_branch
        %586 = sbr.rel (%p584) target = $region56
      $region55: #{tpu_custom_call.1} parent=43 // pred_region
        %p587 = scmp.lt.s32.totalorder %s26, 1
        %s588 = scalar_select %p587, %s26, 1
        %s589 = smul.addr %s588, 64
        %s590 = smul.addr %s589, 8
        %s591 = scalar_lea.vmem %s5, %s590
      $region56: #{tpu_custom_call.1} parent=43 // pred_fallthru
        _
      // Predicated region
      $region57: #{tpu_custom_call.1} parent=43 // pred_check
        %p592 = pneg %p187
      $region58: #{tpu_custom_call.1} parent=43 // pred_check_branch
        %594 = sbr.rel (%p592) target = $region60
      $region59: #{tpu_custom_call.1} parent=43 // pred_region
        %p595 = scmp.lt.s32.totalorder %s26, 1
        %s596 = scalar_select %p595, %s26, 1
        %s597 = smul.addr %s596, 64
        %s598 = smul.addr %s597, 8
        %s599 = scalar_lea.vmem %s6, %s598
      $region60: #{tpu_custom_call.1} parent=43 // pred_fallthru
        _
      // Predicated region
      $region61: #{tpu_custom_call.1} parent=43 // pred_check
        %p600 = pneg %p213
      $region62: #{tpu_custom_call.1} parent=43 // pred_check_branch
        %602 = sbr.rel (%p600) target = $region64
      $region63: #{tpu_custom_call.1} parent=43 // pred_region
        %p603 = scmp.lt.s32.totalorder %s26, 1
        %s604 = scalar_select %p603, %s26, 1
        %s605 = smul.addr %s604, 64
        %s606 = smul.addr %s605, 8
        %s607 = scalar_lea.vmem %s7, %s606
      $region64: #{tpu_custom_call.1} parent=43 // pred_fallthru
        _
      // Predicated region
      $region65: #{tpu_custom_call.1} parent=43 // pred_check
        %p608 = pneg %p239
      $region66: #{tpu_custom_call.1} parent=43 // pred_check_branch
        %610 = sbr.rel (%p608) target = $region68
      $region67: #{tpu_custom_call.1} parent=43 // pred_region
        %p611 = scmp.lt.s32.totalorder %s26, 1
        %s612 = scalar_select %p611, %s26, 1
        %s613 = smul.addr %s612, 32
        %s614 = smul.addr %s613, 8
        %s615 = scalar_lea.vmem %s8, %s614
      $region68: #{tpu_custom_call.1} parent=43 // pred_fallthru
        _
      // Predicated region
      $region69: #{tpu_custom_call.1} parent=43 // pred_check
        %p616 = pneg %p265
      $region70: #{tpu_custom_call.1} parent=43 // pred_check_branch
        %618 = sbr.rel (%p616) target = $region72
      $region71: #{tpu_custom_call.1} parent=43 // pred_region
        %p619 = scmp.lt.s32.totalorder %s26, 1
        %s620 = scalar_select %p619, %s26, 1
        %s621 = scalar_lea.vmem %s9, %s620
      $region72: #{tpu_custom_call.1} parent=43 // pred_fallthru
        _
      // Predicated region
      $region73: #{tpu_custom_call.1} parent=43 // pred_check
        %p622 = pneg %p291
      $region74: #{tpu_custom_call.1} parent=43 // pred_check_branch
        %624 = sbr.rel (%p622) target = $region76
      $region75: #{tpu_custom_call.1} parent=43 // pred_region
        %p625 = scmp.lt.s32.totalorder %s26, 1
        %s626 = scalar_select %p625, %s26, 1
        %s627 = scalar_lea.vmem %s10, %s626
      $region76: #{tpu_custom_call.1} parent=43 // pred_fallthru
        _
      // Predicated region
      $region77: #{tpu_custom_call.1} parent=43 // pred_check
        %p628 = pneg %p317
      $region78: #{tpu_custom_call.1} parent=43 // pred_check_branch
        %630 = sbr.rel (%p628) target = $region80
      $region79: #{tpu_custom_call.1} parent=43 // pred_region
        %p631 = scmp.lt.s32.totalorder %s26, 1
        %s632 = scalar_select %p631, %s26, 1
        %s633 = scalar_lea.vmem %s11, %s632
      $region80: #{tpu_custom_call.1} parent=43 // pred_fallthru
        _
      // Predicated region
      $region81: #{tpu_custom_call.1} parent=43 // pred_check
        %p634 = pneg %p343
      $region82: #{tpu_custom_call.1} parent=43 // pred_check_branch
        %636 = sbr.rel (%p634) target = $region84
      $region83: #{tpu_custom_call.1} parent=43 // pred_region
        %p637 = scmp.lt.s32.totalorder %s26, 1
        %s638 = scalar_select %p637, %s26, 1
        %s639 = smul.addr %s638, 16
        %s640 = smul.addr %s639, 8
        %s641 = scalar_lea.vmem %s12, %s640
      $region84: #{tpu_custom_call.1} parent=43 // pred_fallthru
        _
      // Predicated region
      $region85: #{tpu_custom_call.1} parent=43 // pred_check
        %p642 = pneg %p369
      $region86: #{tpu_custom_call.1} parent=43 // pred_check_branch
        %644 = sbr.rel (%p642) target = $region88
      $region87: #{tpu_custom_call.1} parent=43 // pred_region
        %p645 = scmp.lt.s32.totalorder %s26, 1
        %s646 = scalar_select %p645, %s26, 1
        %s647 = scalar_lea.vmem %s13, %s646
      $region88: #{tpu_custom_call.1} parent=43 // pred_fallthru
        _
      // Predicated region
      $region89: #{tpu_custom_call.1} parent=43 // pred_check
        %p648 = pneg %p395
      $region90: #{tpu_custom_call.1} parent=43 // pred_check_branch
        %650 = sbr.rel (%p648) target = $region92
      $region91: #{tpu_custom_call.1} parent=43 // pred_region
        %p651 = scmp.lt.s32.totalorder %s26, 1
        %s652 = scalar_select %p651, %s26, 1
        %s653 = smul.addr %s652, 8
        %s654 = smul.addr %s653, 8
        %s655 = scalar_lea.vmem %s14, %s654
      $region92: #{tpu_custom_call.1} parent=43 // pred_fallthru
        _
      // Predicated region
      $region93: #{tpu_custom_call.1} parent=43 // pred_check
        %p656 = pneg %p421
      $region94: #{tpu_custom_call.1} parent=43 // pred_check_branch
        %658 = sbr.rel (%p656) target = $region96
      $region95: #{tpu_custom_call.1} parent=43 // pred_region
        %p659 = scmp.lt.s32.totalorder %s26, 1
        %s660 = scalar_select %p659, %s26, 1
        %s661 = scalar_lea.vmem %s15, %s660
      $region96: #{tpu_custom_call.1} parent=43 // pred_fallthru
        _
    $region44: #{tpu_custom_call.1} parent=5 // pred_fallthru
      _
    %p662 = scmp.le.s32.totalorder 1, %s26
    %p663 = scmp.lt.s32.totalorder %s26, 3
    %p664 = pnand %p662, %p663
    %p665 = pneg %p664
    // Predicated region
    $region97: #{tpu_custom_call.1} parent=5 // pred_check
      _
    $region98: #{tpu_custom_call.1} parent=5 // pred_check_branch
      %667 = sbr.rel (%p664) target = $region100
    $region99: #{tpu_custom_call.1} parent=5 // pred_region
      %s668 = ssub.s32 %s26, 1
      %p669 = pneg %p47
      %p670 = pneg %p44
      %p671 = pneg %p68
      %p672 = pneg %p65
      %p673 = pneg %p89
      %p674 = pneg %p86
      %p675 = scmp.lt.s32.totalorder %s31, 1
      %s676 = scalar_select %p675, %s31, 1
      %s677 = scalar_lea.vmem %s3, %s676
      %p678 = pneg %p115
      %p679 = pneg %p112
      %p680 = scmp.lt.s32.totalorder %s31, 1
      %s681 = scalar_select %p680, %s31, 1
      %s682 = scalar_lea.vmem %s4, %s681
      %p683 = pneg %p141
      %p684 = pneg %p138
      %p685 = scmp.lt.s32.totalorder %s31, 1
      %s686 = scalar_select %p685, %s31, 1
      %s687 = smul.addr %s686, 64
      %s688 = smul.addr %s687, 8
      %s689 = scalar_lea.vmem %s5, %s688
      %p690 = pneg %p167
      %p691 = pneg %p164
      %p692 = scmp.lt.s32.totalorder %s31, 1
      %s693 = scalar_select %p692, %s31, 1
      %s694 = smul.addr %s693, 64
      %s695 = smul.addr %s694, 8
      %s696 = scalar_lea.vmem %s6, %s695
      %p697 = pneg %p193
      %p698 = pneg %p190
      %p699 = scmp.lt.s32.totalorder %s31, 1
      %s700 = scalar_select %p699, %s31, 1
      %s701 = smul.addr %s700, 64
      %s702 = smul.addr %s701, 8
      %s703 = scalar_lea.vmem %s7, %s702
      %p704 = pneg %p219
      %p705 = pneg %p216
      %p706 = scmp.lt.s32.totalorder %s31, 1
      %s707 = scalar_select %p706, %s31, 1
      %s708 = smul.addr %s707, 32
      %s709 = smul.addr %s708, 8
      %s710 = scalar_lea.vmem %s8, %s709
      %p711 = pneg %p245
      %p712 = pneg %p242
      %p713 = scmp.lt.s32.totalorder %s31, 1
      %s714 = scalar_select %p713, %s31, 1
      %s715 = scalar_lea.vmem %s9, %s714
      %p716 = pneg %p271
      %p717 = pneg %p268
      %p718 = scmp.lt.s32.totalorder %s31, 1
      %s719 = scalar_select %p718, %s31, 1
      %s720 = scalar_lea.vmem %s10, %s719
      %p721 = pneg %p297
      %p722 = pneg %p294
      %p723 = scmp.lt.s32.totalorder %s31, 1
      %s724 = scalar_select %p723, %s31, 1
      %s725 = scalar_lea.vmem %s11, %s724
      %p726 = pneg %p323
      %p727 = pneg %p320
      %p728 = scmp.lt.s32.totalorder %s31, 1
      %s729 = scalar_select %p728, %s31, 1
      %s730 = smul.addr %s729, 16
      %s731 = smul.addr %s730, 8
      %s732 = scalar_lea.vmem %s12, %s731
      %p733 = pneg %p349
      %p734 = pneg %p346
      %p735 = scmp.lt.s32.totalorder %s31, 1
      %s736 = scalar_select %p735, %s31, 1
      %s737 = scalar_lea.vmem %s13, %s736
      %p738 = pneg %p375
      %p739 = pneg %p372
      %p740 = scmp.lt.s32.totalorder %s31, 1
      %s741 = scalar_select %p740, %s31, 1
      %s742 = smul.addr %s741, 8
      %s743 = smul.addr %s742, 8
      %s744 = scalar_lea.vmem %s14, %s743
      %p745 = pneg %p401
      %p746 = pneg %p398
      %p747 = scmp.lt.s32.totalorder %s31, 1
      %s748 = scalar_select %p747, %s31, 1
      %s749 = scalar_lea.vmem %s15, %s748
      %p750 = pneg %p427
      %p751 = pneg %p424
      %p752 = pneg %p448
      %p753 = pneg %p445
      %p754 = pneg %p469
      %p755 = pneg %p466
      %p756 = pneg %p490
      %p757 = pneg %p487
      %p758 = pneg %p511
      %p759 = pneg %p508
      %p760 = pneg %p532
      %p761 = pneg %p529
      %p762 = scmp.lt.s32.totalorder %s31, 1
      %s763 = scalar_select %p762, %s31, 1
      %s764 = scalar_lea.vmem %s3, %s763
      %p765 = scmp.lt.s32.totalorder %s31, 1
      %s766 = scalar_select %p765, %s31, 1
      %s767 = scalar_lea.vmem %s4, %s766
      %p768 = scmp.lt.s32.totalorder %s31, 1
      %s769 = scalar_select %p768, %s31, 1
      %s770 = smul.addr %s769, 64
      %s771 = smul.addr %s770, 8
      %s772 = scalar_lea.vmem %s5, %s771
      %p773 = scmp.lt.s32.totalorder %s31, 1
      %s774 = scalar_select %p773, %s31, 1
      %s775 = smul.addr %s774, 64
      %s776 = smul.addr %s775, 8
      %s777 = scalar_lea.vmem %s6, %s776
      %p778 = scmp.lt.s32.totalorder %s31, 1
      %s779 = scalar_select %p778, %s31, 1
      %s780 = smul.addr %s779, 64
      %s781 = smul.addr %s780, 8
      %s782 = scalar_lea.vmem %s7, %s781
      %p783 = scmp.lt.s32.totalorder %s31, 1
      %s784 = scalar_select %p783, %s31, 1
      %s785 = smul.addr %s784, 32
      %s786 = smul.addr %s785, 8
      %s787 = scalar_lea.vmem %s8, %s786
      %p788 = scmp.lt.s32.totalorder %s31, 1
      %s789 = scalar_select %p788, %s31, 1
      %s790 = scalar_lea.vmem %s9, %s789
      %p791 = scmp.lt.s32.totalorder %s31, 1
      %s792 = scalar_select %p791, %s31, 1
      %s793 = scalar_lea.vmem %s10, %s792
      %p794 = scmp.lt.s32.totalorder %s31, 1
      %s795 = scalar_select %p794, %s31, 1
      %s796 = scalar_lea.vmem %s11, %s795
      %p797 = scmp.lt.s32.totalorder %s31, 1
      %s798 = scalar_select %p797, %s31, 1
      %s799 = smul.addr %s798, 16
      %s800 = smul.addr %s799, 8
      %s801 = scalar_lea.vmem %s12, %s800
      %p802 = scmp.lt.s32.totalorder %s31, 1
      %s803 = scalar_select %p802, %s31, 1
      %s804 = scalar_lea.vmem %s13, %s803
      %p805 = scmp.lt.s32.totalorder %s31, 1
      %s806 = scalar_select %p805, %s31, 1
      %s807 = smul.addr %s806, 8
      %s808 = smul.addr %s807, 8
      %s809 = scalar_lea.vmem %s14, %s808
      %p810 = scmp.lt.s32.totalorder %s31, 1
      %s811 = scalar_select %p810, %s31, 1
      %s812 = scalar_lea.vmem %s15, %s811
      %p813 = scmp.eq.s32.totalorder %s31, 0
      // Predicated region
      $region101: #{tpu_custom_call.1} parent=99 // pred_check
        %p814 = pneg %p813
      $region102: #{tpu_custom_call.1} parent=99 // pred_check_branch
        %816 = sbr.rel (%p814) target = $region104
      $region103: #{tpu_custom_call.1} parent=99 // pred_region
        %v817 = vld [vmem:[%s0] sm:$0xff]
        %v818 = vld [vmem:[%s0 + $0x8] sm:$0xff]
        %v819 = vld [vmem:[%s2] sm:$0xff]
        %v820 = vld [vmem:[%s2 + $0x8] sm:$0xff]
        %v821 = vld [vmem:[%s2 + $0x10] sm:$0xff]
        %v822 = vld [vmem:[%s2 + $0x18] sm:$0xff]
        %v823 = vld [vmem:[%s2 + $0x20] sm:$0xff]
        %v824 = vld [vmem:[%s2 + $0x28] sm:$0xff]
        %v825 = vld [vmem:[%s2 + $0x30] sm:$0xff]
        %v826 = vld [vmem:[%s2 + $0x38] sm:$0xff]
        %v827 = vld [vmem:[%s2 + $0x40] sm:$0xff]
        %v828 = vld [vmem:[%s2 + $0x48] sm:$0xff]
        %v829 = vld [vmem:[%s2 + $0x50] sm:$0xff]
        %v830 = vld [vmem:[%s2 + $0x58] sm:$0xff]
        %v831 = vld [vmem:[%s1] sm:$0xff]
        %v832 = vld [vmem:[%s1 + $0x8] sm:$0xff]
        %vm833 = vcmask 785408
        %v835 = vsel %vm833, %v817, 0
        %v838 = vsel %vm833, %v818, 0
        %840 = vmatprep.subr.mxu0 0.0
        %841 = vmatpush1.msra.mxu0 %v819
        %842 = vmatprep.subr.mxu0 0.0
        %843 = vmatpush1.msra.mxu0 %v820
        %844 = vmatprep.subr.mxu0 0.0
        %845 = vmatpush1.msra.mxu0 %v821
        %846 = vmatprep.subr.mxu0 0.0
        %847 = vmatpush1.msra.mxu0 %v822
        %848 = vmatprep.subr.mxu0 0.0
        %849 = vmatpush1.msra.mxu0 %v823
        %850 = vmatprep.subr.mxu0 0.0
        %851 = vmatpush1.msra.mxu0 %v824
        %852 = vmatprep.subr.mxu0 0.0
        %853 = vmatpush1.msra.mxu0 %v825
        %854 = vmatprep.subr.mxu0 0.0
        %855 = vmatpush1.msra.mxu0 %v826
        %856 = vmatprep.subr.mxu0 0.0
        %857 = vmatpush1.msra.mxu0 %v827
        %858 = vmatprep.subr.mxu0 0.0
        %859 = vmatpush1.msra.mxu0 %v828
        %860 = vmatprep.subr.mxu0 0.0
        %861 = vmatpush1.msra.mxu0 %v829
        %862 = vmatprep.subr.mxu0 0.0
        %863 = vmatpush1.msra.mxu0 %v830
        %864 = vmatprep.subr.mxu0 0.0
        %865 = vmatpush1.msra.mxu0 0.0
        %866 = vmatprep.subr.mxu0 0.0
        %867 = vmatpush1.msra.mxu0 0.0
        %868 = vmatprep.subr.mxu0 0.0
        %869 = vmatpush1.msra.mxu0 0.0
        %870 = vmatprep.subr.mxu0 0.0
        %871 = vmatpush1.msra.mxu0 0.0
        %872 = vmatprep.subr.mxu0 0.0
        %873 = vmatpush1.msra.mxu0 0.0
        %874 = vmatprep.subr.mxu0 0.0
        %875 = vmatpush1.msra.mxu0 0.0
        %876 = vmatprep.subr.mxu0 0.0
        %877 = vmatpush1.msra.mxu0 0.0
        %878 = vmatprep.subr.mxu0 0.0
        %879 = vmatpush1.msra.mxu0 0.0
        %880 = vmatprep.subr.mxu0 0.0
        %881 = vmatpush1.msra.mxu0 0.0
        %882 = vmatprep.subr.mxu0 0.0
        %883 = vmatpush1.msra.mxu0 0.0
        %884 = vmatprep.subr.mxu0 0.0
        %885 = vmatpush1.msra.mxu0 0.0
        %886 = vmatprep.subr.mxu0 0.0
        %887 = vmatpush1.msra.mxu0 0.0
        %888 = vmatprep.subr.mxu0 0.0
        %889 = vmatpush1.msra.mxu0 0.0
        %890 = vmatprep.subr.mxu0 0.0
        %891 = vmatpush1.msra.mxu0 0.0
        %892 = vmatprep.subr.mxu0 0.0
        %893 = vmatpush1.msra.mxu0 0.0
        %894 = vmatprep.subr.mxu0 0.0
        %895 = vmatpush1.msra.mxu0 0.0
        %896 = vmatprep.subr.mxu0 0.0
        %897 = vmatpush1.msra.mxu0 0.0
        %898 = vmatprep.subr.mxu0 0.0
        %899 = vmatpush1.msra.mxu0 0.0
        %900 = vmatprep.subr.mxu0 0.0
        %901 = vmatpush1.msra.mxu0 0.0
        %902 = vmatprep.subr.mxu0 0.0
        %903 = vmatpush1.msra.mxu0 0.0
        %904 = vmatprep.mubr.f32.mxu0 0.0
        %905 = vmatmul.mubr.f32.gmra.mrb[0].mxu0 %v835
        %v906 = vpop.f32.mrb[0].mxu0
        %v907 = vadd.f32 %v831, %v906
        %v908 = vpop.f32.mrb[0].mxu0
        %909 = vmatprep.mubr.f32.mxu0 0.0
        %910 = vmatmul.mubr.f32.gmra.mrb[0].mxu0 %v838
        %v911 = vpop.f32.mrb[0].mxu0
        %v912 = vadd.f32 %v832, %v911
        %v913 = vpop.f32.mrb[0].mxu0
        %914 = vdwg.mxu0
        %915 = vst [vmem:[#allocation2] sm:$0xff] %v907
        %916 = vst [vmem:[#allocation2 + $0x8] sm:$0xff] %v912
      $region104: #{tpu_custom_call.1} parent=99 // pred_fallthru
        _
      %v917 = vld [vmem:[#allocation2] sm:$0xff]
      %v918 = vld [vmem:[#allocation2 + $0x8] sm:$0xff]
      %v919 = vld [vmem:[%s764] sm:$0x1]
      %v920 = vld [vmem:[%s767] sm:$0x1]
      %921 = vadd.xlane.f32.xlu0 %v917
      %v922 = vpop.xlane.xlu0 %921
      %923 = vadd.xlane.f32.xlu0 %v918
      %v924 = vpop.xlane.xlu0 %923
      %v925 = vrcp.pop 128.0
      %v926 = vmul.f32 %v922, %v925
      %v927 = vmul.f32 %v924, %v925
      %v928 = vmul.f32 %v917, %v917
      %v929 = vmul.f32 %v918, %v918
      %930 = vadd.xlane.f32.xlu0 %v928
      %v931 = vpop.xlane.xlu0 %930
      %932 = vadd.xlane.f32.xlu0 %v929
      %v933 = vpop.xlane.xlu0 %932
      %v934 = vmul.f32 %v931, %v925
      %v935 = vmul.f32 %v933, %v925
      %v936 = vmul.f32 %v926, %v926
      %v937 = vmul.f32 %v927, %v927
      %v938 = vsub.f32 %v934, %v936
      %v939 = vsub.f32 %v935, %v937
      %v940 = vsub.f32 %v917, %v926
      %v941 = vsub.f32 %v918, %v927
      %v942 = vadd.f32 %v938, 1e-05
      %v943 = vadd.f32 %v939, 1e-05
      %v944 = vrsqrt.pop %v942
      %v945 = vrsqrt.pop %v943
      %v946 = vmul.f32 %v940, %v944
      %v947 = vmul.f32 %v941, %v945
      %v949 = vlaneseq
      %v950 = vshrl.u32 %v949, 7
      %v951 = vsub.s32 0, %v950
      %v952 = vrot.slane %v919, %v951
      %v954 = vmul.f32 %v946, %v952
      %v955 = vmul.f32 %v947, %v952
      %v957 = vlaneseq
      %v958 = vshrl.u32 %v957, 7
      %v959 = vsub.s32 0, %v958
      %v960 = vrot.slane %v920, %v959
      %v962 = vadd.f32 %v954, %v960
      %v963 = vadd.f32 %v955, %v960
      %v964 = vld [vmem:[%s772] sm:$0xff]
      %v965 = vld [vmem:[%s772 + $0x8] sm:$0xff]
      %v966 = vld [vmem:[%s772 + $0x10] sm:$0xff]
      %v967 = vld [vmem:[%s772 + $0x18] sm:$0xff]
      %v968 = vld [vmem:[%s772 + $0x20] sm:$0xff]
      %v969 = vld [vmem:[%s772 + $0x28] sm:$0xff]
      %v970 = vld [vmem:[%s772 + $0x30] sm:$0xff]
      %v971 = vld [vmem:[%s772 + $0x38] sm:$0xff]
      %v972 = vld [vmem:[%s772 + $0x40] sm:$0xff]
      %v973 = vld [vmem:[%s772 + $0x48] sm:$0xff]
      %v974 = vld [vmem:[%s772 + $0x50] sm:$0xff]
      %v975 = vld [vmem:[%s772 + $0x58] sm:$0xff]
      %v976 = vld [vmem:[%s772 + $0x60] sm:$0xff]
      %v977 = vld [vmem:[%s772 + $0x68] sm:$0xff]
      %v978 = vld [vmem:[%s772 + $0x70] sm:$0xff]
      %v979 = vld [vmem:[%s772 + $0x78] sm:$0xff]
      %v980 = vld [vmem:[%s772 + $0x80] sm:$0xff]
      %v981 = vld [vmem:[%s772 + $0x88] sm:$0xff]
      %v982 = vld [vmem:[%s772 + $0x90] sm:$0xff]
      %v983 = vld [vmem:[%s772 + $0x98] sm:$0xff]
      %v984 = vld [vmem:[%s772 + $0xa0] sm:$0xff]
      %v985 = vld [vmem:[%s772 + $0xa8] sm:$0xff]
      %v986 = vld [vmem:[%s772 + $0xb0] sm:$0xff]
      %v987 = vld [vmem:[%s772 + $0xb8] sm:$0xff]
      %v988 = vld [vmem:[%s772 + $0xc0] sm:$0xff]
      %v989 = vld [vmem:[%s772 + $0xc8] sm:$0xff]
      %v990 = vld [vmem:[%s772 + $0xd0] sm:$0xff]
      %v991 = vld [vmem:[%s772 + $0xd8] sm:$0xff]
      %v992 = vld [vmem:[%s772 + $0xe0] sm:$0xff]
      %v993 = vld [vmem:[%s772 + $0xe8] sm:$0xff]
      %v994 = vld [vmem:[%s772 + $0xf0] sm:$0xff]
      %v995 = vld [vmem:[%s772 + $0xf8] sm:$0xff]
      %v996 = vld [vmem:[%s772 + $0x100] sm:$0xff]
      %v997 = vld [vmem:[%s772 + $0x108] sm:$0xff]
      %v998 = vld [vmem:[%s772 + $0x110] sm:$0xff]
      %v999 = vld [vmem:[%s772 + $0x118] sm:$0xff]
      %v1000 = vld [vmem:[%s772 + $0x120] sm:$0xff]
      %v1001 = vld [vmem:[%s772 + $0x128] sm:$0xff]
      %v1002 = vld [vmem:[%s772 + $0x130] sm:$0xff]
      %v1003 = vld [vmem:[%s772 + $0x138] sm:$0xff]
      %v1004 = vld [vmem:[%s772 + $0x140] sm:$0xff]
      %v1005 = vld [vmem:[%s772 + $0x148] sm:$0xff]
      %v1006 = vld [vmem:[%s772 + $0x150] sm:$0xff]
      %v1007 = vld [vmem:[%s772 + $0x158] sm:$0xff]
      %v1008 = vld [vmem:[%s772 + $0x160] sm:$0xff]
      %v1009 = vld [vmem:[%s772 + $0x168] sm:$0xff]
      %v1010 = vld [vmem:[%s772 + $0x170] sm:$0xff]
      %v1011 = vld [vmem:[%s772 + $0x178] sm:$0xff]
      %v1012 = vld [vmem:[%s772 + $0x180] sm:$0xff]
      %v1013 = vld [vmem:[%s772 + $0x188] sm:$0xff]
      %v1014 = vld [vmem:[%s772 + $0x190] sm:$0xff]
      %v1015 = vld [vmem:[%s772 + $0x198] sm:$0xff]
      %v1016 = vld [vmem:[%s772 + $0x1a0] sm:$0xff]
      %v1017 = vld [vmem:[%s772 + $0x1a8] sm:$0xff]
      %v1018 = vld [vmem:[%s772 + $0x1b0] sm:$0xff]
      %v1019 = vld [vmem:[%s772 + $0x1b8] sm:$0xff]
      %v1020 = vld [vmem:[%s772 + $0x1c0] sm:$0xff]
      %v1021 = vld [vmem:[%s772 + $0x1c8] sm:$0xff]
      %v1022 = vld [vmem:[%s772 + $0x1d0] sm:$0xff]
      %v1023 = vld [vmem:[%s772 + $0x1d8] sm:$0xff]
      %v1024 = vld [vmem:[%s772 + $0x1e0] sm:$0xff]
      %v1025 = vld [vmem:[%s772 + $0x1e8] sm:$0xff]
      %v1026 = vld [vmem:[%s772 + $0x1f0] sm:$0xff]
      %v1027 = vld [vmem:[%s772 + $0x1f8] sm:$0xff]
      %v1028 = vld [vmem:[%s777] sm:$0xff]
      %v1029 = vld [vmem:[%s777 + $0x8] sm:$0xff]
      %v1030 = vld [vmem:[%s777 + $0x10] sm:$0xff]
      %v1031 = vld [vmem:[%s777 + $0x18] sm:$0xff]
      %v1032 = vld [vmem:[%s777 + $0x20] sm:$0xff]
      %v1033 = vld [vmem:[%s777 + $0x28] sm:$0xff]
      %v1034 = vld [vmem:[%s777 + $0x30] sm:$0xff]
      %v1035 = vld [vmem:[%s777 + $0x38] sm:$0xff]
      %v1036 = vld [vmem:[%s777 + $0x40] sm:$0xff]
      %v1037 = vld [vmem:[%s777 + $0x48] sm:$0xff]
      %v1038 = vld [vmem:[%s777 + $0x50] sm:$0xff]
      %v1039 = vld [vmem:[%s777 + $0x58] sm:$0xff]
      %v1040 = vld [vmem:[%s777 + $0x60] sm:$0xff]
      %v1041 = vld [vmem:[%s777 + $0x68] sm:$0xff]
      %v1042 = vld [vmem:[%s777 + $0x70] sm:$0xff]
      %v1043 = vld [vmem:[%s777 + $0x78] sm:$0xff]
      %v1044 = vld [vmem:[%s777 + $0x80] sm:$0xff]
      %v1045 = vld [vmem:[%s777 + $0x88] sm:$0xff]
      %v1046 = vld [vmem:[%s777 + $0x90] sm:$0xff]
      %v1047 = vld [vmem:[%s777 + $0x98] sm:$0xff]
      %v1048 = vld [vmem:[%s777 + $0xa0] sm:$0xff]
      %v1049 = vld [vmem:[%s777 + $0xa8] sm:$0xff]
      %v1050 = vld [vmem:[%s777 + $0xb0] sm:$0xff]
      %v1051 = vld [vmem:[%s777 + $0xb8] sm:$0xff]
      %v1052 = vld [vmem:[%s777 + $0xc0] sm:$0xff]
      %v1053 = vld [vmem:[%s777 + $0xc8] sm:$0xff]
      %v1054 = vld [vmem:[%s777 + $0xd0] sm:$0xff]
      %v1055 = vld [vmem:[%s777 + $0xd8] sm:$0xff]
      %v1056 = vld [vmem:[%s777 + $0xe0] sm:$0xff]
      %v1057 = vld [vmem:[%s777 + $0xe8] sm:$0xff]
      %v1058 = vld [vmem:[%s777 + $0xf0] sm:$0xff]
      %v1059 = vld [vmem:[%s777 + $0xf8] sm:$0xff]
      %v1060 = vld [vmem:[%s777 + $0x100] sm:$0xff]
      %v1061 = vld [vmem:[%s777 + $0x108] sm:$0xff]
      %v1062 = vld [vmem:[%s777 + $0x110] sm:$0xff]
      %v1063 = vld [vmem:[%s777 + $0x118] sm:$0xff]
      %v1064 = vld [vmem:[%s777 + $0x120] sm:$0xff]
      %v1065 = vld [vmem:[%s777 + $0x128] sm:$0xff]
      %v1066 = vld [vmem:[%s777 + $0x130] sm:$0xff]
      %v1067 = vld [vmem:[%s777 + $0x138] sm:$0xff]
      %v1068 = vld [vmem:[%s777 + $0x140] sm:$0xff]
      %v1069 = vld [vmem:[%s777 + $0x148] sm:$0xff]
      %v1070 = vld [vmem:[%s777 + $0x150] sm:$0xff]
      %v1071 = vld [vmem:[%s777 + $0x158] sm:$0xff]
      %v1072 = vld [vmem:[%s777 + $0x160] sm:$0xff]
      %v1073 = vld [vmem:[%s777 + $0x168] sm:$0xff]
      %v1074 = vld [vmem:[%s777 + $0x170] sm:$0xff]
      %v1075 = vld [vmem:[%s777 + $0x178] sm:$0xff]
      %v1076 = vld [vmem:[%s777 + $0x180] sm:$0xff]
      %v1077 = vld [vmem:[%s777 + $0x188] sm:$0xff]
      %v1078 = vld [vmem:[%s777 + $0x190] sm:$0xff]
      %v1079 = vld [vmem:[%s777 + $0x198] sm:$0xff]
      %v1080 = vld [vmem:[%s777 + $0x1a0] sm:$0xff]
      %v1081 = vld [vmem:[%s777 + $0x1a8] sm:$0xff]
      %v1082 = vld [vmem:[%s777 + $0x1b0] sm:$0xff]
      %v1083 = vld [vmem:[%s777 + $0x1b8] sm:$0xff]
      %v1084 = vld [vmem:[%s777 + $0x1c0] sm:$0xff]
      %v1085 = vld [vmem:[%s777 + $0x1c8] sm:$0xff]
      %v1086 = vld [vmem:[%s777 + $0x1d0] sm:$0xff]
      %v1087 = vld [vmem:[%s777 + $0x1d8] sm:$0xff]
      %v1088 = vld [vmem:[%s777 + $0x1e0] sm:$0xff]
      %v1089 = vld [vmem:[%s777 + $0x1e8] sm:$0xff]
      %v1090 = vld [vmem:[%s777 + $0x1f0] sm:$0xff]
      %v1091 = vld [vmem:[%s777 + $0x1f8] sm:$0xff]
      %v1092 = vld [vmem:[%s782] sm:$0xff]
      %v1093 = vld [vmem:[%s782 + $0x8] sm:$0xff]
      %v1094 = vld [vmem:[%s782 + $0x10] sm:$0xff]
      %v1095 = vld [vmem:[%s782 + $0x18] sm:$0xff]
      %v1096 = vld [vmem:[%s782 + $0x20] sm:$0xff]
      %v1097 = vld [vmem:[%s782 + $0x28] sm:$0xff]
      %v1098 = vld [vmem:[%s782 + $0x30] sm:$0xff]
      %v1099 = vld [vmem:[%s782 + $0x38] sm:$0xff]
      %v1100 = vld [vmem:[%s782 + $0x40] sm:$0xff]
      %v1101 = vld [vmem:[%s782 + $0x48] sm:$0xff]
      %v1102 = vld [vmem:[%s782 + $0x50] sm:$0xff]
      %v1103 = vld [vmem:[%s782 + $0x58] sm:$0xff]
      %v1104 = vld [vmem:[%s782 + $0x60] sm:$0xff]
      %v1105 = vld [vmem:[%s782 + $0x68] sm:$0xff]
      %v1106 = vld [vmem:[%s782 + $0x70] sm:$0xff]
      %v1107 = vld [vmem:[%s782 + $0x78] sm:$0xff]
      %v1108 = vld [vmem:[%s782 + $0x80] sm:$0xff]
      %v1109 = vld [vmem:[%s782 + $0x88] sm:$0xff]
      %v1110 = vld [vmem:[%s782 + $0x90] sm:$0xff]
      %v1111 = vld [vmem:[%s782 + $0x98] sm:$0xff]
      %v1112 = vld [vmem:[%s782 + $0xa0] sm:$0xff]
      %v1113 = vld [vmem:[%s782 + $0xa8] sm:$0xff]
      %v1114 = vld [vmem:[%s782 + $0xb0] sm:$0xff]
      %v1115 = vld [vmem:[%s782 + $0xb8] sm:$0xff]
      %v1116 = vld [vmem:[%s782 + $0xc0] sm:$0xff]
      %v1117 = vld [vmem:[%s782 + $0xc8] sm:$0xff]
      %v1118 = vld [vmem:[%s782 + $0xd0] sm:$0xff]
      %v1119 = vld [vmem:[%s782 + $0xd8] sm:$0xff]
      %v1120 = vld [vmem:[%s782 + $0xe0] sm:$0xff]
      %v1121 = vld [vmem:[%s782 + $0xe8] sm:$0xff]
      %v1122 = vld [vmem:[%s782 + $0xf0] sm:$0xff]
      %v1123 = vld [vmem:[%s782 + $0xf8] sm:$0xff]
      %v1124 = vld [vmem:[%s782 + $0x100] sm:$0xff]
      %v1125 = vld [vmem:[%s782 + $0x108] sm:$0xff]
      %v1126 = vld [vmem:[%s782 + $0x110] sm:$0xff]
      %v1127 = vld [vmem:[%s782 + $0x118] sm:$0xff]
      %v1128 = vld [vmem:[%s782 + $0x120] sm:$0xff]
      %v1129 = vld [vmem:[%s782 + $0x128] sm:$0xff]
      %v1130 = vld [vmem:[%s782 + $0x130] sm:$0xff]
      %v1131 = vld [vmem:[%s782 + $0x138] sm:$0xff]
      %v1132 = vld [vmem:[%s782 + $0x140] sm:$0xff]
      %v1133 = vld [vmem:[%s782 + $0x148] sm:$0xff]
      %v1134 = vld [vmem:[%s782 + $0x150] sm:$0xff]
      %v1135 = vld [vmem:[%s782 + $0x158] sm:$0xff]
      %v1136 = vld [vmem:[%s782 + $0x160] sm:$0xff]
      %v1137 = vld [vmem:[%s782 + $0x168] sm:$0xff]
      %v1138 = vld [vmem:[%s782 + $0x170] sm:$0xff]
      %v1139 = vld [vmem:[%s782 + $0x178] sm:$0xff]
      %v1140 = vld [vmem:[%s782 + $0x180] sm:$0xff]
      %v1141 = vld [vmem:[%s782 + $0x188] sm:$0xff]
      %v1142 = vld [vmem:[%s782 + $0x190] sm:$0xff]
      %v1143 = vld [vmem:[%s782 + $0x198] sm:$0xff]
      %v1144 = vld [vmem:[%s782 + $0x1a0] sm:$0xff]
      %v1145 = vld [vmem:[%s782 + $0x1a8] sm:$0xff]
      %v1146 = vld [vmem:[%s782 + $0x1b0] sm:$0xff]
      %v1147 = vld [vmem:[%s782 + $0x1b8] sm:$0xff]
      %v1148 = vld [vmem:[%s782 + $0x1c0] sm:$0xff]
      %v1149 = vld [vmem:[%s782 + $0x1c8] sm:$0xff]
      %v1150 = vld [vmem:[%s782 + $0x1d0] sm:$0xff]
      %v1151 = vld [vmem:[%s782 + $0x1d8] sm:$0xff]
      %v1152 = vld [vmem:[%s782 + $0x1e0] sm:$0xff]
      %v1153 = vld [vmem:[%s782 + $0x1e8] sm:$0xff]
      %v1154 = vld [vmem:[%s782 + $0x1f0] sm:$0xff]
      %v1155 = vld [vmem:[%s782 + $0x1f8] sm:$0xff]
      %v1156 = vld [vmem:[%s787] sm:$0xff]
      %v1157 = vld [vmem:[%s787 + $0x8] sm:$0xff]
      %v1158 = vld [vmem:[%s787 + $0x10] sm:$0xff]
      %v1159 = vld [vmem:[%s787 + $0x18] sm:$0xff]
      %v1160 = vld [vmem:[%s787 + $0x20] sm:$0xff]
      %v1161 = vld [vmem:[%s787 + $0x28] sm:$0xff]
      %v1162 = vld [vmem:[%s787 + $0x30] sm:$0xff]
      %v1163 = vld [vmem:[%s787 + $0x38] sm:$0xff]
      %v1164 = vld [vmem:[%s787 + $0x40] sm:$0xff]
      %v1165 = vld [vmem:[%s787 + $0x48] sm:$0xff]
      %v1166 = vld [vmem:[%s787 + $0x50] sm:$0xff]
      %v1167 = vld [vmem:[%s787 + $0x58] sm:$0xff]
      %v1168 = vld [vmem:[%s787 + $0x60] sm:$0xff]
      %v1169 = vld [vmem:[%s787 + $0x68] sm:$0xff]
      %v1170 = vld [vmem:[%s787 + $0x70] sm:$0xff]
      %v1171 = vld [vmem:[%s787 + $0x78] sm:$0xff]
      %v1172 = vld [vmem:[%s787 + $0x80] sm:$0xff]
      %v1173 = vld [vmem:[%s787 + $0x88] sm:$0xff]
      %v1174 = vld [vmem:[%s787 + $0x90] sm:$0xff]
      %v1175 = vld [vmem:[%s787 + $0x98] sm:$0xff]
      %v1176 = vld [vmem:[%s787 + $0xa0] sm:$0xff]
      %v1177 = vld [vmem:[%s787 + $0xa8] sm:$0xff]
      %v1178 = vld [vmem:[%s787 + $0xb0] sm:$0xff]
      %v1179 = vld [vmem:[%s787 + $0xb8] sm:$0xff]
      %v1180 = vld [vmem:[%s787 + $0xc0] sm:$0xff]
      %v1181 = vld [vmem:[%s787 + $0xc8] sm:$0xff]
      %v1182 = vld [vmem:[%s787 + $0xd0] sm:$0xff]
      %v1183 = vld [vmem:[%s787 + $0xd8] sm:$0xff]
      %v1184 = vld [vmem:[%s787 + $0xe0] sm:$0xff]
      %v1185 = vld [vmem:[%s787 + $0xe8] sm:$0xff]
      %v1186 = vld [vmem:[%s787 + $0xf0] sm:$0xff]
      %v1187 = vld [vmem:[%s787 + $0xf8] sm:$0xff]
      %1188 = vmatprep.subr.mxu0 0.0
      %1189 = vmatpush1.msra.mxu0 %v964
      %1190 = vmatprep.subr.mxu0 0.0
      %1191 = vmatpush1.msra.mxu0 %v965
      %1192 = vmatprep.subr.mxu0 0.0
      %1193 = vmatpush1.msra.mxu0 %v966
      %1194 = vmatprep.subr.mxu0 0.0
      %1195 = vmatpush1.msra.mxu0 %v967
      %1196 = vmatprep.subr.mxu0 0.0
      %1197 = vmatpush1.msra.mxu0 %v968
      %1198 = vmatprep.subr.mxu0 0.0
      %1199 = vmatpush1.msra.mxu0 %v969
      %1200 = vmatprep.subr.mxu0 0.0
      %1201 = vmatpush1.msra.mxu0 %v970
      %1202 = vmatprep.subr.mxu0 0.0
      %1203 = vmatpush1.msra.mxu0 %v971
      %1204 = vmatprep.subr.mxu0 0.0
      %1205 = vmatpush1.msra.mxu0 %v972
      %1206 = vmatprep.subr.mxu0 0.0
      %1207 = vmatpush1.msra.mxu0 %v973
      %1208 = vmatprep.subr.mxu0 0.0
      %1209 = vmatpush1.msra.mxu0 %v974
      %1210 = vmatprep.subr.mxu0 0.0
      %1211 = vmatpush1.msra.mxu0 %v975
      %1212 = vmatprep.subr.mxu0 0.0
      %1213 = vmatpush1.msra.mxu0 %v976
      %1214 = vmatprep.subr.mxu0 0.0
      %1215 = vmatpush1.msra.mxu0 %v977
      %1216 = vmatprep.subr.mxu0 0.0
      %1217 = vmatpush1.msra.mxu0 %v978
      %1218 = vmatprep.subr.mxu0 0.0
      %1219 = vmatpush1.msra.mxu0 %v979
      %1220 = vmatprep.subr.mxu0 0.0
      %1221 = vmatpush1.msra.mxu0 0.0
      %1222 = vmatprep.subr.mxu0 0.0
      %1223 = vmatpush1.msra.mxu0 0.0
      %1224 = vmatprep.subr.mxu0 0.0
      %1225 = vmatpush1.msra.mxu0 0.0
      %1226 = vmatprep.subr.mxu0 0.0
      %1227 = vmatpush1.msra.mxu0 0.0
      %1228 = vmatprep.subr.mxu0 0.0
      %1229 = vmatpush1.msra.mxu0 0.0
      %1230 = vmatprep.subr.mxu0 0.0
      %1231 = vmatpush1.msra.mxu0 0.0
      %1232 = vmatprep.subr.mxu0 0.0
      %1233 = vmatpush1.msra.mxu0 0.0
      %1234 = vmatprep.subr.mxu0 0.0
      %1235 = vmatpush1.msra.mxu0 0.0
      %1236 = vmatprep.subr.mxu0 0.0
      %1237 = vmatpush1.msra.mxu0 0.0
      %1238 = vmatprep.subr.mxu0 0.0
      %1239 = vmatpush1.msra.mxu0 0.0
      %1240 = vmatprep.subr.mxu0 0.0
      %1241 = vmatpush1.msra.mxu0 0.0
      %1242 = vmatprep.subr.mxu0 0.0
      %1243 = vmatpush1.msra.mxu0 0.0
      %1244 = vmatprep.subr.mxu0 0.0
      %1245 = vmatpush1.msra.mxu0 0.0
      %1246 = vmatprep.subr.mxu0 0.0
      %1247 = vmatpush1.msra.mxu0 0.0
      %1248 = vmatprep.subr.mxu0 0.0
      %1249 = vmatpush1.msra.mxu0 0.0
      %1250 = vmatprep.subr.mxu0 0.0
      %1251 = vmatpush1.msra.mxu0 0.0
      %1252 = vmatprep.mubr.f32.mxu0 0.0
      %1253 = vmatmul.mubr.f32.gmra.mrb[0].mxu0 %v962
      %v1254 = vpop.f32.mrb[0].mxu0
      %v1255 = vadd.f32 0.0, %v1254
      %v1256 = vpop.f32.mrb[0].mxu0
      %1257 = vdwg.mxu0
      %1258 = vmatprep.subr.mxu0 0.0
      %1259 = vmatpush1.msra.mxu0 %v980
      %1260 = vmatprep.subr.mxu0 0.0
      %1261 = vmatpush1.msra.mxu0 %v981
      %1262 = vmatprep.subr.mxu0 0.0
      %1263 = vmatpush1.msra.mxu0 %v982
      %1264 = vmatprep.subr.mxu0 0.0
      %1265 = vmatpush1.msra.mxu0 %v983
      %1266 = vmatprep.subr.mxu0 0.0
      %1267 = vmatpush1.msra.mxu0 %v984
      %1268 = vmatprep.subr.mxu0 0.0
      %1269 = vmatpush1.msra.mxu0 %v985
      %1270 = vmatprep.subr.mxu0 0.0
      %1271 = vmatpush1.msra.mxu0 %v986
      %1272 = vmatprep.subr.mxu0 0.0
      %1273 = vmatpush1.msra.mxu0 %v987
      %1274 = vmatprep.subr.mxu0 0.0
      %1275 = vmatpush1.msra.mxu0 %v988
      %1276 = vmatprep.subr.mxu0 0.0
      %1277 = vmatpush1.msra.mxu0 %v989
      %1278 = vmatprep.subr.mxu0 0.0
      %1279 = vmatpush1.msra.mxu0 %v990
      %1280 = vmatprep.subr.mxu0 0.0
      %1281 = vmatpush1.msra.mxu0 %v991
      %1282 = vmatprep.subr.mxu0 0.0
      %1283 = vmatpush1.msra.mxu0 %v992
      %1284 = vmatprep.subr.mxu0 0.0
      %1285 = vmatpush1.msra.mxu0 %v993
      %1286 = vmatprep.subr.mxu0 0.0
      %1287 = vmatpush1.msra.mxu0 %v994
      %1288 = vmatprep.subr.mxu0 0.0
      %1289 = vmatpush1.msra.mxu0 %v995
      %1290 = vmatprep.subr.mxu0 0.0
      %1291 = vmatpush1.msra.mxu0 0.0
      %1292 = vmatprep.subr.mxu0 0.0
      %1293 = vmatpush1.msra.mxu0 0.0
      %1294 = vmatprep.subr.mxu0 0.0
      %1295 = vmatpush1.msra.mxu0 0.0
      %1296 = vmatprep.subr.mxu0 0.0
      %1297 = vmatpush1.msra.mxu0 0.0
      %1298 = vmatprep.subr.mxu0 0.0
      %1299 = vmatpush1.msra.mxu0 0.0
      %1300 = vmatprep.subr.mxu0 0.0
      %1301 = vmatpush1.msra.mxu0 0.0
      %1302 = vmatprep.subr.mxu0 0.0
      %1303 = vmatpush1.msra.mxu0 0.0
      %1304 = vmatprep.subr.mxu0 0.0
      %1305 = vmatpush1.msra.mxu0 0.0
      %1306 = vmatprep.subr.mxu0 0.0
      %1307 = vmatpush1.msra.mxu0 0.0
      %1308 = vmatprep.subr.mxu0 0.0
      %1309 = vmatpush1.msra.mxu0 0.0
      %1310 = vmatprep.subr.mxu0 0.0
      %1311 = vmatpush1.msra.mxu0 0.0
      %1312 = vmatprep.subr.mxu0 0.0
      %1313 = vmatpush1.msra.mxu0 0.0
      %1314 = vmatprep.subr.mxu0 0.0
      %1315 = vmatpush1.msra.mxu0 0.0
      %1316 = vmatprep.subr.mxu0 0.0
      %1317 = vmatpush1.msra.mxu0 0.0
      %1318 = vmatprep.subr.mxu0 0.0
      %1319 = vmatpush1.msra.mxu0 0.0
      %1320 = vmatprep.subr.mxu0 0.0
      %1321 = vmatpush1.msra.mxu0 0.0
      %1322 = vmatprep.mubr.f32.mxu0 0.0
      %1323 = vmatmul.mubr.f32.gmra.mrb[0].mxu0 %v962
      %v1324 = vpop.f32.mrb[0].mxu0
      %v1325 = vadd.f32 0.0, %v1324
      %v1326 = vpop.f32.mrb[0].mxu0
      %1327 = vdwg.mxu0
      %1328 = vmatprep.subr.mxu0 0.0
      %1329 = vmatpush1.msra.mxu0 %v996
      %1330 = vmatprep.subr.mxu0 0.0
      %1331 = vmatpush1.msra.mxu0 %v997
      %1332 = vmatprep.subr.mxu0 0.0
      %1333 = vmatpush1.msra.mxu0 %v998
      %1334 = vmatprep.subr.mxu0 0.0
      %1335 = vmatpush1.msra.mxu0 %v999
      %1336 = vmatprep.subr.mxu0 0.0
      %1337 = vmatpush1.msra.mxu0 %v1000
      %1338 = vmatprep.subr.mxu0 0.0
      %1339 = vmatpush1.msra.mxu0 %v1001
      %1340 = vmatprep.subr.mxu0 0.0
      %1341 = vmatpush1.msra.mxu0 %v1002
      %1342 = vmatprep.subr.mxu0 0.0
      %1343 = vmatpush1.msra.mxu0 %v1003
      %1344 = vmatprep.subr.mxu0 0.0
      %1345 = vmatpush1.msra.mxu0 %v1004
      %1346 = vmatprep.subr.mxu0 0.0
      %1347 = vmatpush1.msra.mxu0 %v1005
      %1348 = vmatprep.subr.mxu0 0.0
      %1349 = vmatpush1.msra.mxu0 %v1006
      %1350 = vmatprep.subr.mxu0 0.0
      %1351 = vmatpush1.msra.mxu0 %v1007
      %1352 = vmatprep.subr.mxu0 0.0
      %1353 = vmatpush1.msra.mxu0 %v1008
      %1354 = vmatprep.subr.mxu0 0.0
      %1355 = vmatpush1.msra.mxu0 %v1009
      %1356 = vmatprep.subr.mxu0 0.0
      %1357 = vmatpush1.msra.mxu0 %v1010
      %1358 = vmatprep.subr.mxu0 0.0
      %1359 = vmatpush1.msra.mxu0 %v1011
      %1360 = vmatprep.subr.mxu0 0.0
      %1361 = vmatpush1.msra.mxu0 0.0
      %1362 = vmatprep.subr.mxu0 0.0
      %1363 = vmatpush1.msra.mxu0 0.0
      %1364 = vmatprep.subr.mxu0 0.0
      %1365 = vmatpush1.msra.mxu0 0.0
      %1366 = vmatprep.subr.mxu0 0.0
      %1367 = vmatpush1.msra.mxu0 0.0
      %1368 = vmatprep.subr.mxu0 0.0
      %1369 = vmatpush1.msra.mxu0 0.0
      %1370 = vmatprep.subr.mxu0 0.0
      %1371 = vmatpush1.msra.mxu0 0.0
      %1372 = vmatprep.subr.mxu0 0.0
      %1373 = vmatpush1.msra.mxu0 0.0
      %1374 = vmatprep.subr.mxu0 0.0
      %1375 = vmatpush1.msra.mxu0 0.0
      %1376 = vmatprep.subr.mxu0 0.0
      %1377 = vmatpush1.msra.mxu0 0.0
      %1378 = vmatprep.subr.mxu0 0.0
      %1379 = vmatpush1.msra.mxu0 0.0
      %1380 = vmatprep.subr.mxu0 0.0
      %1381 = vmatpush1.msra.mxu0 0.0
      %1382 = vmatprep.subr.mxu0 0.0
      %1383 = vmatpush1.msra.mxu0 0.0
      %1384 = vmatprep.subr.mxu0 0.0
      %1385 = vmatpush1.msra.mxu0 0.0
      %1386 = vmatprep.subr.mxu0 0.0
      %1387 = vmatpush1.msra.mxu0 0.0
      %1388 = vmatprep.subr.mxu0 0.0
      %1389 = vmatpush1.msra.mxu0 0.0
      %1390 = vmatprep.subr.mxu0 0.0
      %1391 = vmatpush1.msra.mxu0 0.0
      %1392 = vmatprep.mubr.f32.mxu0 0.0
      %1393 = vmatmul.mubr.f32.gmra.mrb[0].mxu0 %v962
      %v1394 = vpop.f32.mrb[0].mxu0
      %v1395 = vadd.f32 0.0, %v1394
      %v1396 = vpop.f32.mrb[0].mxu0
      %1397 = vdwg.mxu0
      %1398 = vmatprep.subr.mxu0 0.0
      %1399 = vmatpush1.msra.mxu0 %v1012
      %1400 = vmatprep.subr.mxu0 0.0
      %1401 = vmatpush1.msra.mxu0 %v1013
      %1402 = vmatprep.subr.mxu0 0.0
      %1403 = vmatpush1.msra.mxu0 %v1014
      %1404 = vmatprep.subr.mxu0 0.0
      %1405 = vmatpush1.msra.mxu0 %v1015
      %1406 = vmatprep.subr.mxu0 0.0
      %1407 = vmatpush1.msra.mxu0 %v1016
      %1408 = vmatprep.subr.mxu0 0.0
      %1409 = vmatpush1.msra.mxu0 %v1017
      %1410 = vmatprep.subr.mxu0 0.0
      %1411 = vmatpush1.msra.mxu0 %v1018
      %1412 = vmatprep.subr.mxu0 0.0
      %1413 = vmatpush1.msra.mxu0 %v1019
      %1414 = vmatprep.subr.mxu0 0.0
      %1415 = vmatpush1.msra.mxu0 %v1020
      %1416 = vmatprep.subr.mxu0 0.0
      %1417 = vmatpush1.msra.mxu0 %v1021
      %1418 = vmatprep.subr.mxu0 0.0
      %1419 = vmatpush1.msra.mxu0 %v1022
      %1420 = vmatprep.subr.mxu0 0.0
      %1421 = vmatpush1.msra.mxu0 %v1023
      %1422 = vmatprep.subr.mxu0 0.0
      %1423 = vmatpush1.msra.mxu0 %v1024
      %1424 = vmatprep.subr.mxu0 0.0
      %1425 = vmatpush1.msra.mxu0 %v1025
      %1426 = vmatprep.subr.mxu0 0.0
      %1427 = vmatpush1.msra.mxu0 %v1026
      %1428 = vmatprep.subr.mxu0 0.0
      %1429 = vmatpush1.msra.mxu0 %v1027
      %1430 = vmatprep.subr.mxu0 0.0
      %1431 = vmatpush1.msra.mxu0 0.0
      %1432 = vmatprep.subr.mxu0 0.0
      %1433 = vmatpush1.msra.mxu0 0.0
      %1434 = vmatprep.subr.mxu0 0.0
      %1435 = vmatpush1.msra.mxu0 0.0
      %1436 = vmatprep.subr.mxu0 0.0
      %1437 = vmatpush1.msra.mxu0 0.0
      %1438 = vmatprep.subr.mxu0 0.0
      %1439 = vmatpush1.msra.mxu0 0.0
      %1440 = vmatprep.subr.mxu0 0.0
      %1441 = vmatpush1.msra.mxu0 0.0
      %1442 = vmatprep.subr.mxu0 0.0
      %1443 = vmatpush1.msra.mxu0 0.0
      %1444 = vmatprep.subr.mxu0 0.0
      %1445 = vmatpush1.msra.mxu0 0.0
      %1446 = vmatprep.subr.mxu0 0.0
      %1447 = vmatpush1.msra.mxu0 0.0
      %1448 = vmatprep.subr.mxu0 0.0
      %1449 = vmatpush1.msra.mxu0 0.0
      %1450 = vmatprep.subr.mxu0 0.0
      %1451 = vmatpush1.msra.mxu0 0.0
      %1452 = vmatprep.subr.mxu0 0.0
      %1453 = vmatpush1.msra.mxu0 0.0
      %1454 = vmatprep.subr.mxu0 0.0
      %1455 = vmatpush1.msra.mxu0 0.0
      %1456 = vmatprep.subr.mxu0 0.0
      %1457 = vmatpush1.msra.mxu0 0.0
      %1458 = vmatprep.subr.mxu0 0.0
      %1459 = vmatpush1.msra.mxu0 0.0
      %1460 = vmatprep.subr.mxu0 0.0
      %1461 = vmatpush1.msra.mxu0 0.0
      %1462 = vmatprep.mubr.f32.mxu0 0.0
      %1463 = vmatmul.mubr.f32.gmra.mrb[0].mxu0 %v962
      %v1464 = vpop.f32.mrb[0].mxu0
      %v1465 = vadd.f32 0.0, %v1464
      %v1466 = vpop.f32.mrb[0].mxu0
      %1467 = vdwg.mxu0
      %1468 = vmatprep.subr.mxu0 0.0
      %1469 = vmatpush1.msra.mxu0 %v1028
      %1470 = vmatprep.subr.mxu0 0.0
      %1471 = vmatpush1.msra.mxu0 %v1029
      %1472 = vmatprep.subr.mxu0 0.0
      %1473 = vmatpush1.msra.mxu0 %v1030
      %1474 = vmatprep.subr.mxu0 0.0
      %1475 = vmatpush1.msra.mxu0 %v1031
      %1476 = vmatprep.subr.mxu0 0.0
      %1477 = vmatpush1.msra.mxu0 %v1032
      %1478 = vmatprep.subr.mxu0 0.0
      %1479 = vmatpush1.msra.mxu0 %v1033
      %1480 = vmatprep.subr.mxu0 0.0
      %1481 = vmatpush1.msra.mxu0 %v1034
      %1482 = vmatprep.subr.mxu0 0.0
      %1483 = vmatpush1.msra.mxu0 %v1035
      %1484 = vmatprep.subr.mxu0 0.0
      %1485 = vmatpush1.msra.mxu0 %v1036
      %1486 = vmatprep.subr.mxu0 0.0
      %1487 = vmatpush1.msra.mxu0 %v1037
      %1488 = vmatprep.subr.mxu0 0.0
      %1489 = vmatpush1.msra.mxu0 %v1038
      %1490 = vmatprep.subr.mxu0 0.0
      %1491 = vmatpush1.msra.mxu0 %v1039
      %1492 = vmatprep.subr.mxu0 0.0
      %1493 = vmatpush1.msra.mxu0 %v1040
      %1494 = vmatprep.subr.mxu0 0.0
      %1495 = vmatpush1.msra.mxu0 %v1041
      %1496 = vmatprep.subr.mxu0 0.0
      %1497 = vmatpush1.msra.mxu0 %v1042
      %1498 = vmatprep.subr.mxu0 0.0
      %1499 = vmatpush1.msra.mxu0 %v1043
      %1500 = vmatprep.subr.mxu0 0.0
      %1501 = vmatpush1.msra.mxu0 0.0
      %1502 = vmatprep.subr.mxu0 0.0
      %1503 = vmatpush1.msra.mxu0 0.0
      %1504 = vmatprep.subr.mxu0 0.0
      %1505 = vmatpush1.msra.mxu0 0.0
      %1506 = vmatprep.subr.mxu0 0.0
      %1507 = vmatpush1.msra.mxu0 0.0
      %1508 = vmatprep.subr.mxu0 0.0
      %1509 = vmatpush1.msra.mxu0 0.0
      %1510 = vmatprep.subr.mxu0 0.0
      %1511 = vmatpush1.msra.mxu0 0.0
      %1512 = vmatprep.subr.mxu0 0.0
      %1513 = vmatpush1.msra.mxu0 0.0
      %1514 = vmatprep.subr.mxu0 0.0
      %1515 = vmatpush1.msra.mxu0 0.0
      %1516 = vmatprep.subr.mxu0 0.0
      %1517 = vmatpush1.msra.mxu0 0.0
      %1518 = vmatprep.subr.mxu0 0.0
      %1519 = vmatpush1.msra.mxu0 0.0
      %1520 = vmatprep.subr.mxu0 0.0
      %1521 = vmatpush1.msra.mxu0 0.0
      %1522 = vmatprep.subr.mxu0 0.0
      %1523 = vmatpush1.msra.mxu0 0.0
      %1524 = vmatprep.subr.mxu0 0.0
      %1525 = vmatpush1.msra.mxu0 0.0
      %1526 = vmatprep.subr.mxu0 0.0
      %1527 = vmatpush1.msra.mxu0 0.0
      %1528 = vmatprep.subr.mxu0 0.0
      %1529 = vmatpush1.msra.mxu0 0.0
      %1530 = vmatprep.subr.mxu0 0.0
      %1531 = vmatpush1.msra.mxu0 0.0
      %1532 = vmatprep.mubr.f32.mxu0 0.0
      %1533 = vmatmul.mubr.f32.gmra.mrb[0].mxu0 %v962
      %v1534 = vpop.f32.mrb[0].mxu0
      %v1535 = vadd.f32 0.0, %v1534
      %v1536 = vpop.f32.mrb[0].mxu0
      %1537 = vdwg.mxu0
      %1538 = vmatprep.subr.mxu0 0.0
      %1539 = vmatpush1.msra.mxu0 %v1044
      %1540 = vmatprep.subr.mxu0 0.0
      %1541 = vmatpush1.msra.mxu0 %v1045
      %1542 = vmatprep.subr.mxu0 0.0
      %1543 = vmatpush1.msra.mxu0 %v1046
      %1544 = vmatprep.subr.mxu0 0.0
      %1545 = vmatpush1.msra.mxu0 %v1047
      %1546 = vmatprep.subr.mxu0 0.0
      %1547 = vmatpush1.msra.mxu0 %v1048
      %1548 = vmatprep.subr.mxu0 0.0
      %1549 = vmatpush1.msra.mxu0 %v1049
      %1550 = vmatprep.subr.mxu0 0.0
      %1551 = vmatpush1.msra.mxu0 %v1050
      %1552 = vmatprep.subr.mxu0 0.0
      %1553 = vmatpush1.msra.mxu0 %v1051
      %1554 = vmatprep.subr.mxu0 0.0
      %1555 = vmatpush1.msra.mxu0 %v1052
      %1556 = vmatprep.subr.mxu0 0.0
      %1557 = vmatpush1.msra.mxu0 %v1053
      %1558 = vmatprep.subr.mxu0 0.0
      %1559 = vmatpush1.msra.mxu0 %v1054
      %1560 = vmatprep.subr.mxu0 0.0
      %1561 = vmatpush1.msra.mxu0 %v1055
      %1562 = vmatprep.subr.mxu0 0.0
      %1563 = vmatpush1.msra.mxu0 %v1056
      %1564 = vmatprep.subr.mxu0 0.0
      %1565 = vmatpush1.msra.mxu0 %v1057
      %1566 = vmatprep.subr.mxu0 0.0
      %1567 = vmatpush1.msra.mxu0 %v1058
      %1568 = vmatprep.subr.mxu0 0.0
      %1569 = vmatpush1.msra.mxu0 %v1059
      %1570 = vmatprep.subr.mxu0 0.0
      %1571 = vmatpush1.msra.mxu0 0.0
      %1572 = vmatprep.subr.mxu0 0.0
      %1573 = vmatpush1.msra.mxu0 0.0
      %1574 = vmatprep.subr.mxu0 0.0
      %1575 = vmatpush1.msra.mxu0 0.0
      %1576 = vmatprep.subr.mxu0 0.0
      %1577 = vmatpush1.msra.mxu0 0.0
      %1578 = vmatprep.subr.mxu0 0.0
      %1579 = vmatpush1.msra.mxu0 0.0
      %1580 = vmatprep.subr.mxu0 0.0
      %1581 = vmatpush1.msra.mxu0 0.0
      %1582 = vmatprep.subr.mxu0 0.0
      %1583 = vmatpush1.msra.mxu0 0.0
      %1584 = vmatprep.subr.mxu0 0.0
      %1585 = vmatpush1.msra.mxu0 0.0
      %1586 = vmatprep.subr.mxu0 0.0
      %1587 = vmatpush1.msra.mxu0 0.0
      %1588 = vmatprep.subr.mxu0 0.0
      %1589 = vmatpush1.msra.mxu0 0.0
      %1590 = vmatprep.subr.mxu0 0.0
      %1591 = vmatpush1.msra.mxu0 0.0
      %1592 = vmatprep.subr.mxu0 0.0
      %1593 = vmatpush1.msra.mxu0 0.0
      %1594 = vmatprep.subr.mxu0 0.0
      %1595 = vmatpush1.msra.mxu0 0.0
      %1596 = vmatprep.subr.mxu0 0.0
      %1597 = vmatpush1.msra.mxu0 0.0
      %1598 = vmatprep.subr.mxu0 0.0
      %1599 = vmatpush1.msra.mxu0 0.0
      %1600 = vmatprep.subr.mxu0 0.0
      %1601 = vmatpush1.msra.mxu0 0.0
      %1602 = vmatprep.mubr.f32.mxu0 0.0
      %1603 = vmatmul.mubr.f32.gmra.mrb[0].mxu0 %v962
      %v1604 = vpop.f32.mrb[0].mxu0
      %v1605 = vadd.f32 0.0, %v1604
      %v1606 = vpop.f32.mrb[0].mxu0
      %1607 = vdwg.mxu0
      %1608 = vmatprep.subr.mxu0 0.0
      %1609 = vmatpush1.msra.mxu0 %v1060
      %1610 = vmatprep.subr.mxu0 0.0
      %1611 = vmatpush1.msra.mxu0 %v1061
      %1612 = vmatprep.subr.mxu0 0.0
      %1613 = vmatpush1.msra.mxu0 %v1062
      %1614 = vmatprep.subr.mxu0 0.0
      %1615 = vmatpush1.msra.mxu0 %v1063
      %1616 = vmatprep.subr.mxu0 0.0
      %1617 = vmatpush1.msra.mxu0 %v1064
      %1618 = vmatprep.subr.mxu0 0.0
      %1619 = vmatpush1.msra.mxu0 %v1065
      %1620 = vmatprep.subr.mxu0 0.0
      %1621 = vmatpush1.msra.mxu0 %v1066
      %1622 = vmatprep.subr.mxu0 0.0
      %1623 = vmatpush1.msra.mxu0 %v1067
      %1624 = vmatprep.subr.mxu0 0.0
      %1625 = vmatpush1.msra.mxu0 %v1068
      %1626 = vmatprep.subr.mxu0 0.0
      %1627 = vmatpush1.msra.mxu0 %v1069
      %1628 = vmatprep.subr.mxu0 0.0
      %1629 = vmatpush1.msra.mxu0 %v1070
      %1630 = vmatprep.subr.mxu0 0.0
      %1631 = vmatpush1.msra.mxu0 %v1071
      %1632 = vmatprep.subr.mxu0 0.0
      %1633 = vmatpush1.msra.mxu0 %v1072
      %1634 = vmatprep.subr.mxu0 0.0
      %1635 = vmatpush1.msra.mxu0 %v1073
      %1636 = vmatprep.subr.mxu0 0.0
      %1637 = vmatpush1.msra.mxu0 %v1074
      %1638 = vmatprep.subr.mxu0 0.0
      %1639 = vmatpush1.msra.mxu0 %v1075
      %1640 = vmatprep.subr.mxu0 0.0
      %1641 = vmatpush1.msra.mxu0 0.0
      %1642 = vmatprep.subr.mxu0 0.0
      %1643 = vmatpush1.msra.mxu0 0.0
      %1644 = vmatprep.subr.mxu0 0.0
      %1645 = vmatpush1.msra.mxu0 0.0
      %1646 = vmatprep.subr.mxu0 0.0
      %1647 = vmatpush1.msra.mxu0 0.0
      %1648 = vmatprep.subr.mxu0 0.0
      %1649 = vmatpush1.msra.mxu0 0.0
      %1650 = vmatprep.subr.mxu0 0.0
      %1651 = vmatpush1.msra.mxu0 0.0
      %1652 = vmatprep.subr.mxu0 0.0
      %1653 = vmatpush1.msra.mxu0 0.0
      %1654 = vmatprep.subr.mxu0 0.0
      %1655 = vmatpush1.msra.mxu0 0.0
      %1656 = vmatprep.subr.mxu0 0.0
      %1657 = vmatpush1.msra.mxu0 0.0
      %1658 = vmatprep.subr.mxu0 0.0
      %1659 = vmatpush1.msra.mxu0 0.0
      %1660 = vmatprep.subr.mxu0 0.0
      %1661 = vmatpush1.msra.mxu0 0.0
      %1662 = vmatprep.subr.mxu0 0.0
      %1663 = vmatpush1.msra.mxu0 0.0
      %1664 = vmatprep.subr.mxu0 0.0
      %1665 = vmatpush1.msra.mxu0 0.0
      %1666 = vmatprep.subr.mxu0 0.0
      %1667 = vmatpush1.msra.mxu0 0.0
      %1668 = vmatprep.subr.mxu0 0.0
      %1669 = vmatpush1.msra.mxu0 0.0
      %1670 = vmatprep.subr.mxu0 0.0
      %1671 = vmatpush1.msra.mxu0 0.0
      %1672 = vmatprep.mubr.f32.mxu0 0.0
      %1673 = vmatmul.mubr.f32.gmra.mrb[0].mxu0 %v962
      %v1674 = vpop.f32.mrb[0].mxu0
      %v1675 = vadd.f32 0.0, %v1674
      %v1676 = vpop.f32.mrb[0].mxu0
      %1677 = vdwg.mxu0
      %1678 = vmatprep.subr.mxu0 0.0
      %1679 = vmatpush1.msra.mxu0 %v1076
      %1680 = vmatprep.subr.mxu0 0.0
      %1681 = vmatpush1.msra.mxu0 %v1077
      %1682 = vmatprep.subr.mxu0 0.0
      %1683 = vmatpush1.msra.mxu0 %v1078
      %1684 = vmatprep.subr.mxu0 0.0
      %1685 = vmatpush1.msra.mxu0 %v1079
      %1686 = vmatprep.subr.mxu0 0.0
      %1687 = vmatpush1.msra.mxu0 %v1080
      %1688 = vmatprep.subr.mxu0 0.0
      %1689 = vmatpush1.msra.mxu0 %v1081
      %1690 = vmatprep.subr.mxu0 0.0
      %1691 = vmatpush1.msra.mxu0 %v1082
      %1692 = vmatprep.subr.mxu0 0.0
      %1693 = vmatpush1.msra.mxu0 %v1083
      %1694 = vmatprep.subr.mxu0 0.0
      %1695 = vmatpush1.msra.mxu0 %v1084
      %1696 = vmatprep.subr.mxu0 0.0
      %1697 = vmatpush1.msra.mxu0 %v1085
      %1698 = vmatprep.subr.mxu0 0.0
      %1699 = vmatpush1.msra.mxu0 %v1086
      %1700 = vmatprep.subr.mxu0 0.0
      %1701 = vmatpush1.msra.mxu0 %v1087
      %1702 = vmatprep.subr.mxu0 0.0
      %1703 = vmatpush1.msra.mxu0 %v1088
      %1704 = vmatprep.subr.mxu0 0.0
      %1705 = vmatpush1.msra.mxu0 %v1089
      %1706 = vmatprep.subr.mxu0 0.0
      %1707 = vmatpush1.msra.mxu0 %v1090
      %1708 = vmatprep.subr.mxu0 0.0
      %1709 = vmatpush1.msra.mxu0 %v1091
      %1710 = vmatprep.subr.mxu0 0.0
      %1711 = vmatpush1.msra.mxu0 0.0
      %1712 = vmatprep.subr.mxu0 0.0
      %1713 = vmatpush1.msra.mxu0 0.0
      %1714 = vmatprep.subr.mxu0 0.0
      %1715 = vmatpush1.msra.mxu0 0.0
      %1716 = vmatprep.subr.mxu0 0.0
      %1717 = vmatpush1.msra.mxu0 0.0
      %1718 = vmatprep.subr.mxu0 0.0
      %1719 = vmatpush1.msra.mxu0 0.0
      %1720 = vmatprep.subr.mxu0 0.0
      %1721 = vmatpush1.msra.mxu0 0.0
      %1722 = vmatprep.subr.mxu0 0.0
      %1723 = vmatpush1.msra.mxu0 0.0
      %1724 = vmatprep.subr.mxu0 0.0
      %1725 = vmatpush1.msra.mxu0 0.0
      %1726 = vmatprep.subr.mxu0 0.0
      %1727 = vmatpush1.msra.mxu0 0.0
      %1728 = vmatprep.subr.mxu0 0.0
      %1729 = vmatpush1.msra.mxu0 0.0
      %1730 = vmatprep.subr.mxu0 0.0
      %1731 = vmatpush1.msra.mxu0 0.0
      %1732 = vmatprep.subr.mxu0 0.0
      %1733 = vmatpush1.msra.mxu0 0.0
      %1734 = vmatprep.subr.mxu0 0.0
      %1735 = vmatpush1.msra.mxu0 0.0
      %1736 = vmatprep.subr.mxu0 0.0
      %1737 = vmatpush1.msra.mxu0 0.0
      %1738 = vmatprep.subr.mxu0 0.0
      %1739 = vmatpush1.msra.mxu0 0.0
      %1740 = vmatprep.subr.mxu0 0.0
      %1741 = vmatpush1.msra.mxu0 0.0
      %1742 = vmatprep.mubr.f32.mxu0 0.0
      %1743 = vmatmul.mubr.f32.gmra.mrb[0].mxu0 %v962
      %v1744 = vpop.f32.mrb[0].mxu0
      %v1745 = vadd.f32 0.0, %v1744
      %v1746 = vpop.f32.mrb[0].mxu0
      %1747 = vdwg.mxu0
      %1748 = vmatprep.subr.mxu0 0.0
      %1749 = vmatpush1.msra.mxu0 %v1092
      %1750 = vmatprep.subr.mxu0 0.0
      %1751 = vmatpush1.msra.mxu0 %v1093
      %1752 = vmatprep.subr.mxu0 0.0
      %1753 = vmatpush1.msra.mxu0 %v1094
      %1754 = vmatprep.subr.mxu0 0.0
      %1755 = vmatpush1.msra.mxu0 %v1095
      %1756 = vmatprep.subr.mxu0 0.0
      %1757 = vmatpush1.msra.mxu0 %v1096
      %1758 = vmatprep.subr.mxu0 0.0
      %1759 = vmatpush1.msra.mxu0 %v1097
      %1760 = vmatprep.subr.mxu0 0.0
      %1761 = vmatpush1.msra.mxu0 %v1098
      %1762 = vmatprep.subr.mxu0 0.0
      %1763 = vmatpush1.msra.mxu0 %v1099
      %1764 = vmatprep.subr.mxu0 0.0
      %1765 = vmatpush1.msra.mxu0 %v1100
      %1766 = vmatprep.subr.mxu0 0.0
      %1767 = vmatpush1.msra.mxu0 %v1101
      %1768 = vmatprep.subr.mxu0 0.0
      %1769 = vmatpush1.msra.mxu0 %v1102
      %1770 = vmatprep.subr.mxu0 0.0
      %1771 = vmatpush1.msra.mxu0 %v1103
      %1772 = vmatprep.subr.mxu0 0.0
      %1773 = vmatpush1.msra.mxu0 %v1104
      %1774 = vmatprep.subr.mxu0 0.0
      %1775 = vmatpush1.msra.mxu0 %v1105
      %1776 = vmatprep.subr.mxu0 0.0
      %1777 = vmatpush1.msra.mxu0 %v1106
      %1778 = vmatprep.subr.mxu0 0.0
      %1779 = vmatpush1.msra.mxu0 %v1107
      %1780 = vmatprep.subr.mxu0 0.0
      %1781 = vmatpush1.msra.mxu0 0.0
      %1782 = vmatprep.subr.mxu0 0.0
      %1783 = vmatpush1.msra.mxu0 0.0
      %1784 = vmatprep.subr.mxu0 0.0
      %1785 = vmatpush1.msra.mxu0 0.0
      %1786 = vmatprep.subr.mxu0 0.0
      %1787 = vmatpush1.msra.mxu0 0.0
      %1788 = vmatprep.subr.mxu0 0.0
      %1789 = vmatpush1.msra.mxu0 0.0
      %1790 = vmatprep.subr.mxu0 0.0
      %1791 = vmatpush1.msra.mxu0 0.0
      %1792 = vmatprep.subr.mxu0 0.0
      %1793 = vmatpush1.msra.mxu0 0.0
      %1794 = vmatprep.subr.mxu0 0.0
      %1795 = vmatpush1.msra.mxu0 0.0
      %1796 = vmatprep.subr.mxu0 0.0
      %1797 = vmatpush1.msra.mxu0 0.0
      %1798 = vmatprep.subr.mxu0 0.0
      %1799 = vmatpush1.msra.mxu0 0.0
      %1800 = vmatprep.subr.mxu0 0.0
      %1801 = vmatpush1.msra.mxu0 0.0
      %1802 = vmatprep.subr.mxu0 0.0
      %1803 = vmatpush1.msra.mxu0 0.0
      %1804 = vmatprep.subr.mxu0 0.0
      %1805 = vmatpush1.msra.mxu0 0.0
      %1806 = vmatprep.subr.mxu0 0.0
      %1807 = vmatpush1.msra.mxu0 0.0
      %1808 = vmatprep.subr.mxu0 0.0
      %1809 = vmatpush1.msra.mxu0 0.0
      %1810 = vmatprep.subr.mxu0 0.0
      %1811 = vmatpush1.msra.mxu0 0.0
      %1812 = vmatprep.mubr.f32.mxu0 0.0
      %1813 = vmatmul.mubr.f32.gmra.mrb[0].mxu0 %v962
      %v1814 = vpop.f32.mrb[0].mxu0
      %v1815 = vadd.f32 0.0, %v1814
      %v1816 = vpop.f32.mrb[0].mxu0
      %1817 = vdwg.mxu0
      %1818 = vmatprep.subr.mxu0 0.0
      %1819 = vmatpush1.msra.mxu0 %v1108
      %1820 = vmatprep.subr.mxu0 0.0
      %1821 = vmatpush1.msra.mxu0 %v1109
      %1822 = vmatprep.subr.mxu0 0.0
      %1823 = vmatpush1.msra.mxu0 %v1110
      %1824 = vmatprep.subr.mxu0 0.0
      %1825 = vmatpush1.msra.mxu0 %v1111
      %1826 = vmatprep.subr.mxu0 0.0
      %1827 = vmatpush1.msra.mxu0 %v1112
      %1828 = vmatprep.subr.mxu0 0.0
      %1829 = vmatpush1.msra.mxu0 %v1113
      %1830 = vmatprep.subr.mxu0 0.0
      %1831 = vmatpush1.msra.mxu0 %v1114
      %1832 = vmatprep.subr.mxu0 0.0
      %1833 = vmatpush1.msra.mxu0 %v1115
      %1834 = vmatprep.subr.mxu0 0.0
      %1835 = vmatpush1.msra.mxu0 %v1116
      %1836 = vmatprep.subr.mxu0 0.0
      %1837 = vmatpush1.msra.mxu0 %v1117
      %1838 = vmatprep.subr.mxu0 0.0
      %1839 = vmatpush1.msra.mxu0 %v1118
      %1840 = vmatprep.subr.mxu0 0.0
      %1841 = vmatpush1.msra.mxu0 %v1119
      %1842 = vmatprep.subr.mxu0 0.0
      %1843 = vmatpush1.msra.mxu0 %v1120
      %1844 = vmatprep.subr.mxu0 0.0
      %1845 = vmatpush1.msra.mxu0 %v1121
      %1846 = vmatprep.subr.mxu0 0.0
      %1847 = vmatpush1.msra.mxu0 %v1122
      %1848 = vmatprep.subr.mxu0 0.0
      %1849 = vmatpush1.msra.mxu0 %v1123
      %1850 = vmatprep.subr.mxu0 0.0
      %1851 = vmatpush1.msra.mxu0 0.0
      %1852 = vmatprep.subr.mxu0 0.0
      %1853 = vmatpush1.msra.mxu0 0.0
      %1854 = vmatprep.subr.mxu0 0.0
      %1855 = vmatpush1.msra.mxu0 0.0
      %1856 = vmatprep.subr.mxu0 0.0
      %1857 = vmatpush1.msra.mxu0 0.0
      %1858 = vmatprep.subr.mxu0 0.0
      %1859 = vmatpush1.msra.mxu0 0.0
      %1860 = vmatprep.subr.mxu0 0.0
      %1861 = vmatpush1.msra.mxu0 0.0
      %1862 = vmatprep.subr.mxu0 0.0
      %1863 = vmatpush1.msra.mxu0 0.0
      %1864 = vmatprep.subr.mxu0 0.0
      %1865 = vmatpush1.msra.mxu0 0.0
      %1866 = vmatprep.subr.mxu0 0.0
      %1867 = vmatpush1.msra.mxu0 0.0
      %1868 = vmatprep.subr.mxu0 0.0
      %1869 = vmatpush1.msra.mxu0 0.0
      %1870 = vmatprep.subr.mxu0 0.0
      %1871 = vmatpush1.msra.mxu0 0.0
      %1872 = vmatprep.subr.mxu0 0.0
      %1873 = vmatpush1.msra.mxu0 0.0
      %1874 = vmatprep.subr.mxu0 0.0
      %1875 = vmatpush1.msra.mxu0 0.0
      %1876 = vmatprep.subr.mxu0 0.0
      %1877 = vmatpush1.msra.mxu0 0.0
      %1878 = vmatprep.subr.mxu0 0.0
      %1879 = vmatpush1.msra.mxu0 0.0
      %1880 = vmatprep.subr.mxu0 0.0
      %1881 = vmatpush1.msra.mxu0 0.0
      %1882 = vmatprep.mubr.f32.mxu0 0.0
      %1883 = vmatmul.mubr.f32.gmra.mrb[0].mxu0 %v962
      %v1884 = vpop.f32.mrb[0].mxu0
      %v1885 = vadd.f32 0.0, %v1884
      %v1886 = vpop.f32.mrb[0].mxu0
      %1887 = vdwg.mxu0
      %1888 = vmatprep.subr.mxu0 0.0
      %1889 = vmatpush1.msra.mxu0 %v1124
      %1890 = vmatprep.subr.mxu0 0.0
      %1891 = vmatpush1.msra.mxu0 %v1125
      %1892 = vmatprep.subr.mxu0 0.0
      %1893 = vmatpush1.msra.mxu0 %v1126
      %1894 = vmatprep.subr.mxu0 0.0
      %1895 = vmatpush1.msra.mxu0 %v1127
      %1896 = vmatprep.subr.mxu0 0.0
      %1897 = vmatpush1.msra.mxu0 %v1128
      %1898 = vmatprep.subr.mxu0 0.0
      %1899 = vmatpush1.msra.mxu0 %v1129
      %1900 = vmatprep.subr.mxu0 0.0
      %1901 = vmatpush1.msra.mxu0 %v1130
      %1902 = vmatprep.subr.mxu0 0.0
      %1903 = vmatpush1.msra.mxu0 %v1131
      %1904 = vmatprep.subr.mxu0 0.0
      %1905 = vmatpush1.msra.mxu0 %v1132
      %1906 = vmatprep.subr.mxu0 0.0
      %1907 = vmatpush1.msra.mxu0 %v1133
      %1908 = vmatprep.subr.mxu0 0.0
      %1909 = vmatpush1.msra.mxu0 %v1134
      %1910 = vmatprep.subr.mxu0 0.0
      %1911 = vmatpush1.msra.mxu0 %v1135
      %1912 = vmatprep.subr.mxu0 0.0
      %1913 = vmatpush1.msra.mxu0 %v1136
      %1914 = vmatprep.subr.mxu0 0.0
      %1915 = vmatpush1.msra.mxu0 %v1137
      %1916 = vmatprep.subr.mxu0 0.0
      %1917 = vmatpush1.msra.mxu0 %v1138
      %1918 = vmatprep.subr.mxu0 0.0
      %1919 = vmatpush1.msra.mxu0 %v1139
      %1920 = vmatprep.subr.mxu0 0.0
      %1921 = vmatpush1.msra.mxu0 0.0
      %1922 = vmatprep.subr.mxu0 0.0
      %1923 = vmatpush1.msra.mxu0 0.0
      %1924 = vmatprep.subr.mxu0 0.0
      %1925 = vmatpush1.msra.mxu0 0.0
      %1926 = vmatprep.subr.mxu0 0.0
      %1927 = vmatpush1.msra.mxu0 0.0
      %1928 = vmatprep.subr.mxu0 0.0
      %1929 = vmatpush1.msra.mxu0 0.0
      %1930 = vmatprep.subr.mxu0 0.0
      %1931 = vmatpush1.msra.mxu0 0.0
      %1932 = vmatprep.subr.mxu0 0.0
      %1933 = vmatpush1.msra.mxu0 0.0
      %1934 = vmatprep.subr.mxu0 0.0
      %1935 = vmatpush1.msra.mxu0 0.0
      %1936 = vmatprep.subr.mxu0 0.0
      %1937 = vmatpush1.msra.mxu0 0.0
      %1938 = vmatprep.subr.mxu0 0.0
      %1939 = vmatpush1.msra.mxu0 0.0
      %1940 = vmatprep.subr.mxu0 0.0
      %1941 = vmatpush1.msra.mxu0 0.0
      %1942 = vmatprep.subr.mxu0 0.0
      %1943 = vmatpush1.msra.mxu0 0.0
      %1944 = vmatprep.subr.mxu0 0.0
      %1945 = vmatpush1.msra.mxu0 0.0
      %1946 = vmatprep.subr.mxu0 0.0
      %1947 = vmatpush1.msra.mxu0 0.0
      %1948 = vmatprep.subr.mxu0 0.0
      %1949 = vmatpush1.msra.mxu0 0.0
      %1950 = vmatprep.subr.mxu0 0.0
      %1951 = vmatpush1.msra.mxu0 0.0
      %1952 = vmatprep.mubr.f32.mxu0 0.0
      %1953 = vmatmul.mubr.f32.gmra.mrb[0].mxu0 %v962
      %v1954 = vpop.f32.mrb[0].mxu0
      %v1955 = vadd.f32 0.0, %v1954
      %v1956 = vpop.f32.mrb[0].mxu0
      %1957 = vdwg.mxu0
      %1958 = vmatprep.subr.mxu0 0.0
      %1959 = vmatpush1.msra.mxu0 %v1140
      %1960 = vmatprep.subr.mxu0 0.0
      %1961 = vmatpush1.msra.mxu0 %v1141
      %1962 = vmatprep.subr.mxu0 0.0
      %1963 = vmatpush1.msra.mxu0 %v1142
      %1964 = vmatprep.subr.mxu0 0.0
      %1965 = vmatpush1.msra.mxu0 %v1143
      %1966 = vmatprep.subr.mxu0 0.0
      %1967 = vmatpush1.msra.mxu0 %v1144
      %1968 = vmatprep.subr.mxu0 0.0
      %1969 = vmatpush1.msra.mxu0 %v1145
      %1970 = vmatprep.subr.mxu0 0.0
      %1971 = vmatpush1.msra.mxu0 %v1146
      %1972 = vmatprep.subr.mxu0 0.0
      %1973 = vmatpush1.msra.mxu0 %v1147
      %1974 = vmatprep.subr.mxu0 0.0
      %1975 = vmatpush1.msra.mxu0 %v1148
      %1976 = vmatprep.subr.mxu0 0.0
      %1977 = vmatpush1.msra.mxu0 %v1149
      %1978 = vmatprep.subr.mxu0 0.0
      %1979 = vmatpush1.msra.mxu0 %v1150
      %1980 = vmatprep.subr.mxu0 0.0
      %1981 = vmatpush1.msra.mxu0 %v1151
      %1982 = vmatprep.subr.mxu0 0.0
      %1983 = vmatpush1.msra.mxu0 %v1152
      %1984 = vmatprep.subr.mxu0 0.0
      %1985 = vmatpush1.msra.mxu0 %v1153
      %1986 = vmatprep.subr.mxu0 0.0
      %1987 = vmatpush1.msra.mxu0 %v1154
      %1988 = vmatprep.subr.mxu0 0.0
      %1989 = vmatpush1.msra.mxu0 %v1155
      %1990 = vmatprep.subr.mxu0 0.0
      %1991 = vmatpush1.msra.mxu0 0.0
      %1992 = vmatprep.subr.mxu0 0.0
      %1993 = vmatpush1.msra.mxu0 0.0
      %1994 = vmatprep.subr.mxu0 0.0
      %1995 = vmatpush1.msra.mxu0 0.0
      %1996 = vmatprep.subr.mxu0 0.0
      %1997 = vmatpush1.msra.mxu0 0.0
      %1998 = vmatprep.subr.mxu0 0.0
      %1999 = vmatpush1.msra.mxu0 0.0
      %2000 = vmatprep.subr.mxu0 0.0
      %2001 = vmatpush1.msra.mxu0 0.0
      %2002 = vmatprep.subr.mxu0 0.0
      %2003 = vmatpush1.msra.mxu0 0.0
      %2004 = vmatprep.subr.mxu0 0.0
      %2005 = vmatpush1.msra.mxu0 0.0
      %2006 = vmatprep.subr.mxu0 0.0
      %2007 = vmatpush1.msra.mxu0 0.0
      %2008 = vmatprep.subr.mxu0 0.0
      %2009 = vmatpush1.msra.mxu0 0.0
      %2010 = vmatprep.subr.mxu0 0.0
      %2011 = vmatpush1.msra.mxu0 0.0
      %2012 = vmatprep.subr.mxu0 0.0
      %2013 = vmatpush1.msra.mxu0 0.0
      %2014 = vmatprep.subr.mxu0 0.0
      %2015 = vmatpush1.msra.mxu0 0.0
      %2016 = vmatprep.subr.mxu0 0.0
      %2017 = vmatpush1.msra.mxu0 0.0
      %2018 = vmatprep.subr.mxu0 0.0
      %2019 = vmatpush1.msra.mxu0 0.0
      %2020 = vmatprep.subr.mxu0 0.0
      %2021 = vmatpush1.msra.mxu0 0.0
      %2022 = vmatprep.mubr.f32.mxu0 0.0
      %2023 = vmatmul.mubr.f32.gmra.mrb[0].mxu0 %v962
      %v2024 = vpop.f32.mrb[0].mxu0
      %v2025 = vadd.f32 0.0, %v2024
      %v2026 = vpop.f32.mrb[0].mxu0
      %2027 = vdwg.mxu0
      %vm2028 = vcmask 523264
      %v2030 = vsel %vm2028, %v1255, 0
      %v2033 = vsel %vm2028, %v1535, 0
      %2035 = vmatprep.subr.mxu0 0.0
      %2036 = vmatpush1.xpose.msra.mxu0 %v2033
      %2037 = vmatprep.subr.mxu0 0.0
      %2038 = vmatpush1.xpose.msra.mxu0 0.0
      %2039 = vmatprep.subr.mxu0 0.0
      %2040 = vmatpush1.xpose.msra.mxu0 0.0
      %2041 = vmatprep.subr.mxu0 0.0
      %2042 = vmatpush1.xpose.msra.mxu0 0.0
      %2043 = vmatprep.subr.mxu0 0.0
      %2044 = vmatpush1.xpose.msra.mxu0 0.0
      %2045 = vmatprep.subr.mxu0 0.0
      %2046 = vmatpush1.xpose.msra.mxu0 0.0
      %2047 = vmatprep.subr.mxu0 0.0
      %2048 = vmatpush1.xpose.msra.mxu0 0.0
      %2049 = vmatprep.subr.mxu0 0.0
      %2050 = vmatpush1.xpose.msra.mxu0 0.0
      %2051 = vmatprep.subr.mxu0 0.0
      %2052 = vmatpush1.xpose.msra.mxu0 0.0
      %2053 = vmatprep.subr.mxu0 0.0
      %2054 = vmatpush1.xpose.msra.mxu0 0.0
      %2055 = vmatprep.subr.mxu0 0.0
      %2056 = vmatpush1.xpose.msra.mxu0 0.0
      %2057 = vmatprep.subr.mxu0 0.0
      %2058 = vmatpush1.xpose.msra.mxu0 0.0
      %2059 = vmatprep.subr.mxu0 0.0
      %2060 = vmatpush1.xpose.msra.mxu0 0.0
      %2061 = vmatprep.subr.mxu0 0.0
      %2062 = vmatpush1.xpose.msra.mxu0 0.0
      %2063 = vmatprep.subr.mxu0 0.0
      %2064 = vmatpush1.xpose.msra.mxu0 0.0
      %2065 = vmatprep.subr.mxu0 0.0
      %2066 = vmatpush1.xpose.msra.mxu0 0.0
      %2067 = vmatprep.subr.mxu0 0.0
      %2068 = vmatpush1.xpose.msra.mxu0 0.0
      %2069 = vmatprep.subr.mxu0 0.0
      %2070 = vmatpush1.xpose.msra.mxu0 0.0
      %2071 = vmatprep.subr.mxu0 0.0
      %2072 = vmatpush1.xpose.msra.mxu0 0.0
      %2073 = vmatprep.subr.mxu0 0.0
      %2074 = vmatpush1.xpose.msra.mxu0 0.0
      %2075 = vmatprep.subr.mxu0 0.0
      %2076 = vmatpush1.xpose.msra.mxu0 0.0
      %2077 = vmatprep.subr.mxu0 0.0
      %2078 = vmatpush1.xpose.msra.mxu0 0.0
      %2079 = vmatprep.subr.mxu0 0.0
      %2080 = vmatpush1.xpose.msra.mxu0 0.0
      %2081 = vmatprep.subr.mxu0 0.0
      %2082 = vmatpush1.xpose.msra.mxu0 0.0
      %2083 = vmatprep.subr.mxu0 0.0
      %2084 = vmatpush1.xpose.msra.mxu0 0.0
      %2085 = vmatprep.subr.mxu0 0.0
      %2086 = vmatpush1.xpose.msra.mxu0 0.0
      %2087 = vmatprep.subr.mxu0 0.0
      %2088 = vmatpush1.xpose.msra.mxu0 0.0
      %2089 = vmatprep.subr.mxu0 0.0
      %2090 = vmatpush1.xpose.msra.mxu0 0.0
      %2091 = vmatprep.subr.mxu0 0.0
      %2092 = vmatpush1.xpose.msra.mxu0 0.0
      %2093 = vmatprep.subr.mxu0 0.0
      %2094 = vmatpush1.xpose.msra.mxu0 0.0
      %2095 = vmatprep.subr.mxu0 0.0
      %2096 = vmatpush1.xpose.msra.mxu0 0.0
      %2097 = vmatprep.subr.mxu0 0.0
      %2098 = vmatpush1.xpose.msra.mxu0 0.0
      %2099 = vmatprep.mubr.f32.mxu0 0.0
      %2100 = vmatmul.mubr.f32.gmra.mrb[0].mxu0 %v2030
      %v2101 = vpop.f32.mrb[0].mxu0
      %v2102 = vadd.f32 0.0, %v2101
      %v2103 = vpop.f32.mrb[0].mxu0
      %2104 = vdwg.mxu0
      %v2106 = vsel %vm2028, %v1325, 0
      %v2109 = vsel %vm2028, %v1605, 0
      %2111 = vmatprep.subr.mxu0 0.0
      %2112 = vmatpush1.xpose.msra.mxu0 %v2109
      %2113 = vmatprep.subr.mxu0 0.0
      %2114 = vmatpush1.xpose.msra.mxu0 0.0
      %2115 = vmatprep.subr.mxu0 0.0
      %2116 = vmatpush1.xpose.msra.mxu0 0.0
      %2117 = vmatprep.subr.mxu0 0.0
      %2118 = vmatpush1.xpose.msra.mxu0 0.0
      %2119 = vmatprep.subr.mxu0 0.0
      %2120 = vmatpush1.xpose.msra.mxu0 0.0
      %2121 = vmatprep.subr.mxu0 0.0
      %2122 = vmatpush1.xpose.msra.mxu0 0.0
      %2123 = vmatprep.subr.mxu0 0.0
      %2124 = vmatpush1.xpose.msra.mxu0 0.0
      %2125 = vmatprep.subr.mxu0 0.0
      %2126 = vmatpush1.xpose.msra.mxu0 0.0
      %2127 = vmatprep.subr.mxu0 0.0
      %2128 = vmatpush1.xpose.msra.mxu0 0.0
      %2129 = vmatprep.subr.mxu0 0.0
      %2130 = vmatpush1.xpose.msra.mxu0 0.0
      %2131 = vmatprep.subr.mxu0 0.0
      %2132 = vmatpush1.xpose.msra.mxu0 0.0
      %2133 = vmatprep.subr.mxu0 0.0
      %2134 = vmatpush1.xpose.msra.mxu0 0.0
      %2135 = vmatprep.subr.mxu0 0.0
      %2136 = vmatpush1.xpose.msra.mxu0 0.0
      %2137 = vmatprep.subr.mxu0 0.0
      %2138 = vmatpush1.xpose.msra.mxu0 0.0
      %2139 = vmatprep.subr.mxu0 0.0
      %2140 = vmatpush1.xpose.msra.mxu0 0.0
      %2141 = vmatprep.subr.mxu0 0.0
      %2142 = vmatpush1.xpose.msra.mxu0 0.0
      %2143 = vmatprep.subr.mxu0 0.0
      %2144 = vmatpush1.xpose.msra.mxu0 0.0
      %2145 = vmatprep.subr.mxu0 0.0
      %2146 = vmatpush1.xpose.msra.mxu0 0.0
      %2147 = vmatprep.subr.mxu0 0.0
      %2148 = vmatpush1.xpose.msra.mxu0 0.0
      %2149 = vmatprep.subr.mxu0 0.0
      %2150 = vmatpush1.xpose.msra.mxu0 0.0
      %2151 = vmatprep.subr.mxu0 0.0
      %2152 = vmatpush1.xpose.msra.mxu0 0.0
      %2153 = vmatprep.subr.mxu0 0.0
      %2154 = vmatpush1.xpose.msra.mxu0 0.0
      %2155 = vmatprep.subr.mxu0 0.0
      %2156 = vmatpush1.xpose.msra.mxu0 0.0
      %2157 = vmatprep.subr.mxu0 0.0
      %2158 = vmatpush1.xpose.msra.mxu0 0.0
      %2159 = vmatprep.subr.mxu0 0.0
      %2160 = vmatpush1.xpose.msra.mxu0 0.0
      %2161 = vmatprep.subr.mxu0 0.0
      %2162 = vmatpush1.xpose.msra.mxu0 0.0
      %2163 = vmatprep.subr.mxu0 0.0
      %2164 = vmatpush1.xpose.msra.mxu0 0.0
      %2165 = vmatprep.subr.mxu0 0.0
      %2166 = vmatpush1.xpose.msra.mxu0 0.0
      %2167 = vmatprep.subr.mxu0 0.0
      %2168 = vmatpush1.xpose.msra.mxu0 0.0
      %2169 = vmatprep.subr.mxu0 0.0
      %2170 = vmatpush1.xpose.msra.mxu0 0.0
      %2171 = vmatprep.subr.mxu0 0.0
      %2172 = vmatpush1.xpose.msra.mxu0 0.0
      %2173 = vmatprep.subr.mxu0 0.0
      %2174 = vmatpush1.xpose.msra.mxu0 0.0
      %2175 = vmatprep.mubr.f32.mxu0 0.0
      %2176 = vmatmul.mubr.f32.gmra.mrb[0].mxu0 %v2106
      %v2177 = vpop.f32.mrb[0].mxu0
      %v2178 = vadd.f32 0.0, %v2177
      %v2179 = vpop.f32.mrb[0].mxu0
      %2180 = vdwg.mxu0
      %v2182 = vsel %vm2028, %v1395, 0
      %v2185 = vsel %vm2028, %v1675, 0
      %2187 = vmatprep.subr.mxu0 0.0
      %2188 = vmatpush1.xpose.msra.mxu0 %v2185
      %2189 = vmatprep.subr.mxu0 0.0
      %2190 = vmatpush1.xpose.msra.mxu0 0.0
      %2191 = vmatprep.subr.mxu0 0.0
      %2192 = vmatpush1.xpose.msra.mxu0 0.0
      %2193 = vmatprep.subr.mxu0 0.0
      %2194 = vmatpush1.xpose.msra.mxu0 0.0
      %2195 = vmatprep.subr.mxu0 0.0
      %2196 = vmatpush1.xpose.msra.mxu0 0.0
      %2197 = vmatprep.subr.mxu0 0.0
      %2198 = vmatpush1.xpose.msra.mxu0 0.0
      %2199 = vmatprep.subr.mxu0 0.0
      %2200 = vmatpush1.xpose.msra.mxu0 0.0
      %2201 = vmatprep.subr.mxu0 0.0
      %2202 = vmatpush1.xpose.msra.mxu0 0.0
      %2203 = vmatprep.subr.mxu0 0.0
      %2204 = vmatpush1.xpose.msra.mxu0 0.0
      %2205 = vmatprep.subr.mxu0 0.0
      %2206 = vmatpush1.xpose.msra.mxu0 0.0
      %2207 = vmatprep.subr.mxu0 0.0
      %2208 = vmatpush1.xpose.msra.mxu0 0.0
      %2209 = vmatprep.subr.mxu0 0.0
      %2210 = vmatpush1.xpose.msra.mxu0 0.0
      %2211 = vmatprep.subr.mxu0 0.0
      %2212 = vmatpush1.xpose.msra.mxu0 0.0
      %2213 = vmatprep.subr.mxu0 0.0
      %2214 = vmatpush1.xpose.msra.mxu0 0.0
      %2215 = vmatprep.subr.mxu0 0.0
      %2216 = vmatpush1.xpose.msra.mxu0 0.0
      %2217 = vmatprep.subr.mxu0 0.0
      %2218 = vmatpush1.xpose.msra.mxu0 0.0
      %2219 = vmatprep.subr.mxu0 0.0
      %2220 = vmatpush1.xpose.msra.mxu0 0.0
      %2221 = vmatprep.subr.mxu0 0.0
      %2222 = vmatpush1.xpose.msra.mxu0 0.0
      %2223 = vmatprep.subr.mxu0 0.0
      %2224 = vmatpush1.xpose.msra.mxu0 0.0
      %2225 = vmatprep.subr.mxu0 0.0
      %2226 = vmatpush1.xpose.msra.mxu0 0.0
      %2227 = vmatprep.subr.mxu0 0.0
      %2228 = vmatpush1.xpose.msra.mxu0 0.0
      %2229 = vmatprep.subr.mxu0 0.0
      %2230 = vmatpush1.xpose.msra.mxu0 0.0
      %2231 = vmatprep.subr.mxu0 0.0
      %2232 = vmatpush1.xpose.msra.mxu0 0.0
      %2233 = vmatprep.subr.mxu0 0.0
      %2234 = vmatpush1.xpose.msra.mxu0 0.0
      %2235 = vmatprep.subr.mxu0 0.0
      %2236 = vmatpush1.xpose.msra.mxu0 0.0
      %2237 = vmatprep.subr.mxu0 0.0
      %2238 = vmatpush1.xpose.msra.mxu0 0.0
      %2239 = vmatprep.subr.mxu0 0.0
      %2240 = vmatpush1.xpose.msra.mxu0 0.0
      %2241 = vmatprep.subr.mxu0 0.0
      %2242 = vmatpush1.xpose.msra.mxu0 0.0
      %2243 = vmatprep.subr.mxu0 0.0
      %2244 = vmatpush1.xpose.msra.mxu0 0.0
      %2245 = vmatprep.subr.mxu0 0.0
      %2246 = vmatpush1.xpose.msra.mxu0 0.0
      %2247 = vmatprep.subr.mxu0 0.0
      %2248 = vmatpush1.xpose.msra.mxu0 0.0
      %2249 = vmatprep.subr.mxu0 0.0
      %2250 = vmatpush1.xpose.msra.mxu0 0.0
      %2251 = vmatprep.mubr.f32.mxu0 0.0
      %2252 = vmatmul.mubr.f32.gmra.mrb[0].mxu0 %v2182
      %v2253 = vpop.f32.mrb[0].mxu0
      %v2254 = vadd.f32 0.0, %v2253
      %v2255 = vpop.f32.mrb[0].mxu0
      %2256 = vdwg.mxu0
      %v2258 = vsel %vm2028, %v1465, 0
      %v2261 = vsel %vm2028, %v1745, 0
      %2263 = vmatprep.subr.mxu0 0.0
      %2264 = vmatpush1.xpose.msra.mxu0 %v2261
      %2265 = vmatprep.subr.mxu0 0.0
      %2266 = vmatpush1.xpose.msra.mxu0 0.0
      %2267 = vmatprep.subr.mxu0 0.0
      %2268 = vmatpush1.xpose.msra.mxu0 0.0
      %2269 = vmatprep.subr.mxu0 0.0
      %2270 = vmatpush1.xpose.msra.mxu0 0.0
      %2271 = vmatprep.subr.mxu0 0.0
      %2272 = vmatpush1.xpose.msra.mxu0 0.0
      %2273 = vmatprep.subr.mxu0 0.0
      %2274 = vmatpush1.xpose.msra.mxu0 0.0
      %2275 = vmatprep.subr.mxu0 0.0
      %2276 = vmatpush1.xpose.msra.mxu0 0.0
      %2277 = vmatprep.subr.mxu0 0.0
      %2278 = vmatpush1.xpose.msra.mxu0 0.0
      %2279 = vmatprep.subr.mxu0 0.0
      %2280 = vmatpush1.xpose.msra.mxu0 0.0
      %2281 = vmatprep.subr.mxu0 0.0
      %2282 = vmatpush1.xpose.msra.mxu0 0.0
      %2283 = vmatprep.subr.mxu0 0.0
      %2284 = vmatpush1.xpose.msra.mxu0 0.0
      %2285 = vmatprep.subr.mxu0 0.0
      %2286 = vmatpush1.xpose.msra.mxu0 0.0
      %2287 = vmatprep.subr.mxu0 0.0
      %2288 = vmatpush1.xpose.msra.mxu0 0.0
      %2289 = vmatprep.subr.mxu0 0.0
      %2290 = vmatpush1.xpose.msra.mxu0 0.0
      %2291 = vmatprep.subr.mxu0 0.0
      %2292 = vmatpush1.xpose.msra.mxu0 0.0
      %2293 = vmatprep.subr.mxu0 0.0
      %2294 = vmatpush1.xpose.msra.mxu0 0.0
      %2295 = vmatprep.subr.mxu0 0.0
      %2296 = vmatpush1.xpose.msra.mxu0 0.0
      %2297 = vmatprep.subr.mxu0 0.0
      %2298 = vmatpush1.xpose.msra.mxu0 0.0
      %2299 = vmatprep.subr.mxu0 0.0
      %2300 = vmatpush1.xpose.msra.mxu0 0.0
      %2301 = vmatprep.subr.mxu0 0.0
      %2302 = vmatpush1.xpose.msra.mxu0 0.0
      %2303 = vmatprep.subr.mxu0 0.0
      %2304 = vmatpush1.xpose.msra.mxu0 0.0
      %2305 = vmatprep.subr.mxu0 0.0
      %2306 = vmatpush1.xpose.msra.mxu0 0.0
      %2307 = vmatprep.subr.mxu0 0.0
      %2308 = vmatpush1.xpose.msra.mxu0 0.0
      %2309 = vmatprep.subr.mxu0 0.0
      %2310 = vmatpush1.xpose.msra.mxu0 0.0
      %2311 = vmatprep.subr.mxu0 0.0
      %2312 = vmatpush1.xpose.msra.mxu0 0.0
      %2313 = vmatprep.subr.mxu0 0.0
      %2314 = vmatpush1.xpose.msra.mxu0 0.0
      %2315 = vmatprep.subr.mxu0 0.0
      %2316 = vmatpush1.xpose.msra.mxu0 0.0
      %2317 = vmatprep.subr.mxu0 0.0
      %2318 = vmatpush1.xpose.msra.mxu0 0.0
      %2319 = vmatprep.subr.mxu0 0.0
      %2320 = vmatpush1.xpose.msra.mxu0 0.0
      %2321 = vmatprep.subr.mxu0 0.0
      %2322 = vmatpush1.xpose.msra.mxu0 0.0
      %2323 = vmatprep.subr.mxu0 0.0
      %2324 = vmatpush1.xpose.msra.mxu0 0.0
      %2325 = vmatprep.subr.mxu0 0.0
      %2326 = vmatpush1.xpose.msra.mxu0 0.0
      %2327 = vmatprep.mubr.f32.mxu0 0.0
      %2328 = vmatmul.mubr.f32.gmra.mrb[0].mxu0 %v2258
      %v2329 = vpop.f32.mrb[0].mxu0
      %v2330 = vadd.f32 0.0, %v2329
      %v2331 = vpop.f32.mrb[0].mxu0
      %2332 = vdwg.mxu0
      %v2333 = vmul.f32 %v2102, 0.125
      %v2334 = vmul.f32 %v2178, 0.125
      %v2335 = vmul.f32 %v2254, 0.125
      %v2336 = vmul.f32 %v2330, 0.125
      %vm2337 = vcmask 64512
      %v2338 = vsel %vm2337, %v2333, -inf
      %2339 = vmax.xlane.f32.xlu0 %v2338
      %v2340 = vpop.xlane.xlu0 %2339
      %v2341 = vsel %vm2337, %v2334, -inf
      %2342 = vmax.xlane.f32.xlu0 %v2341
      %v2343 = vpop.xlane.xlu0 %2342
      %v2344 = vsel %vm2337, %v2335, -inf
      %2345 = vmax.xlane.f32.xlu0 %v2344
      %v2346 = vpop.xlane.xlu0 %2345
      %v2347 = vsel %vm2337, %v2336, -inf
      %2348 = vmax.xlane.f32.xlu0 %v2347
      %v2349 = vpop.xlane.xlu0 %2348
      %v2350 = vsub.f32 %v2333, %v2340
      %v2351 = vsub.f32 %v2334, %v2343
      %v2352 = vsub.f32 %v2335, %v2346
      %v2353 = vsub.f32 %v2336, %v2349
      %v2354 = vmul.f32 %v2350, 1.442695
      %v2355 = vpow.pop %v2354
      %v2356 = vmul.f32 %v2351, 1.442695
      %v2357 = vpow.pop %v2356
      %v2358 = vmul.f32 %v2352, 1.442695
      %v2359 = vpow.pop %v2358
      %v2360 = vmul.f32 %v2353, 1.442695
      %v2361 = vpow.pop %v2360
      %v2362 = vsel %vm2337, %v2355, 0.0
      %2363 = vadd.xlane.f32.xlu0 %v2362
      %v2364 = vpop.xlane.xlu0 %2363
      %v2365 = vsel %vm2337, %v2357, 0.0
      %2366 = vadd.xlane.f32.xlu0 %v2365
      %v2367 = vpop.xlane.xlu0 %2366
      %v2368 = vsel %vm2337, %v2359, 0.0
      %2369 = vadd.xlane.f32.xlu0 %v2368
      %v2370 = vpop.xlane.xlu0 %2369
      %v2371 = vsel %vm2337, %v2361, 0.0
      %2372 = vadd.xlane.f32.xlu0 %v2371
      %v2373 = vpop.xlane.xlu0 %2372
      %v2374 = vrcp.pop %v2364
      %v2375 = vrcp.pop %v2367
      %v2376 = vrcp.pop %v2370
      %v2377 = vrcp.pop %v2373
      %v2378 = vmul.f32 %v2355, %v2374
      %v2379 = vmul.f32 %v2357, %v2375
      %v2380 = vmul.f32 %v2359, %v2376
      %v2381 = vmul.f32 %v2361, %v2377
      %v2383 = vsel %vm2337, %v2378, 0
      %2385 = vmatprep.subr.mxu0 0.0
      %2386 = vmatpush1.msra.mxu0 %v1815
      %2387 = vmatprep.subr.mxu0 0.0
      %2388 = vmatpush1.msra.mxu0 0.0
      %2389 = vmatprep.subr.mxu0 0.0
      %2390 = vmatpush1.msra.mxu0 0.0
      %2391 = vmatprep.subr.mxu0 0.0
      %2392 = vmatpush1.msra.mxu0 0.0
      %2393 = vmatprep.subr.mxu0 0.0
      %2394 = vmatpush1.msra.mxu0 0.0
      %2395 = vmatprep.subr.mxu0 0.0
      %2396 = vmatpush1.msra.mxu0 0.0
      %2397 = vmatprep.subr.mxu0 0.0
      %2398 = vmatpush1.msra.mxu0 0.0
      %2399 = vmatprep.subr.mxu0 0.0
      %2400 = vmatpush1.msra.mxu0 0.0
      %2401 = vmatprep.subr.mxu0 0.0
      %2402 = vmatpush1.msra.mxu0 0.0
      %2403 = vmatprep.subr.mxu0 0.0
      %2404 = vmatpush1.msra.mxu0 0.0
      %2405 = vmatprep.subr.mxu0 0.0
      %2406 = vmatpush1.msra.mxu0 0.0
      %2407 = vmatprep.subr.mxu0 0.0
      %2408 = vmatpush1.msra.mxu0 0.0
      %2409 = vmatprep.subr.mxu0 0.0
      %2410 = vmatpush1.msra.mxu0 0.0
      %2411 = vmatprep.subr.mxu0 0.0
      %2412 = vmatpush1.msra.mxu0 0.0
      %2413 = vmatprep.subr.mxu0 0.0
      %2414 = vmatpush1.msra.mxu0 0.0
      %2415 = vmatprep.subr.mxu0 0.0
      %2416 = vmatpush1.msra.mxu0 0.0
      %2417 = vmatprep.subr.mxu0 0.0
      %2418 = vmatpush1.msra.mxu0 0.0
      %2419 = vmatprep.subr.mxu0 0.0
      %2420 = vmatpush1.msra.mxu0 0.0
      %2421 = vmatprep.subr.mxu0 0.0
      %2422 = vmatpush1.msra.mxu0 0.0
      %2423 = vmatprep.subr.mxu0 0.0
      %2424 = vmatpush1.msra.mxu0 0.0
      %2425 = vmatprep.subr.mxu0 0.0
      %2426 = vmatpush1.msra.mxu0 0.0
      %2427 = vmatprep.subr.mxu0 0.0
      %2428 = vmatpush1.msra.mxu0 0.0
      %2429 = vmatprep.subr.mxu0 0.0
      %2430 = vmatpush1.msra.mxu0 0.0
      %2431 = vmatprep.subr.mxu0 0.0
      %2432 = vmatpush1.msra.mxu0 0.0
      %2433 = vmatprep.subr.mxu0 0.0
      %2434 = vmatpush1.msra.mxu0 0.0
      %2435 = vmatprep.subr.mxu0 0.0
      %2436 = vmatpush1.msra.mxu0 0.0
      %2437 = vmatprep.subr.mxu0 0.0
      %2438 = vmatpush1.msra.mxu0 0.0
      %2439 = vmatprep.subr.mxu0 0.0
      %2440 = vmatpush1.msra.mxu0 0.0
      %2441 = vmatprep.subr.mxu0 0.0
      %2442 = vmatpush1.msra.mxu0 0.0
      %2443 = vmatprep.subr.mxu0 0.0
      %2444 = vmatpush1.msra.mxu0 0.0
      %2445 = vmatprep.subr.mxu0 0.0
      %2446 = vmatpush1.msra.mxu0 0.0
      %2447 = vmatprep.subr.mxu0 0.0
      %2448 = vmatpush1.msra.mxu0 0.0
      %2449 = vmatprep.mubr.f32.mxu0 0.0
      %2450 = vmatmul.mubr.f32.gmra.mrb[0].mxu0 %v2383
      %v2451 = vpop.f32.mrb[0].mxu0
      %v2452 = vadd.f32 0.0, %v2451
      %v2453 = vpop.f32.mrb[0].mxu0
      %2454 = vdwg.mxu0
      %v2456 = vsel %vm2337, %v2379, 0
      %2458 = vmatprep.subr.mxu0 0.0
      %2459 = vmatpush1.msra.mxu0 %v1885
      %2460 = vmatprep.subr.mxu0 0.0
      %2461 = vmatpush1.msra.mxu0 0.0
      %2462 = vmatprep.subr.mxu0 0.0
      %2463 = vmatpush1.msra.mxu0 0.0
      %2464 = vmatprep.subr.mxu0 0.0
      %2465 = vmatpush1.msra.mxu0 0.0
      %2466 = vmatprep.subr.mxu0 0.0
      %2467 = vmatpush1.msra.mxu0 0.0
      %2468 = vmatprep.subr.mxu0 0.0
      %2469 = vmatpush1.msra.mxu0 0.0
      %2470 = vmatprep.subr.mxu0 0.0
      %2471 = vmatpush1.msra.mxu0 0.0
      %2472 = vmatprep.subr.mxu0 0.0
      %2473 = vmatpush1.msra.mxu0 0.0
      %2474 = vmatprep.subr.mxu0 0.0
      %2475 = vmatpush1.msra.mxu0 0.0
      %2476 = vmatprep.subr.mxu0 0.0
      %2477 = vmatpush1.msra.mxu0 0.0
      %2478 = vmatprep.subr.mxu0 0.0
      %2479 = vmatpush1.msra.mxu0 0.0
      %2480 = vmatprep.subr.mxu0 0.0
      %2481 = vmatpush1.msra.mxu0 0.0
      %2482 = vmatprep.subr.mxu0 0.0
      %2483 = vmatpush1.msra.mxu0 0.0
      %2484 = vmatprep.subr.mxu0 0.0
      %2485 = vmatpush1.msra.mxu0 0.0
      %2486 = vmatprep.subr.mxu0 0.0
      %2487 = vmatpush1.msra.mxu0 0.0
      %2488 = vmatprep.subr.mxu0 0.0
      %2489 = vmatpush1.msra.mxu0 0.0
      %2490 = vmatprep.subr.mxu0 0.0
      %2491 = vmatpush1.msra.mxu0 0.0
      %2492 = vmatprep.subr.mxu0 0.0
      %2493 = vmatpush1.msra.mxu0 0.0
      %2494 = vmatprep.subr.mxu0 0.0
      %2495 = vmatpush1.msra.mxu0 0.0
      %2496 = vmatprep.subr.mxu0 0.0
      %2497 = vmatpush1.msra.mxu0 0.0
      %2498 = vmatprep.subr.mxu0 0.0
      %2499 = vmatpush1.msra.mxu0 0.0
      %2500 = vmatprep.subr.mxu0 0.0
      %2501 = vmatpush1.msra.mxu0 0.0
      %2502 = vmatprep.subr.mxu0 0.0
      %2503 = vmatpush1.msra.mxu0 0.0
      %2504 = vmatprep.subr.mxu0 0.0
      %2505 = vmatpush1.msra.mxu0 0.0
      %2506 = vmatprep.subr.mxu0 0.0
      %2507 = vmatpush1.msra.mxu0 0.0
      %2508 = vmatprep.subr.mxu0 0.0
      %2509 = vmatpush1.msra.mxu0 0.0
      %2510 = vmatprep.subr.mxu0 0.0
      %2511 = vmatpush1.msra.mxu0 0.0
      %2512 = vmatprep.subr.mxu0 0.0
      %2513 = vmatpush1.msra.mxu0 0.0
      %2514 = vmatprep.subr.mxu0 0.0
      %2515 = vmatpush1.msra.mxu0 0.0
      %2516 = vmatprep.subr.mxu0 0.0
      %2517 = vmatpush1.msra.mxu0 0.0
      %2518 = vmatprep.subr.mxu0 0.0
      %2519 = vmatpush1.msra.mxu0 0.0
      %2520 = vmatprep.subr.mxu0 0.0
      %2521 = vmatpush1.msra.mxu0 0.0
      %2522 = vmatprep.mubr.f32.mxu0 0.0
      %2523 = vmatmul.mubr.f32.gmra.mrb[0].mxu0 %v2456
      %v2524 = vpop.f32.mrb[0].mxu0
      %v2525 = vadd.f32 0.0, %v2524
      %v2526 = vpop.f32.mrb[0].mxu0
      %2527 = vdwg.mxu0
      %v2529 = vsel %vm2337, %v2380, 0
      %2531 = vmatprep.subr.mxu0 0.0
      %2532 = vmatpush1.msra.mxu0 %v1955
      %2533 = vmatprep.subr.mxu0 0.0
      %2534 = vmatpush1.msra.mxu0 0.0
      %2535 = vmatprep.subr.mxu0 0.0
      %2536 = vmatpush1.msra.mxu0 0.0
      %2537 = vmatprep.subr.mxu0 0.0
      %2538 = vmatpush1.msra.mxu0 0.0
      %2539 = vmatprep.subr.mxu0 0.0
      %2540 = vmatpush1.msra.mxu0 0.0
      %2541 = vmatprep.subr.mxu0 0.0
      %2542 = vmatpush1.msra.mxu0 0.0
      %2543 = vmatprep.subr.mxu0 0.0
      %2544 = vmatpush1.msra.mxu0 0.0
      %2545 = vmatprep.subr.mxu0 0.0
      %2546 = vmatpush1.msra.mxu0 0.0
      %2547 = vmatprep.subr.mxu0 0.0
      %2548 = vmatpush1.msra.mxu0 0.0
      %2549 = vmatprep.subr.mxu0 0.0
      %2550 = vmatpush1.msra.mxu0 0.0
      %2551 = vmatprep.subr.mxu0 0.0
      %2552 = vmatpush1.msra.mxu0 0.0
      %2553 = vmatprep.subr.mxu0 0.0
      %2554 = vmatpush1.msra.mxu0 0.0
      %2555 = vmatprep.subr.mxu0 0.0
      %2556 = vmatpush1.msra.mxu0 0.0
      %2557 = vmatprep.subr.mxu0 0.0
      %2558 = vmatpush1.msra.mxu0 0.0
      %2559 = vmatprep.subr.mxu0 0.0
      %2560 = vmatpush1.msra.mxu0 0.0
      %2561 = vmatprep.subr.mxu0 0.0
      %2562 = vmatpush1.msra.mxu0 0.0
      %2563 = vmatprep.subr.mxu0 0.0
      %2564 = vmatpush1.msra.mxu0 0.0
      %2565 = vmatprep.subr.mxu0 0.0
      %2566 = vmatpush1.msra.mxu0 0.0
      %2567 = vmatprep.subr.mxu0 0.0
      %2568 = vmatpush1.msra.mxu0 0.0
      %2569 = vmatprep.subr.mxu0 0.0
      %2570 = vmatpush1.msra.mxu0 0.0
      %2571 = vmatprep.subr.mxu0 0.0
      %2572 = vmatpush1.msra.mxu0 0.0
      %2573 = vmatprep.subr.mxu0 0.0
      %2574 = vmatpush1.msra.mxu0 0.0
      %2575 = vmatprep.subr.mxu0 0.0
      %2576 = vmatpush1.msra.mxu0 0.0
      %2577 = vmatprep.subr.mxu0 0.0
      %2578 = vmatpush1.msra.mxu0 0.0
      %2579 = vmatprep.subr.mxu0 0.0
      %2580 = vmatpush1.msra.mxu0 0.0
      %2581 = vmatprep.subr.mxu0 0.0
      %2582 = vmatpush1.msra.mxu0 0.0
      %2583 = vmatprep.subr.mxu0 0.0
      %2584 = vmatpush1.msra.mxu0 0.0
      %2585 = vmatprep.subr.mxu0 0.0
      %2586 = vmatpush1.msra.mxu0 0.0
      %2587 = vmatprep.subr.mxu0 0.0
      %2588 = vmatpush1.msra.mxu0 0.0
      %2589 = vmatprep.subr.mxu0 0.0
      %2590 = vmatpush1.msra.mxu0 0.0
      %2591 = vmatprep.subr.mxu0 0.0
      %2592 = vmatpush1.msra.mxu0 0.0
      %2593 = vmatprep.subr.mxu0 0.0
      %2594 = vmatpush1.msra.mxu0 0.0
      %2595 = vmatprep.mubr.f32.mxu0 0.0
      %2596 = vmatmul.mubr.f32.gmra.mrb[0].mxu0 %v2529
      %v2597 = vpop.f32.mrb[0].mxu0
      %v2598 = vadd.f32 0.0, %v2597
      %v2599 = vpop.f32.mrb[0].mxu0
      %2600 = vdwg.mxu0
      %v2602 = vsel %vm2337, %v2381, 0
      %2604 = vmatprep.subr.mxu0 0.0
      %2605 = vmatpush1.msra.mxu0 %v2025
      %2606 = vmatprep.subr.mxu0 0.0
      %2607 = vmatpush1.msra.mxu0 0.0
      %2608 = vmatprep.subr.mxu0 0.0
      %2609 = vmatpush1.msra.mxu0 0.0
      %2610 = vmatprep.subr.mxu0 0.0
      %2611 = vmatpush1.msra.mxu0 0.0
      %2612 = vmatprep.subr.mxu0 0.0
      %2613 = vmatpush1.msra.mxu0 0.0
      %2614 = vmatprep.subr.mxu0 0.0
      %2615 = vmatpush1.msra.mxu0 0.0
      %2616 = vmatprep.subr.mxu0 0.0
      %2617 = vmatpush1.msra.mxu0 0.0
      %2618 = vmatprep.subr.mxu0 0.0
      %2619 = vmatpush1.msra.mxu0 0.0
      %2620 = vmatprep.subr.mxu0 0.0
      %2621 = vmatpush1.msra.mxu0 0.0
      %2622 = vmatprep.subr.mxu0 0.0
      %2623 = vmatpush1.msra.mxu0 0.0
      %2624 = vmatprep.subr.mxu0 0.0
      %2625 = vmatpush1.msra.mxu0 0.0
      %2626 = vmatprep.subr.mxu0 0.0
      %2627 = vmatpush1.msra.mxu0 0.0
      %2628 = vmatprep.subr.mxu0 0.0
      %2629 = vmatpush1.msra.mxu0 0.0
      %2630 = vmatprep.subr.mxu0 0.0
      %2631 = vmatpush1.msra.mxu0 0.0
      %2632 = vmatprep.subr.mxu0 0.0
      %2633 = vmatpush1.msra.mxu0 0.0
      %2634 = vmatprep.subr.mxu0 0.0
      %2635 = vmatpush1.msra.mxu0 0.0
      %2636 = vmatprep.subr.mxu0 0.0
      %2637 = vmatpush1.msra.mxu0 0.0
      %2638 = vmatprep.subr.mxu0 0.0
      %2639 = vmatpush1.msra.mxu0 0.0
      %2640 = vmatprep.subr.mxu0 0.0
      %2641 = vmatpush1.msra.mxu0 0.0
      %2642 = vmatprep.subr.mxu0 0.0
      %2643 = vmatpush1.msra.mxu0 0.0
      %2644 = vmatprep.subr.mxu0 0.0
      %2645 = vmatpush1.msra.mxu0 0.0
      %2646 = vmatprep.subr.mxu0 0.0
      %2647 = vmatpush1.msra.mxu0 0.0
      %2648 = vmatprep.subr.mxu0 0.0
      %2649 = vmatpush1.msra.mxu0 0.0
      %2650 = vmatprep.subr.mxu0 0.0
      %2651 = vmatpush1.msra.mxu0 0.0
      %2652 = vmatprep.subr.mxu0 0.0
      %2653 = vmatpush1.msra.mxu0 0.0
      %2654 = vmatprep.subr.mxu0 0.0
      %2655 = vmatpush1.msra.mxu0 0.0
      %2656 = vmatprep.subr.mxu0 0.0
      %2657 = vmatpush1.msra.mxu0 0.0
      %2658 = vmatprep.subr.mxu0 0.0
      %2659 = vmatpush1.msra.mxu0 0.0
      %2660 = vmatprep.subr.mxu0 0.0
      %2661 = vmatpush1.msra.mxu0 0.0
      %2662 = vmatprep.subr.mxu0 0.0
      %2663 = vmatpush1.msra.mxu0 0.0
      %2664 = vmatprep.subr.mxu0 0.0
      %2665 = vmatpush1.msra.mxu0 0.0
      %2666 = vmatprep.subr.mxu0 0.0
      %2667 = vmatpush1.msra.mxu0 0.0
      %2668 = vmatprep.mubr.f32.mxu0 0.0
      %2669 = vmatmul.mubr.f32.gmra.mrb[0].mxu0 %v2602
      %v2670 = vpop.f32.mrb[0].mxu0
      %v2671 = vadd.f32 0.0, %v2670
      %v2672 = vpop.f32.mrb[0].mxu0
      %2673 = vdwg.mxu0
      %v2675 = vsel %vm2028, %v2452, 0
      %2677 = vmatprep.subr.mxu0 0.0
      %2678 = vmatpush1.msra.mxu0 %v1156
      %2679 = vmatprep.subr.mxu0 0.0
      %2680 = vmatpush1.msra.mxu0 %v1157
      %2681 = vmatprep.subr.mxu0 0.0
      %2682 = vmatpush1.msra.mxu0 %v1158
      %2683 = vmatprep.subr.mxu0 0.0
      %2684 = vmatpush1.msra.mxu0 %v1159
      %2685 = vmatprep.subr.mxu0 0.0
      %2686 = vmatpush1.msra.mxu0 %v1160
      %2687 = vmatprep.subr.mxu0 0.0
      %2688 = vmatpush1.msra.mxu0 %v1161
      %2689 = vmatprep.subr.mxu0 0.0
      %2690 = vmatpush1.msra.mxu0 %v1162
      %2691 = vmatprep.subr.mxu0 0.0
      %2692 = vmatpush1.msra.mxu0 %v1163
      %2693 = vmatprep.subr.mxu0 0.0
      %2694 = vmatpush1.msra.mxu0 0.0
      %2695 = vmatprep.subr.mxu0 0.0
      %2696 = vmatpush1.msra.mxu0 0.0
      %2697 = vmatprep.subr.mxu0 0.0
      %2698 = vmatpush1.msra.mxu0 0.0
      %2699 = vmatprep.subr.mxu0 0.0
      %2700 = vmatpush1.msra.mxu0 0.0
      %2701 = vmatprep.subr.mxu0 0.0
      %2702 = vmatpush1.msra.mxu0 0.0
      %2703 = vmatprep.subr.mxu0 0.0
      %2704 = vmatpush1.msra.mxu0 0.0
      %2705 = vmatprep.subr.mxu0 0.0
      %2706 = vmatpush1.msra.mxu0 0.0
      %2707 = vmatprep.subr.mxu0 0.0
      %2708 = vmatpush1.msra.mxu0 0.0
      %2709 = vmatprep.subr.mxu0 0.0
      %2710 = vmatpush1.msra.mxu0 0.0
      %2711 = vmatprep.subr.mxu0 0.0
      %2712 = vmatpush1.msra.mxu0 0.0
      %2713 = vmatprep.subr.mxu0 0.0
      %2714 = vmatpush1.msra.mxu0 0.0
      %2715 = vmatprep.subr.mxu0 0.0
      %2716 = vmatpush1.msra.mxu0 0.0
      %2717 = vmatprep.subr.mxu0 0.0
      %2718 = vmatpush1.msra.mxu0 0.0
      %2719 = vmatprep.subr.mxu0 0.0
      %2720 = vmatpush1.msra.mxu0 0.0
      %2721 = vmatprep.subr.mxu0 0.0
      %2722 = vmatpush1.msra.mxu0 0.0
      %2723 = vmatprep.subr.mxu0 0.0
      %2724 = vmatpush1.msra.mxu0 0.0
      %2725 = vmatprep.subr.mxu0 0.0
      %2726 = vmatpush1.msra.mxu0 0.0
      %2727 = vmatprep.subr.mxu0 0.0
      %2728 = vmatpush1.msra.mxu0 0.0
      %2729 = vmatprep.subr.mxu0 0.0
      %2730 = vmatpush1.msra.mxu0 0.0
      %2731 = vmatprep.subr.mxu0 0.0
      %2732 = vmatpush1.msra.mxu0 0.0
      %2733 = vmatprep.subr.mxu0 0.0
      %2734 = vmatpush1.msra.mxu0 0.0
      %2735 = vmatprep.subr.mxu0 0.0
      %2736 = vmatpush1.msra.mxu0 0.0
      %2737 = vmatprep.subr.mxu0 0.0
      %2738 = vmatpush1.msra.mxu0 0.0
      %2739 = vmatprep.subr.mxu0 0.0
      %2740 = vmatpush1.msra.mxu0 0.0
      %2741 = vmatprep.mubr.f32.mxu0 0.0
      %2742 = vmatmul.mubr.f32.gmra.mrb[0].mxu0 %v2675
      %v2743 = vpop.f32.mrb[0].mxu0
      %v2744 = vadd.f32 0.0, %v2743
      %v2745 = vpop.f32.mrb[0].mxu0
      %2746 = vdwg.mxu0
      %v2748 = vsel %vm2028, %v2525, 0
      %2750 = vmatprep.subr.mxu0 0.0
      %2751 = vmatpush1.msra.mxu0 %v1164
      %2752 = vmatprep.subr.mxu0 0.0
      %2753 = vmatpush1.msra.mxu0 %v1165
      %2754 = vmatprep.subr.mxu0 0.0
      %2755 = vmatpush1.msra.mxu0 %v1166
      %2756 = vmatprep.subr.mxu0 0.0
      %2757 = vmatpush1.msra.mxu0 %v1167
      %2758 = vmatprep.subr.mxu0 0.0
      %2759 = vmatpush1.msra.mxu0 %v1168
      %2760 = vmatprep.subr.mxu0 0.0
      %2761 = vmatpush1.msra.mxu0 %v1169
      %2762 = vmatprep.subr.mxu0 0.0
      %2763 = vmatpush1.msra.mxu0 %v1170
      %2764 = vmatprep.subr.mxu0 0.0
      %2765 = vmatpush1.msra.mxu0 %v1171
      %2766 = vmatprep.subr.mxu0 0.0
      %2767 = vmatpush1.msra.mxu0 0.0
      %2768 = vmatprep.subr.mxu0 0.0
      %2769 = vmatpush1.msra.mxu0 0.0
      %2770 = vmatprep.subr.mxu0 0.0
      %2771 = vmatpush1.msra.mxu0 0.0
      %2772 = vmatprep.subr.mxu0 0.0
      %2773 = vmatpush1.msra.mxu0 0.0
      %2774 = vmatprep.subr.mxu0 0.0
      %2775 = vmatpush1.msra.mxu0 0.0
      %2776 = vmatprep.subr.mxu0 0.0
      %2777 = vmatpush1.msra.mxu0 0.0
      %2778 = vmatprep.subr.mxu0 0.0
      %2779 = vmatpush1.msra.mxu0 0.0
      %2780 = vmatprep.subr.mxu0 0.0
      %2781 = vmatpush1.msra.mxu0 0.0
      %2782 = vmatprep.subr.mxu0 0.0
      %2783 = vmatpush1.msra.mxu0 0.0
      %2784 = vmatprep.subr.mxu0 0.0
      %2785 = vmatpush1.msra.mxu0 0.0
      %2786 = vmatprep.subr.mxu0 0.0
      %2787 = vmatpush1.msra.mxu0 0.0
      %2788 = vmatprep.subr.mxu0 0.0
      %2789 = vmatpush1.msra.mxu0 0.0
      %2790 = vmatprep.subr.mxu0 0.0
      %2791 = vmatpush1.msra.mxu0 0.0
      %2792 = vmatprep.subr.mxu0 0.0
      %2793 = vmatpush1.msra.mxu0 0.0
      %2794 = vmatprep.subr.mxu0 0.0
      %2795 = vmatpush1.msra.mxu0 0.0
      %2796 = vmatprep.subr.mxu0 0.0
      %2797 = vmatpush1.msra.mxu0 0.0
      %2798 = vmatprep.subr.mxu0 0.0
      %2799 = vmatpush1.msra.mxu0 0.0
      %2800 = vmatprep.subr.mxu0 0.0
      %2801 = vmatpush1.msra.mxu0 0.0
      %2802 = vmatprep.subr.mxu0 0.0
      %2803 = vmatpush1.msra.mxu0 0.0
      %2804 = vmatprep.subr.mxu0 0.0
      %2805 = vmatpush1.msra.mxu0 0.0
      %2806 = vmatprep.subr.mxu0 0.0
      %2807 = vmatpush1.msra.mxu0 0.0
      %2808 = vmatprep.subr.mxu0 0.0
      %2809 = vmatpush1.msra.mxu0 0.0
      %2810 = vmatprep.subr.mxu0 0.0
      %2811 = vmatpush1.msra.mxu0 0.0
      %2812 = vmatprep.subr.mxu0 0.0
      %2813 = vmatpush1.msra.mxu0 0.0
      %2814 = vmatprep.mubr.f32.mxu0 0.0
      %2815 = vmatmul.mubr.f32.gmra.mrb[0].mxu0 %v2748
      %v2816 = vpop.f32.mrb[0].mxu0
      %v2817 = vadd.f32 0.0, %v2816
      %v2818 = vpop.f32.mrb[0].mxu0
      %2819 = vdwg.mxu0
      %v2821 = vsel %vm2028, %v2598, 0
      %2823 = vmatprep.subr.mxu0 0.0
      %2824 = vmatpush1.msra.mxu0 %v1172
      %2825 = vmatprep.subr.mxu0 0.0
      %2826 = vmatpush1.msra.mxu0 %v1173
      %2827 = vmatprep.subr.mxu0 0.0
      %2828 = vmatpush1.msra.mxu0 %v1174
      %2829 = vmatprep.subr.mxu0 0.0
      %2830 = vmatpush1.msra.mxu0 %v1175
      %2831 = vmatprep.subr.mxu0 0.0
      %2832 = vmatpush1.msra.mxu0 %v1176
      %2833 = vmatprep.subr.mxu0 0.0
      %2834 = vmatpush1.msra.mxu0 %v1177
      %2835 = vmatprep.subr.mxu0 0.0
      %2836 = vmatpush1.msra.mxu0 %v1178
      %2837 = vmatprep.subr.mxu0 0.0
      %2838 = vmatpush1.msra.mxu0 %v1179
      %2839 = vmatprep.subr.mxu0 0.0
      %2840 = vmatpush1.msra.mxu0 0.0
      %2841 = vmatprep.subr.mxu0 0.0
      %2842 = vmatpush1.msra.mxu0 0.0
      %2843 = vmatprep.subr.mxu0 0.0
      %2844 = vmatpush1.msra.mxu0 0.0
      %2845 = vmatprep.subr.mxu0 0.0
      %2846 = vmatpush1.msra.mxu0 0.0
      %2847 = vmatprep.subr.mxu0 0.0
      %2848 = vmatpush1.msra.mxu0 0.0
      %2849 = vmatprep.subr.mxu0 0.0
      %2850 = vmatpush1.msra.mxu0 0.0
      %2851 = vmatprep.subr.mxu0 0.0
      %2852 = vmatpush1.msra.mxu0 0.0
      %2853 = vmatprep.subr.mxu0 0.0
      %2854 = vmatpush1.msra.mxu0 0.0
      %2855 = vmatprep.subr.mxu0 0.0
      %2856 = vmatpush1.msra.mxu0 0.0
      %2857 = vmatprep.subr.mxu0 0.0
      %2858 = vmatpush1.msra.mxu0 0.0
      %2859 = vmatprep.subr.mxu0 0.0
      %2860 = vmatpush1.msra.mxu0 0.0
      %2861 = vmatprep.subr.mxu0 0.0
      %2862 = vmatpush1.msra.mxu0 0.0
      %2863 = vmatprep.subr.mxu0 0.0
      %2864 = vmatpush1.msra.mxu0 0.0
      %2865 = vmatprep.subr.mxu0 0.0
      %2866 = vmatpush1.msra.mxu0 0.0
      %2867 = vmatprep.subr.mxu0 0.0
      %2868 = vmatpush1.msra.mxu0 0.0
      %2869 = vmatprep.subr.mxu0 0.0
      %2870 = vmatpush1.msra.mxu0 0.0
      %2871 = vmatprep.subr.mxu0 0.0
      %2872 = vmatpush1.msra.mxu0 0.0
      %2873 = vmatprep.subr.mxu0 0.0
      %2874 = vmatpush1.msra.mxu0 0.0
      %2875 = vmatprep.subr.mxu0 0.0
      %2876 = vmatpush1.msra.mxu0 0.0
      %2877 = vmatprep.subr.mxu0 0.0
      %2878 = vmatpush1.msra.mxu0 0.0
      %2879 = vmatprep.subr.mxu0 0.0
      %2880 = vmatpush1.msra.mxu0 0.0
      %2881 = vmatprep.subr.mxu0 0.0
      %2882 = vmatpush1.msra.mxu0 0.0
      %2883 = vmatprep.subr.mxu0 0.0
      %2884 = vmatpush1.msra.mxu0 0.0
      %2885 = vmatprep.subr.mxu0 0.0
      %2886 = vmatpush1.msra.mxu0 0.0
      %2887 = vmatprep.mubr.f32.mxu0 0.0
      %2888 = vmatmul.mubr.f32.gmra.mrb[0].mxu0 %v2821
      %v2889 = vpop.f32.mrb[0].mxu0
      %v2890 = vadd.f32 0.0, %v2889
      %v2891 = vpop.f32.mrb[0].mxu0
      %2892 = vdwg.mxu0
      %v2894 = vsel %vm2028, %v2671, 0
      %2896 = vmatprep.subr.mxu0 0.0
      %2897 = vmatpush1.msra.mxu0 %v1180
      %2898 = vmatprep.subr.mxu0 0.0
      %2899 = vmatpush1.msra.mxu0 %v1181
      %2900 = vmatprep.subr.mxu0 0.0
      %2901 = vmatpush1.msra.mxu0 %v1182
      %2902 = vmatprep.subr.mxu0 0.0
      %2903 = vmatpush1.msra.mxu0 %v1183
      %2904 = vmatprep.subr.mxu0 0.0
      %2905 = vmatpush1.msra.mxu0 %v1184
      %2906 = vmatprep.subr.mxu0 0.0
      %2907 = vmatpush1.msra.mxu0 %v1185
      %2908 = vmatprep.subr.mxu0 0.0
      %2909 = vmatpush1.msra.mxu0 %v1186
      %2910 = vmatprep.subr.mxu0 0.0
      %2911 = vmatpush1.msra.mxu0 %v1187
      %2912 = vmatprep.subr.mxu0 0.0
      %2913 = vmatpush1.msra.mxu0 0.0
      %2914 = vmatprep.subr.mxu0 0.0
      %2915 = vmatpush1.msra.mxu0 0.0
      %2916 = vmatprep.subr.mxu0 0.0
      %2917 = vmatpush1.msra.mxu0 0.0
      %2918 = vmatprep.subr.mxu0 0.0
      %2919 = vmatpush1.msra.mxu0 0.0
      %2920 = vmatprep.subr.mxu0 0.0
      %2921 = vmatpush1.msra.mxu0 0.0
      %2922 = vmatprep.subr.mxu0 0.0
      %2923 = vmatpush1.msra.mxu0 0.0
      %2924 = vmatprep.subr.mxu0 0.0
      %2925 = vmatpush1.msra.mxu0 0.0
      %2926 = vmatprep.subr.mxu0 0.0
      %2927 = vmatpush1.msra.mxu0 0.0
      %2928 = vmatprep.subr.mxu0 0.0
      %2929 = vmatpush1.msra.mxu0 0.0
      %2930 = vmatprep.subr.mxu0 0.0
      %2931 = vmatpush1.msra.mxu0 0.0
      %2932 = vmatprep.subr.mxu0 0.0
      %2933 = vmatpush1.msra.mxu0 0.0
      %2934 = vmatprep.subr.mxu0 0.0
      %2935 = vmatpush1.msra.mxu0 0.0
      %2936 = vmatprep.subr.mxu0 0.0
      %2937 = vmatpush1.msra.mxu0 0.0
      %2938 = vmatprep.subr.mxu0 0.0
      %2939 = vmatpush1.msra.mxu0 0.0
      %2940 = vmatprep.subr.mxu0 0.0
      %2941 = vmatpush1.msra.mxu0 0.0
      %2942 = vmatprep.subr.mxu0 0.0
      %2943 = vmatpush1.msra.mxu0 0.0
      %2944 = vmatprep.subr.mxu0 0.0
      %2945 = vmatpush1.msra.mxu0 0.0
      %2946 = vmatprep.subr.mxu0 0.0
      %2947 = vmatpush1.msra.mxu0 0.0
      %2948 = vmatprep.subr.mxu0 0.0
      %2949 = vmatpush1.msra.mxu0 0.0
      %2950 = vmatprep.subr.mxu0 0.0
      %2951 = vmatpush1.msra.mxu0 0.0
      %2952 = vmatprep.subr.mxu0 0.0
      %2953 = vmatpush1.msra.mxu0 0.0
      %2954 = vmatprep.subr.mxu0 0.0
      %2955 = vmatpush1.msra.mxu0 0.0
      %2956 = vmatprep.subr.mxu0 0.0
      %2957 = vmatpush1.msra.mxu0 0.0
      %2958 = vmatprep.subr.mxu0 0.0
      %2959 = vmatpush1.msra.mxu0 0.0
      %2960 = vmatprep.mubr.f32.mxu0 0.0
      %2961 = vmatmul.mubr.f32.gmra.mrb[0].mxu0 %v2894
      %v2962 = vpop.f32.mrb[0].mxu0
      %v2963 = vadd.f32 0.0, %v2962
      %v2964 = vpop.f32.mrb[0].mxu0
      %2965 = vdwg.mxu0
      %v2966 = vadd.f32 %v2744, %v2817
      %v2967 = vadd.f32 %v2966, %v2890
      %v2968 = vadd.f32 %v2967, %v2963
      %2969 = vmatprep.subr.mxu0 0.0
      %2970 = vmatpush1.msra.mxu0 %v964
      %2971 = vmatprep.subr.mxu0 0.0
      %2972 = vmatpush1.msra.mxu0 %v965
      %2973 = vmatprep.subr.mxu0 0.0
      %2974 = vmatpush1.msra.mxu0 %v966
      %2975 = vmatprep.subr.mxu0 0.0
      %2976 = vmatpush1.msra.mxu0 %v967
      %2977 = vmatprep.subr.mxu0 0.0
      %2978 = vmatpush1.msra.mxu0 %v968
      %2979 = vmatprep.subr.mxu0 0.0
      %2980 = vmatpush1.msra.mxu0 %v969
      %2981 = vmatprep.subr.mxu0 0.0
      %2982 = vmatpush1.msra.mxu0 %v970
      %2983 = vmatprep.subr.mxu0 0.0
      %2984 = vmatpush1.msra.mxu0 %v971
      %2985 = vmatprep.subr.mxu0 0.0
      %2986 = vmatpush1.msra.mxu0 %v972
      %2987 = vmatprep.subr.mxu0 0.0
      %2988 = vmatpush1.msra.mxu0 %v973
      %2989 = vmatprep.subr.mxu0 0.0
      %2990 = vmatpush1.msra.mxu0 %v974
      %2991 = vmatprep.subr.mxu0 0.0
      %2992 = vmatpush1.msra.mxu0 %v975
      %2993 = vmatprep.subr.mxu0 0.0
      %2994 = vmatpush1.msra.mxu0 %v976
      %2995 = vmatprep.subr.mxu0 0.0
      %2996 = vmatpush1.msra.mxu0 %v977
      %2997 = vmatprep.subr.mxu0 0.0
      %2998 = vmatpush1.msra.mxu0 %v978
      %2999 = vmatprep.subr.mxu0 0.0
      %3000 = vmatpush1.msra.mxu0 %v979
      %3001 = vmatprep.subr.mxu0 0.0
      %3002 = vmatpush1.msra.mxu0 0.0
      %3003 = vmatprep.subr.mxu0 0.0
      %3004 = vmatpush1.msra.mxu0 0.0
      %3005 = vmatprep.subr.mxu0 0.0
      %3006 = vmatpush1.msra.mxu0 0.0
      %3007 = vmatprep.subr.mxu0 0.0
      %3008 = vmatpush1.msra.mxu0 0.0
      %3009 = vmatprep.subr.mxu0 0.0
      %3010 = vmatpush1.msra.mxu0 0.0
      %3011 = vmatprep.subr.mxu0 0.0
      %3012 = vmatpush1.msra.mxu0 0.0
      %3013 = vmatprep.subr.mxu0 0.0
      %3014 = vmatpush1.msra.mxu0 0.0
      %3015 = vmatprep.subr.mxu0 0.0
      %3016 = vmatpush1.msra.mxu0 0.0
      %3017 = vmatprep.subr.mxu0 0.0
      %3018 = vmatpush1.msra.mxu0 0.0
      %3019 = vmatprep.subr.mxu0 0.0
      %3020 = vmatpush1.msra.mxu0 0.0
      %3021 = vmatprep.subr.mxu0 0.0
      %3022 = vmatpush1.msra.mxu0 0.0
      %3023 = vmatprep.subr.mxu0 0.0
      %3024 = vmatpush1.msra.mxu0 0.0
      %3025 = vmatprep.subr.mxu0 0.0
      %3026 = vmatpush1.msra.mxu0 0.0
      %3027 = vmatprep.subr.mxu0 0.0
      %3028 = vmatpush1.msra.mxu0 0.0
      %3029 = vmatprep.subr.mxu0 0.0
      %3030 = vmatpush1.msra.mxu0 0.0
      %3031 = vmatprep.subr.mxu0 0.0
      %3032 = vmatpush1.msra.mxu0 0.0
      %3033 = vmatprep.mubr.f32.mxu0 0.0
      %3034 = vmatmul.mubr.f32.gmra.mrb[0].mxu0 %v963
      %v3035 = vpop.f32.mrb[0].mxu0
      %v3036 = vadd.f32 0.0, %v3035
      %v3037 = vpop.f32.mrb[0].mxu0
      %3038 = vdwg.mxu0
      %3039 = vmatprep.subr.mxu0 0.0
      %3040 = vmatpush1.msra.mxu0 %v980
      %3041 = vmatprep.subr.mxu0 0.0
      %3042 = vmatpush1.msra.mxu0 %v981
      %3043 = vmatprep.subr.mxu0 0.0
      %3044 = vmatpush1.msra.mxu0 %v982
      %3045 = vmatprep.subr.mxu0 0.0
      %3046 = vmatpush1.msra.mxu0 %v983
      %3047 = vmatprep.subr.mxu0 0.0
      %3048 = vmatpush1.msra.mxu0 %v984
      %3049 = vmatprep.subr.mxu0 0.0
      %3050 = vmatpush1.msra.mxu0 %v985
      %3051 = vmatprep.subr.mxu0 0.0
      %3052 = vmatpush1.msra.mxu0 %v986
      %3053 = vmatprep.subr.mxu0 0.0
      %3054 = vmatpush1.msra.mxu0 %v987
      %3055 = vmatprep.subr.mxu0 0.0
      %3056 = vmatpush1.msra.mxu0 %v988
      %3057 = vmatprep.subr.mxu0 0.0
      %3058 = vmatpush1.msra.mxu0 %v989
      %3059 = vmatprep.subr.mxu0 0.0
      %3060 = vmatpush1.msra.mxu0 %v990
      %3061 = vmatprep.subr.mxu0 0.0
      %3062 = vmatpush1.msra.mxu0 %v991
      %3063 = vmatprep.subr.mxu0 0.0
      %3064 = vmatpush1.msra.mxu0 %v992
      %3065 = vmatprep.subr.mxu0 0.0
      %3066 = vmatpush1.msra.mxu0 %v993
      %3067 = vmatprep.subr.mxu0 0.0
      %3068 = vmatpush1.msra.mxu0 %v994
      %3069 = vmatprep.subr.mxu0 0.0
      %3070 = vmatpush1.msra.mxu0 %v995
      %3071 = vmatprep.subr.mxu0 0.0
      %3072 = vmatpush1.msra.mxu0 0.0
      %3073 = vmatprep.subr.mxu0 0.0
      %3074 = vmatpush1.msra.mxu0 0.0
      %3075 = vmatprep.subr.mxu0 0.0
      %3076 = vmatpush1.msra.mxu0 0.0
      %3077 = vmatprep.subr.mxu0 0.0
      %3078 = vmatpush1.msra.mxu0 0.0
      %3079 = vmatprep.subr.mxu0 0.0
      %3080 = vmatpush1.msra.mxu0 0.0
      %3081 = vmatprep.subr.mxu0 0.0
      %3082 = vmatpush1.msra.mxu0 0.0
      %3083 = vmatprep.subr.mxu0 0.0
      %3084 = vmatpush1.msra.mxu0 0.0
      %3085 = vmatprep.subr.mxu0 0.0
      %3086 = vmatpush1.msra.mxu0 0.0
      %3087 = vmatprep.subr.mxu0 0.0
      %3088 = vmatpush1.msra.mxu0 0.0
      %3089 = vmatprep.subr.mxu0 0.0
      %3090 = vmatpush1.msra.mxu0 0.0
      %3091 = vmatprep.subr.mxu0 0.0
      %3092 = vmatpush1.msra.mxu0 0.0
      %3093 = vmatprep.subr.mxu0 0.0
      %3094 = vmatpush1.msra.mxu0 0.0
      %3095 = vmatprep.subr.mxu0 0.0
      %3096 = vmatpush1.msra.mxu0 0.0
      %3097 = vmatprep.subr.mxu0 0.0
      %3098 = vmatpush1.msra.mxu0 0.0
      %3099 = vmatprep.subr.mxu0 0.0
      %3100 = vmatpush1.msra.mxu0 0.0
      %3101 = vmatprep.subr.mxu0 0.0
      %3102 = vmatpush1.msra.mxu0 0.0
      %3103 = vmatprep.mubr.f32.mxu0 0.0
      %3104 = vmatmul.mubr.f32.gmra.mrb[0].mxu0 %v963
      %v3105 = vpop.f32.mrb[0].mxu0
      %v3106 = vadd.f32 0.0, %v3105
      %v3107 = vpop.f32.mrb[0].mxu0
      %3108 = vdwg.mxu0
      %3109 = vmatprep.subr.mxu0 0.0
      %3110 = vmatpush1.msra.mxu0 %v996
      %3111 = vmatprep.subr.mxu0 0.0
      %3112 = vmatpush1.msra.mxu0 %v997
      %3113 = vmatprep.subr.mxu0 0.0
      %3114 = vmatpush1.msra.mxu0 %v998
      %3115 = vmatprep.subr.mxu0 0.0
      %3116 = vmatpush1.msra.mxu0 %v999
      %3117 = vmatprep.subr.mxu0 0.0
      %3118 = vmatpush1.msra.mxu0 %v1000
      %3119 = vmatprep.subr.mxu0 0.0
      %3120 = vmatpush1.msra.mxu0 %v1001
      %3121 = vmatprep.subr.mxu0 0.0
      %3122 = vmatpush1.msra.mxu0 %v1002
      %3123 = vmatprep.subr.mxu0 0.0
      %3124 = vmatpush1.msra.mxu0 %v1003
      %3125 = vmatprep.subr.mxu0 0.0
      %3126 = vmatpush1.msra.mxu0 %v1004
      %3127 = vmatprep.subr.mxu0 0.0
      %3128 = vmatpush1.msra.mxu0 %v1005
      %3129 = vmatprep.subr.mxu0 0.0
      %3130 = vmatpush1.msra.mxu0 %v1006
      %3131 = vmatprep.subr.mxu0 0.0
      %3132 = vmatpush1.msra.mxu0 %v1007
      %3133 = vmatprep.subr.mxu0 0.0
      %3134 = vmatpush1.msra.mxu0 %v1008
      %3135 = vmatprep.subr.mxu0 0.0
      %3136 = vmatpush1.msra.mxu0 %v1009
      %3137 = vmatprep.subr.mxu0 0.0
      %3138 = vmatpush1.msra.mxu0 %v1010
      %3139 = vmatprep.subr.mxu0 0.0
      %3140 = vmatpush1.msra.mxu0 %v1011
      %3141 = vmatprep.subr.mxu0 0.0
      %3142 = vmatpush1.msra.mxu0 0.0
      %3143 = vmatprep.subr.mxu0 0.0
      %3144 = vmatpush1.msra.mxu0 0.0
      %3145 = vmatprep.subr.mxu0 0.0
      %3146 = vmatpush1.msra.mxu0 0.0
      %3147 = vmatprep.subr.mxu0 0.0
      %3148 = vmatpush1.msra.mxu0 0.0
      %3149 = vmatprep.subr.mxu0 0.0
      %3150 = vmatpush1.msra.mxu0 0.0
      %3151 = vmatprep.subr.mxu0 0.0
      %3152 = vmatpush1.msra.mxu0 0.0
      %3153 = vmatprep.subr.mxu0 0.0
      %3154 = vmatpush1.msra.mxu0 0.0
      %3155 = vmatprep.subr.mxu0 0.0
      %3156 = vmatpush1.msra.mxu0 0.0
      %3157 = vmatprep.subr.mxu0 0.0
      %3158 = vmatpush1.msra.mxu0 0.0
      %3159 = vmatprep.subr.mxu0 0.0
      %3160 = vmatpush1.msra.mxu0 0.0
      %3161 = vmatprep.subr.mxu0 0.0
      %3162 = vmatpush1.msra.mxu0 0.0
      %3163 = vmatprep.subr.mxu0 0.0
      %3164 = vmatpush1.msra.mxu0 0.0
      %3165 = vmatprep.subr.mxu0 0.0
      %3166 = vmatpush1.msra.mxu0 0.0
      %3167 = vmatprep.subr.mxu0 0.0
      %3168 = vmatpush1.msra.mxu0 0.0
      %3169 = vmatprep.subr.mxu0 0.0
      %3170 = vmatpush1.msra.mxu0 0.0
      %3171 = vmatprep.subr.mxu0 0.0
      %3172 = vmatpush1.msra.mxu0 0.0
      %3173 = vmatprep.mubr.f32.mxu0 0.0
      %3174 = vmatmul.mubr.f32.gmra.mrb[0].mxu0 %v963
      %v3175 = vpop.f32.mrb[0].mxu0
      %v3176 = vadd.f32 0.0, %v3175
      %v3177 = vpop.f32.mrb[0].mxu0
      %3178 = vdwg.mxu0
      %3179 = vmatprep.subr.mxu0 0.0
      %3180 = vmatpush1.msra.mxu0 %v1012
      %3181 = vmatprep.subr.mxu0 0.0
      %3182 = vmatpush1.msra.mxu0 %v1013
      %3183 = vmatprep.subr.mxu0 0.0
      %3184 = vmatpush1.msra.mxu0 %v1014
      %3185 = vmatprep.subr.mxu0 0.0
      %3186 = vmatpush1.msra.mxu0 %v1015
      %3187 = vmatprep.subr.mxu0 0.0
      %3188 = vmatpush1.msra.mxu0 %v1016
      %3189 = vmatprep.subr.mxu0 0.0
      %3190 = vmatpush1.msra.mxu0 %v1017
      %3191 = vmatprep.subr.mxu0 0.0
      %3192 = vmatpush1.msra.mxu0 %v1018
      %3193 = vmatprep.subr.mxu0 0.0
      %3194 = vmatpush1.msra.mxu0 %v1019
      %3195 = vmatprep.subr.mxu0 0.0
      %3196 = vmatpush1.msra.mxu0 %v1020
      %3197 = vmatprep.subr.mxu0 0.0
      %3198 = vmatpush1.msra.mxu0 %v1021
      %3199 = vmatprep.subr.mxu0 0.0
      %3200 = vmatpush1.msra.mxu0 %v1022
      %3201 = vmatprep.subr.mxu0 0.0
      %3202 = vmatpush1.msra.mxu0 %v1023
      %3203 = vmatprep.subr.mxu0 0.0
      %3204 = vmatpush1.msra.mxu0 %v1024
      %3205 = vmatprep.subr.mxu0 0.0
      %3206 = vmatpush1.msra.mxu0 %v1025
      %3207 = vmatprep.subr.mxu0 0.0
      %3208 = vmatpush1.msra.mxu0 %v1026
      %3209 = vmatprep.subr.mxu0 0.0
      %3210 = vmatpush1.msra.mxu0 %v1027
      %3211 = vmatprep.subr.mxu0 0.0
      %3212 = vmatpush1.msra.mxu0 0.0
      %3213 = vmatprep.subr.mxu0 0.0
      %3214 = vmatpush1.msra.mxu0 0.0
      %3215 = vmatprep.subr.mxu0 0.0
      %3216 = vmatpush1.msra.mxu0 0.0
      %3217 = vmatprep.subr.mxu0 0.0
      %3218 = vmatpush1.msra.mxu0 0.0
      %3219 = vmatprep.subr.mxu0 0.0
      %3220 = vmatpush1.msra.mxu0 0.0
      %3221 = vmatprep.subr.mxu0 0.0
      %3222 = vmatpush1.msra.mxu0 0.0
      %3223 = vmatprep.subr.mxu0 0.0
      %3224 = vmatpush1.msra.mxu0 0.0
      %3225 = vmatprep.subr.mxu0 0.0
      %3226 = vmatpush1.msra.mxu0 0.0
      %3227 = vmatprep.subr.mxu0 0.0
      %3228 = vmatpush1.msra.mxu0 0.0
      %3229 = vmatprep.subr.mxu0 0.0
      %3230 = vmatpush1.msra.mxu0 0.0
      %3231 = vmatprep.subr.mxu0 0.0
      %3232 = vmatpush1.msra.mxu0 0.0
      %3233 = vmatprep.subr.mxu0 0.0
      %3234 = vmatpush1.msra.mxu0 0.0
      %3235 = vmatprep.subr.mxu0 0.0
      %3236 = vmatpush1.msra.mxu0 0.0
      %3237 = vmatprep.subr.mxu0 0.0
      %3238 = vmatpush1.msra.mxu0 0.0
      %3239 = vmatprep.subr.mxu0 0.0
      %3240 = vmatpush1.msra.mxu0 0.0
      %3241 = vmatprep.subr.mxu0 0.0
      %3242 = vmatpush1.msra.mxu0 0.0
      %3243 = vmatprep.mubr.f32.mxu0 0.0
      %3244 = vmatmul.mubr.f32.gmra.mrb[0].mxu0 %v963
      %v3245 = vpop.f32.mrb[0].mxu0
      %v3246 = vadd.f32 0.0, %v3245
      %v3247 = vpop.f32.mrb[0].mxu0
      %3248 = vdwg.mxu0
      %3249 = vmatprep.subr.mxu0 0.0
      %3250 = vmatpush1.msra.mxu0 %v1028
      %3251 = vmatprep.subr.mxu0 0.0
      %3252 = vmatpush1.msra.mxu0 %v1029
      %3253 = vmatprep.subr.mxu0 0.0
      %3254 = vmatpush1.msra.mxu0 %v1030
      %3255 = vmatprep.subr.mxu0 0.0
      %3256 = vmatpush1.msra.mxu0 %v1031
      %3257 = vmatprep.subr.mxu0 0.0
      %3258 = vmatpush1.msra.mxu0 %v1032
      %3259 = vmatprep.subr.mxu0 0.0
      %3260 = vmatpush1.msra.mxu0 %v1033
      %3261 = vmatprep.subr.mxu0 0.0
      %3262 = vmatpush1.msra.mxu0 %v1034
      %3263 = vmatprep.subr.mxu0 0.0
      %3264 = vmatpush1.msra.mxu0 %v1035
      %3265 = vmatprep.subr.mxu0 0.0
      %3266 = vmatpush1.msra.mxu0 %v1036
      %3267 = vmatprep.subr.mxu0 0.0
      %3268 = vmatpush1.msra.mxu0 %v1037
      %3269 = vmatprep.subr.mxu0 0.0
      %3270 = vmatpush1.msra.mxu0 %v1038
      %3271 = vmatprep.subr.mxu0 0.0
      %3272 = vmatpush1.msra.mxu0 %v1039
      %3273 = vmatprep.subr.mxu0 0.0
      %3274 = vmatpush1.msra.mxu0 %v1040
      %3275 = vmatprep.subr.mxu0 0.0
      %3276 = vmatpush1.msra.mxu0 %v1041
      %3277 = vmatprep.subr.mxu0 0.0
      %3278 = vmatpush1.msra.mxu0 %v1042
      %3279 = vmatprep.subr.mxu0 0.0
      %3280 = vmatpush1.msra.mxu0 %v1043
      %3281 = vmatprep.subr.mxu0 0.0
      %3282 = vmatpush1.msra.mxu0 0.0
      %3283 = vmatprep.subr.mxu0 0.0
      %3284 = vmatpush1.msra.mxu0 0.0
      %3285 = vmatprep.subr.mxu0 0.0
      %3286 = vmatpush1.msra.mxu0 0.0
      %3287 = vmatprep.subr.mxu0 0.0
      %3288 = vmatpush1.msra.mxu0 0.0
      %3289 = vmatprep.subr.mxu0 0.0
      %3290 = vmatpush1.msra.mxu0 0.0
      %3291 = vmatprep.subr.mxu0 0.0
      %3292 = vmatpush1.msra.mxu0 0.0
      %3293 = vmatprep.subr.mxu0 0.0
      %3294 = vmatpush1.msra.mxu0 0.0
      %3295 = vmatprep.subr.mxu0 0.0
      %3296 = vmatpush1.msra.mxu0 0.0
      %3297 = vmatprep.subr.mxu0 0.0
      %3298 = vmatpush1.msra.mxu0 0.0
      %3299 = vmatprep.subr.mxu0 0.0
      %3300 = vmatpush1.msra.mxu0 0.0
      %3301 = vmatprep.subr.mxu0 0.0
      %3302 = vmatpush1.msra.mxu0 0.0
      %3303 = vmatprep.subr.mxu0 0.0
      %3304 = vmatpush1.msra.mxu0 0.0
      %3305 = vmatprep.subr.mxu0 0.0
      %3306 = vmatpush1.msra.mxu0 0.0
      %3307 = vmatprep.subr.mxu0 0.0
      %3308 = vmatpush1.msra.mxu0 0.0
      %3309 = vmatprep.subr.mxu0 0.0
      %3310 = vmatpush1.msra.mxu0 0.0
      %3311 = vmatprep.subr.mxu0 0.0
      %3312 = vmatpush1.msra.mxu0 0.0
      %3313 = vmatprep.mubr.f32.mxu0 0.0
      %3314 = vmatmul.mubr.f32.gmra.mrb[0].mxu0 %v963
      %v3315 = vpop.f32.mrb[0].mxu0
      %v3316 = vadd.f32 0.0, %v3315
      %v3317 = vpop.f32.mrb[0].mxu0
      %3318 = vdwg.mxu0
      %3319 = vmatprep.subr.mxu0 0.0
      %3320 = vmatpush1.msra.mxu0 %v1044
      %3321 = vmatprep.subr.mxu0 0.0
      %3322 = vmatpush1.msra.mxu0 %v1045
      %3323 = vmatprep.subr.mxu0 0.0
      %3324 = vmatpush1.msra.mxu0 %v1046
      %3325 = vmatprep.subr.mxu0 0.0
      %3326 = vmatpush1.msra.mxu0 %v1047
      %3327 = vmatprep.subr.mxu0 0.0
      %3328 = vmatpush1.msra.mxu0 %v1048
      %3329 = vmatprep.subr.mxu0 0.0
      %3330 = vmatpush1.msra.mxu0 %v1049
      %3331 = vmatprep.subr.mxu0 0.0
      %3332 = vmatpush1.msra.mxu0 %v1050
      %3333 = vmatprep.subr.mxu0 0.0
      %3334 = vmatpush1.msra.mxu0 %v1051
      %3335 = vmatprep.subr.mxu0 0.0
      %3336 = vmatpush1.msra.mxu0 %v1052
      %3337 = vmatprep.subr.mxu0 0.0
      %3338 = vmatpush1.msra.mxu0 %v1053
      %3339 = vmatprep.subr.mxu0 0.0
      %3340 = vmatpush1.msra.mxu0 %v1054
      %3341 = vmatprep.subr.mxu0 0.0
      %3342 = vmatpush1.msra.mxu0 %v1055
      %3343 = vmatprep.subr.mxu0 0.0
      %3344 = vmatpush1.msra.mxu0 %v1056
      %3345 = vmatprep.subr.mxu0 0.0
      %3346 = vmatpush1.msra.mxu0 %v1057
      %3347 = vmatprep.subr.mxu0 0.0
      %3348 = vmatpush1.msra.mxu0 %v1058
      %3349 = vmatprep.subr.mxu0 0.0
      %3350 = vmatpush1.msra.mxu0 %v1059
      %3351 = vmatprep.subr.mxu0 0.0
      %3352 = vmatpush1.msra.mxu0 0.0
      %3353 = vmatprep.subr.mxu0 0.0
      %3354 = vmatpush1.msra.mxu0 0.0
      %3355 = vmatprep.subr.mxu0 0.0
      %3356 = vmatpush1.msra.mxu0 0.0
      %3357 = vmatprep.subr.mxu0 0.0
      %3358 = vmatpush1.msra.mxu0 0.0
      %3359 = vmatprep.subr.mxu0 0.0
      %3360 = vmatpush1.msra.mxu0 0.0
      %3361 = vmatprep.subr.mxu0 0.0
      %3362 = vmatpush1.msra.mxu0 0.0
      %3363 = vmatprep.subr.mxu0 0.0
      %3364 = vmatpush1.msra.mxu0 0.0
      %3365 = vmatprep.subr.mxu0 0.0
      %3366 = vmatpush1.msra.mxu0 0.0
      %3367 = vmatprep.subr.mxu0 0.0
      %3368 = vmatpush1.msra.mxu0 0.0
      %3369 = vmatprep.subr.mxu0 0.0
      %3370 = vmatpush1.msra.mxu0 0.0
      %3371 = vmatprep.subr.mxu0 0.0
      %3372 = vmatpush1.msra.mxu0 0.0
      %3373 = vmatprep.subr.mxu0 0.0
      %3374 = vmatpush1.msra.mxu0 0.0
      %3375 = vmatprep.subr.mxu0 0.0
      %3376 = vmatpush1.msra.mxu0 0.0
      %3377 = vmatprep.subr.mxu0 0.0
      %3378 = vmatpush1.msra.mxu0 0.0
      %3379 = vmatprep.subr.mxu0 0.0
      %3380 = vmatpush1.msra.mxu0 0.0
      %3381 = vmatprep.subr.mxu0 0.0
      %3382 = vmatpush1.msra.mxu0 0.0
      %3383 = vmatprep.mubr.f32.mxu0 0.0
      %3384 = vmatmul.mubr.f32.gmra.mrb[0].mxu0 %v963
      %v3385 = vpop.f32.mrb[0].mxu0
      %v3386 = vadd.f32 0.0, %v3385
      %v3387 = vpop.f32.mrb[0].mxu0
      %3388 = vdwg.mxu0
      %3389 = vmatprep.subr.mxu0 0.0
      %3390 = vmatpush1.msra.mxu0 %v1060
      %3391 = vmatprep.subr.mxu0 0.0
      %3392 = vmatpush1.msra.mxu0 %v1061
      %3393 = vmatprep.subr.mxu0 0.0
      %3394 = vmatpush1.msra.mxu0 %v1062
      %3395 = vmatprep.subr.mxu0 0.0
      %3396 = vmatpush1.msra.mxu0 %v1063
      %3397 = vmatprep.subr.mxu0 0.0
      %3398 = vmatpush1.msra.mxu0 %v1064
      %3399 = vmatprep.subr.mxu0 0.0
      %3400 = vmatpush1.msra.mxu0 %v1065
      %3401 = vmatprep.subr.mxu0 0.0
      %3402 = vmatpush1.msra.mxu0 %v1066
      %3403 = vmatprep.subr.mxu0 0.0
      %3404 = vmatpush1.msra.mxu0 %v1067
      %3405 = vmatprep.subr.mxu0 0.0
      %3406 = vmatpush1.msra.mxu0 %v1068
      %3407 = vmatprep.subr.mxu0 0.0
      %3408 = vmatpush1.msra.mxu0 %v1069
      %3409 = vmatprep.subr.mxu0 0.0
      %3410 = vmatpush1.msra.mxu0 %v1070
      %3411 = vmatprep.subr.mxu0 0.0
      %3412 = vmatpush1.msra.mxu0 %v1071
      %3413 = vmatprep.subr.mxu0 0.0
      %3414 = vmatpush1.msra.mxu0 %v1072
      %3415 = vmatprep.subr.mxu0 0.0
      %3416 = vmatpush1.msra.mxu0 %v1073
      %3417 = vmatprep.subr.mxu0 0.0
      %3418 = vmatpush1.msra.mxu0 %v1074
      %3419 = vmatprep.subr.mxu0 0.0
      %3420 = vmatpush1.msra.mxu0 %v1075
      %3421 = vmatprep.subr.mxu0 0.0
      %3422 = vmatpush1.msra.mxu0 0.0
      %3423 = vmatprep.subr.mxu0 0.0
      %3424 = vmatpush1.msra.mxu0 0.0
      %3425 = vmatprep.subr.mxu0 0.0
      %3426 = vmatpush1.msra.mxu0 0.0
      %3427 = vmatprep.subr.mxu0 0.0
      %3428 = vmatpush1.msra.mxu0 0.0
      %3429 = vmatprep.subr.mxu0 0.0
      %3430 = vmatpush1.msra.mxu0 0.0
      %3431 = vmatprep.subr.mxu0 0.0
      %3432 = vmatpush1.msra.mxu0 0.0
      %3433 = vmatprep.subr.mxu0 0.0
      %3434 = vmatpush1.msra.mxu0 0.0
      %3435 = vmatprep.subr.mxu0 0.0
      %3436 = vmatpush1.msra.mxu0 0.0
      %3437 = vmatprep.subr.mxu0 0.0
      %3438 = vmatpush1.msra.mxu0 0.0
      %3439 = vmatprep.subr.mxu0 0.0
      %3440 = vmatpush1.msra.mxu0 0.0
      %3441 = vmatprep.subr.mxu0 0.0
      %3442 = vmatpush1.msra.mxu0 0.0
      %3443 = vmatprep.subr.mxu0 0.0
      %3444 = vmatpush1.msra.mxu0 0.0
      %3445 = vmatprep.subr.mxu0 0.0
      %3446 = vmatpush1.msra.mxu0 0.0
      %3447 = vmatprep.subr.mxu0 0.0
      %3448 = vmatpush1.msra.mxu0 0.0
      %3449 = vmatprep.subr.mxu0 0.0
      %3450 = vmatpush1.msra.mxu0 0.0
      %3451 = vmatprep.subr.mxu0 0.0
      %3452 = vmatpush1.msra.mxu0 0.0
      %3453 = vmatprep.mubr.f32.mxu0 0.0
      %3454 = vmatmul.mubr.f32.gmra.mrb[0].mxu0 %v963
      %v3455 = vpop.f32.mrb[0].mxu0
      %v3456 = vadd.f32 0.0, %v3455
      %v3457 = vpop.f32.mrb[0].mxu0
      %3458 = vdwg.mxu0
      %3459 = vmatprep.subr.mxu0 0.0
      %3460 = vmatpush1.msra.mxu0 %v1076
      %3461 = vmatprep.subr.mxu0 0.0
      %3462 = vmatpush1.msra.mxu0 %v1077
      %3463 = vmatprep.subr.mxu0 0.0
      %3464 = vmatpush1.msra.mxu0 %v1078
      %3465 = vmatprep.subr.mxu0 0.0
      %3466 = vmatpush1.msra.mxu0 %v1079
      %3467 = vmatprep.subr.mxu0 0.0
      %3468 = vmatpush1.msra.mxu0 %v1080
      %3469 = vmatprep.subr.mxu0 0.0
      %3470 = vmatpush1.msra.mxu0 %v1081
      %3471 = vmatprep.subr.mxu0 0.0
      %3472 = vmatpush1.msra.mxu0 %v1082
      %3473 = vmatprep.subr.mxu0 0.0
      %3474 = vmatpush1.msra.mxu0 %v1083
      %3475 = vmatprep.subr.mxu0 0.0
      %3476 = vmatpush1.msra.mxu0 %v1084
      %3477 = vmatprep.subr.mxu0 0.0
      %3478 = vmatpush1.msra.mxu0 %v1085
      %3479 = vmatprep.subr.mxu0 0.0
      %3480 = vmatpush1.msra.mxu0 %v1086
      %3481 = vmatprep.subr.mxu0 0.0
      %3482 = vmatpush1.msra.mxu0 %v1087
      %3483 = vmatprep.subr.mxu0 0.0
      %3484 = vmatpush1.msra.mxu0 %v1088
      %3485 = vmatprep.subr.mxu0 0.0
      %3486 = vmatpush1.msra.mxu0 %v1089
      %3487 = vmatprep.subr.mxu0 0.0
      %3488 = vmatpush1.msra.mxu0 %v1090
      %3489 = vmatprep.subr.mxu0 0.0
      %3490 = vmatpush1.msra.mxu0 %v1091
      %3491 = vmatprep.subr.mxu0 0.0
      %3492 = vmatpush1.msra.mxu0 0.0
      %3493 = vmatprep.subr.mxu0 0.0
      %3494 = vmatpush1.msra.mxu0 0.0
      %3495 = vmatprep.subr.mxu0 0.0
      %3496 = vmatpush1.msra.mxu0 0.0
      %3497 = vmatprep.subr.mxu0 0.0
      %3498 = vmatpush1.msra.mxu0 0.0
      %3499 = vmatprep.subr.mxu0 0.0
      %3500 = vmatpush1.msra.mxu0 0.0
      %3501 = vmatprep.subr.mxu0 0.0
      %3502 = vmatpush1.msra.mxu0 0.0
      %3503 = vmatprep.subr.mxu0 0.0
      %3504 = vmatpush1.msra.mxu0 0.0
      %3505 = vmatprep.subr.mxu0 0.0
      %3506 = vmatpush1.msra.mxu0 0.0
      %3507 = vmatprep.subr.mxu0 0.0
      %3508 = vmatpush1.msra.mxu0 0.0
      %3509 = vmatprep.subr.mxu0 0.0
      %3510 = vmatpush1.msra.mxu0 0.0
      %3511 = vmatprep.subr.mxu0 0.0
      %3512 = vmatpush1.msra.mxu0 0.0
      %3513 = vmatprep.subr.mxu0 0.0
      %3514 = vmatpush1.msra.mxu0 0.0
      %3515 = vmatprep.subr.mxu0 0.0
      %3516 = vmatpush1.msra.mxu0 0.0
      %3517 = vmatprep.subr.mxu0 0.0
      %3518 = vmatpush1.msra.mxu0 0.0
      %3519 = vmatprep.subr.mxu0 0.0
      %3520 = vmatpush1.msra.mxu0 0.0
      %3521 = vmatprep.subr.mxu0 0.0
      %3522 = vmatpush1.msra.mxu0 0.0
      %3523 = vmatprep.mubr.f32.mxu0 0.0
      %3524 = vmatmul.mubr.f32.gmra.mrb[0].mxu0 %v963
      %v3525 = vpop.f32.mrb[0].mxu0
      %v3526 = vadd.f32 0.0, %v3525
      %v3527 = vpop.f32.mrb[0].mxu0
      %3528 = vdwg.mxu0
      %3529 = vmatprep.subr.mxu0 0.0
      %3530 = vmatpush1.msra.mxu0 %v1092
      %3531 = vmatprep.subr.mxu0 0.0
      %3532 = vmatpush1.msra.mxu0 %v1093
      %3533 = vmatprep.subr.mxu0 0.0
      %3534 = vmatpush1.msra.mxu0 %v1094
      %3535 = vmatprep.subr.mxu0 0.0
      %3536 = vmatpush1.msra.mxu0 %v1095
      %3537 = vmatprep.subr.mxu0 0.0
      %3538 = vmatpush1.msra.mxu0 %v1096
      %3539 = vmatprep.subr.mxu0 0.0
      %3540 = vmatpush1.msra.mxu0 %v1097
      %3541 = vmatprep.subr.mxu0 0.0
      %3542 = vmatpush1.msra.mxu0 %v1098
      %3543 = vmatprep.subr.mxu0 0.0
      %3544 = vmatpush1.msra.mxu0 %v1099
      %3545 = vmatprep.subr.mxu0 0.0
      %3546 = vmatpush1.msra.mxu0 %v1100
      %3547 = vmatprep.subr.mxu0 0.0
      %3548 = vmatpush1.msra.mxu0 %v1101
      %3549 = vmatprep.subr.mxu0 0.0
      %3550 = vmatpush1.msra.mxu0 %v1102
      %3551 = vmatprep.subr.mxu0 0.0
      %3552 = vmatpush1.msra.mxu0 %v1103
      %3553 = vmatprep.subr.mxu0 0.0
      %3554 = vmatpush1.msra.mxu0 %v1104
      %3555 = vmatprep.subr.mxu0 0.0
      %3556 = vmatpush1.msra.mxu0 %v1105
      %3557 = vmatprep.subr.mxu0 0.0
      %3558 = vmatpush1.msra.mxu0 %v1106
      %3559 = vmatprep.subr.mxu0 0.0
      %3560 = vmatpush1.msra.mxu0 %v1107
      %3561 = vmatprep.subr.mxu0 0.0
      %3562 = vmatpush1.msra.mxu0 0.0
      %3563 = vmatprep.subr.mxu0 0.0
      %3564 = vmatpush1.msra.mxu0 0.0
      %3565 = vmatprep.subr.mxu0 0.0
      %3566 = vmatpush1.msra.mxu0 0.0
      %3567 = vmatprep.subr.mxu0 0.0
      %3568 = vmatpush1.msra.mxu0 0.0
      %3569 = vmatprep.subr.mxu0 0.0
      %3570 = vmatpush1.msra.mxu0 0.0
      %3571 = vmatprep.subr.mxu0 0.0
      %3572 = vmatpush1.msra.mxu0 0.0
      %3573 = vmatprep.subr.mxu0 0.0
      %3574 = vmatpush1.msra.mxu0 0.0
      %3575 = vmatprep.subr.mxu0 0.0
      %3576 = vmatpush1.msra.mxu0 0.0
      %3577 = vmatprep.subr.mxu0 0.0
      %3578 = vmatpush1.msra.mxu0 0.0
      %3579 = vmatprep.subr.mxu0 0.0
      %3580 = vmatpush1.msra.mxu0 0.0
      %3581 = vmatprep.subr.mxu0 0.0
      %3582 = vmatpush1.msra.mxu0 0.0
      %3583 = vmatprep.subr.mxu0 0.0
      %3584 = vmatpush1.msra.mxu0 0.0
      %3585 = vmatprep.subr.mxu0 0.0
      %3586 = vmatpush1.msra.mxu0 0.0
      %3587 = vmatprep.subr.mxu0 0.0
      %3588 = vmatpush1.msra.mxu0 0.0
      %3589 = vmatprep.subr.mxu0 0.0
      %3590 = vmatpush1.msra.mxu0 0.0
      %3591 = vmatprep.subr.mxu0 0.0
      %3592 = vmatpush1.msra.mxu0 0.0
      %3593 = vmatprep.mubr.f32.mxu0 0.0
      %3594 = vmatmul.mubr.f32.gmra.mrb[0].mxu0 %v963
      %v3595 = vpop.f32.mrb[0].mxu0
      %v3596 = vadd.f32 0.0, %v3595
      %v3597 = vpop.f32.mrb[0].mxu0
      %3598 = vdwg.mxu0
      %3599 = vmatprep.subr.mxu0 0.0
      %3600 = vmatpush1.msra.mxu0 %v1108
      %3601 = vmatprep.subr.mxu0 0.0
      %3602 = vmatpush1.msra.mxu0 %v1109
      %3603 = vmatprep.subr.mxu0 0.0
      %3604 = vmatpush1.msra.mxu0 %v1110
      %3605 = vmatprep.subr.mxu0 0.0
      %3606 = vmatpush1.msra.mxu0 %v1111
      %3607 = vmatprep.subr.mxu0 0.0
      %3608 = vmatpush1.msra.mxu0 %v1112
      %3609 = vmatprep.subr.mxu0 0.0
      %3610 = vmatpush1.msra.mxu0 %v1113
      %3611 = vmatprep.subr.mxu0 0.0
      %3612 = vmatpush1.msra.mxu0 %v1114
      %3613 = vmatprep.subr.mxu0 0.0
      %3614 = vmatpush1.msra.mxu0 %v1115
      %3615 = vmatprep.subr.mxu0 0.0
      %3616 = vmatpush1.msra.mxu0 %v1116
      %3617 = vmatprep.subr.mxu0 0.0
      %3618 = vmatpush1.msra.mxu0 %v1117
      %3619 = vmatprep.subr.mxu0 0.0
      %3620 = vmatpush1.msra.mxu0 %v1118
      %3621 = vmatprep.subr.mxu0 0.0
      %3622 = vmatpush1.msra.mxu0 %v1119
      %3623 = vmatprep.subr.mxu0 0.0
      %3624 = vmatpush1.msra.mxu0 %v1120
      %3625 = vmatprep.subr.mxu0 0.0
      %3626 = vmatpush1.msra.mxu0 %v1121
      %3627 = vmatprep.subr.mxu0 0.0
      %3628 = vmatpush1.msra.mxu0 %v1122
      %3629 = vmatprep.subr.mxu0 0.0
      %3630 = vmatpush1.msra.mxu0 %v1123
      %3631 = vmatprep.subr.mxu0 0.0
      %3632 = vmatpush1.msra.mxu0 0.0
      %3633 = vmatprep.subr.mxu0 0.0
      %3634 = vmatpush1.msra.mxu0 0.0
      %3635 = vmatprep.subr.mxu0 0.0
      %3636 = vmatpush1.msra.mxu0 0.0
      %3637 = vmatprep.subr.mxu0 0.0
      %3638 = vmatpush1.msra.mxu0 0.0
      %3639 = vmatprep.subr.mxu0 0.0
      %3640 = vmatpush1.msra.mxu0 0.0
      %3641 = vmatprep.subr.mxu0 0.0
      %3642 = vmatpush1.msra.mxu0 0.0
      %3643 = vmatprep.subr.mxu0 0.0
      %3644 = vmatpush1.msra.mxu0 0.0
      %3645 = vmatprep.subr.mxu0 0.0
      %3646 = vmatpush1.msra.mxu0 0.0
      %3647 = vmatprep.subr.mxu0 0.0
      %3648 = vmatpush1.msra.mxu0 0.0
      %3649 = vmatprep.subr.mxu0 0.0
      %3650 = vmatpush1.msra.mxu0 0.0
      %3651 = vmatprep.subr.mxu0 0.0
      %3652 = vmatpush1.msra.mxu0 0.0
      %3653 = vmatprep.subr.mxu0 0.0
      %3654 = vmatpush1.msra.mxu0 0.0
      %3655 = vmatprep.subr.mxu0 0.0
      %3656 = vmatpush1.msra.mxu0 0.0
      %3657 = vmatprep.subr.mxu0 0.0
      %3658 = vmatpush1.msra.mxu0 0.0
      %3659 = vmatprep.subr.mxu0 0.0
      %3660 = vmatpush1.msra.mxu0 0.0
      %3661 = vmatprep.subr.mxu0 0.0
      %3662 = vmatpush1.msra.mxu0 0.0
      %3663 = vmatprep.mubr.f32.mxu0 0.0
      %3664 = vmatmul.mubr.f32.gmra.mrb[0].mxu0 %v963
      %v3665 = vpop.f32.mrb[0].mxu0
      %v3666 = vadd.f32 0.0, %v3665
      %v3667 = vpop.f32.mrb[0].mxu0
      %3668 = vdwg.mxu0
      %3669 = vmatprep.subr.mxu0 0.0
      %3670 = vmatpush1.msra.mxu0 %v1124
      %3671 = vmatprep.subr.mxu0 0.0
      %3672 = vmatpush1.msra.mxu0 %v1125
      %3673 = vmatprep.subr.mxu0 0.0
      %3674 = vmatpush1.msra.mxu0 %v1126
      %3675 = vmatprep.subr.mxu0 0.0
      %3676 = vmatpush1.msra.mxu0 %v1127
      %3677 = vmatprep.subr.mxu0 0.0
      %3678 = vmatpush1.msra.mxu0 %v1128
      %3679 = vmatprep.subr.mxu0 0.0
      %3680 = vmatpush1.msra.mxu0 %v1129
      %3681 = vmatprep.subr.mxu0 0.0
      %3682 = vmatpush1.msra.mxu0 %v1130
      %3683 = vmatprep.subr.mxu0 0.0
      %3684 = vmatpush1.msra.mxu0 %v1131
      %3685 = vmatprep.subr.mxu0 0.0
      %3686 = vmatpush1.msra.mxu0 %v1132
      %3687 = vmatprep.subr.mxu0 0.0
      %3688 = vmatpush1.msra.mxu0 %v1133
      %3689 = vmatprep.subr.mxu0 0.0
      %3690 = vmatpush1.msra.mxu0 %v1134
      %3691 = vmatprep.subr.mxu0 0.0
      %3692 = vmatpush1.msra.mxu0 %v1135
      %3693 = vmatprep.subr.mxu0 0.0
      %3694 = vmatpush1.msra.mxu0 %v1136
      %3695 = vmatprep.subr.mxu0 0.0
      %3696 = vmatpush1.msra.mxu0 %v1137
      %3697 = vmatprep.subr.mxu0 0.0
      %3698 = vmatpush1.msra.mxu0 %v1138
      %3699 = vmatprep.subr.mxu0 0.0
      %3700 = vmatpush1.msra.mxu0 %v1139
      %3701 = vmatprep.subr.mxu0 0.0
      %3702 = vmatpush1.msra.mxu0 0.0
      %3703 = vmatprep.subr.mxu0 0.0
      %3704 = vmatpush1.msra.mxu0 0.0
      %3705 = vmatprep.subr.mxu0 0.0
      %3706 = vmatpush1.msra.mxu0 0.0
      %3707 = vmatprep.subr.mxu0 0.0
      %3708 = vmatpush1.msra.mxu0 0.0
      %3709 = vmatprep.subr.mxu0 0.0
      %3710 = vmatpush1.msra.mxu0 0.0
      %3711 = vmatprep.subr.mxu0 0.0
      %3712 = vmatpush1.msra.mxu0 0.0
      %3713 = vmatprep.subr.mxu0 0.0
      %3714 = vmatpush1.msra.mxu0 0.0
      %3715 = vmatprep.subr.mxu0 0.0
      %3716 = vmatpush1.msra.mxu0 0.0
      %3717 = vmatprep.subr.mxu0 0.0
      %3718 = vmatpush1.msra.mxu0 0.0
      %3719 = vmatprep.subr.mxu0 0.0
      %3720 = vmatpush1.msra.mxu0 0.0
      %3721 = vmatprep.subr.mxu0 0.0
      %3722 = vmatpush1.msra.mxu0 0.0
      %3723 = vmatprep.subr.mxu0 0.0
      %3724 = vmatpush1.msra.mxu0 0.0
      %3725 = vmatprep.subr.mxu0 0.0
      %3726 = vmatpush1.msra.mxu0 0.0
      %3727 = vmatprep.subr.mxu0 0.0
      %3728 = vmatpush1.msra.mxu0 0.0
      %3729 = vmatprep.subr.mxu0 0.0
      %3730 = vmatpush1.msra.mxu0 0.0
      %3731 = vmatprep.subr.mxu0 0.0
      %3732 = vmatpush1.msra.mxu0 0.0
      %3733 = vmatprep.mubr.f32.mxu0 0.0
      %3734 = vmatmul.mubr.f32.gmra.mrb[0].mxu0 %v963
      %v3735 = vpop.f32.mrb[0].mxu0
      %v3736 = vadd.f32 0.0, %v3735
      %v3737 = vpop.f32.mrb[0].mxu0
      %3738 = vdwg.mxu0
      %3739 = vmatprep.subr.mxu0 0.0
      %3740 = vmatpush1.msra.mxu0 %v1140
      %3741 = vmatprep.subr.mxu0 0.0
      %3742 = vmatpush1.msra.mxu0 %v1141
      %3743 = vmatprep.subr.mxu0 0.0
      %3744 = vmatpush1.msra.mxu0 %v1142
      %3745 = vmatprep.subr.mxu0 0.0
      %3746 = vmatpush1.msra.mxu0 %v1143
      %3747 = vmatprep.subr.mxu0 0.0
      %3748 = vmatpush1.msra.mxu0 %v1144
      %3749 = vmatprep.subr.mxu0 0.0
      %3750 = vmatpush1.msra.mxu0 %v1145
      %3751 = vmatprep.subr.mxu0 0.0
      %3752 = vmatpush1.msra.mxu0 %v1146
      %3753 = vmatprep.subr.mxu0 0.0
      %3754 = vmatpush1.msra.mxu0 %v1147
      %3755 = vmatprep.subr.mxu0 0.0
      %3756 = vmatpush1.msra.mxu0 %v1148
      %3757 = vmatprep.subr.mxu0 0.0
      %3758 = vmatpush1.msra.mxu0 %v1149
      %3759 = vmatprep.subr.mxu0 0.0
      %3760 = vmatpush1.msra.mxu0 %v1150
      %3761 = vmatprep.subr.mxu0 0.0
      %3762 = vmatpush1.msra.mxu0 %v1151
      %3763 = vmatprep.subr.mxu0 0.0
      %3764 = vmatpush1.msra.mxu0 %v1152
      %3765 = vmatprep.subr.mxu0 0.0
      %3766 = vmatpush1.msra.mxu0 %v1153
      %3767 = vmatprep.subr.mxu0 0.0
      %3768 = vmatpush1.msra.mxu0 %v1154
      %3769 = vmatprep.subr.mxu0 0.0
      %3770 = vmatpush1.msra.mxu0 %v1155
      %3771 = vmatprep.subr.mxu0 0.0
      %3772 = vmatpush1.msra.mxu0 0.0
      %3773 = vmatprep.subr.mxu0 0.0
      %3774 = vmatpush1.msra.mxu0 0.0
      %3775 = vmatprep.subr.mxu0 0.0
      %3776 = vmatpush1.msra.mxu0 0.0
      %3777 = vmatprep.subr.mxu0 0.0
      %3778 = vmatpush1.msra.mxu0 0.0
      %3779 = vmatprep.subr.mxu0 0.0
      %3780 = vmatpush1.msra.mxu0 0.0
      %3781 = vmatprep.subr.mxu0 0.0
      %3782 = vmatpush1.msra.mxu0 0.0
      %3783 = vmatprep.subr.mxu0 0.0
      %3784 = vmatpush1.msra.mxu0 0.0
      %3785 = vmatprep.subr.mxu0 0.0
      %3786 = vmatpush1.msra.mxu0 0.0
      %3787 = vmatprep.subr.mxu0 0.0
      %3788 = vmatpush1.msra.mxu0 0.0
      %3789 = vmatprep.subr.mxu0 0.0
      %3790 = vmatpush1.msra.mxu0 0.0
      %3791 = vmatprep.subr.mxu0 0.0
      %3792 = vmatpush1.msra.mxu0 0.0
      %3793 = vmatprep.subr.mxu0 0.0
      %3794 = vmatpush1.msra.mxu0 0.0
      %3795 = vmatprep.subr.mxu0 0.0
      %3796 = vmatpush1.msra.mxu0 0.0
      %3797 = vmatprep.subr.mxu0 0.0
      %3798 = vmatpush1.msra.mxu0 0.0
      %3799 = vmatprep.subr.mxu0 0.0
      %3800 = vmatpush1.msra.mxu0 0.0
      %3801 = vmatprep.subr.mxu0 0.0
      %3802 = vmatpush1.msra.mxu0 0.0
      %3803 = vmatprep.mubr.f32.mxu0 0.0
      %3804 = vmatmul.mubr.f32.gmra.mrb[0].mxu0 %v963
      %v3805 = vpop.f32.mrb[0].mxu0
      %v3806 = vadd.f32 0.0, %v3805
      %v3807 = vpop.f32.mrb[0].mxu0
      %3808 = vdwg.mxu0
      %v3810 = vsel %vm2028, %v3036, 0
      %v3813 = vsel %vm2028, %v3316, 0
      %3815 = vmatprep.subr.mxu0 0.0
      %3816 = vmatpush1.xpose.msra.mxu0 %v3813
      %3817 = vmatprep.subr.mxu0 0.0
      %3818 = vmatpush1.xpose.msra.mxu0 0.0
      %3819 = vmatprep.subr.mxu0 0.0
      %3820 = vmatpush1.xpose.msra.mxu0 0.0
      %3821 = vmatprep.subr.mxu0 0.0
      %3822 = vmatpush1.xpose.msra.mxu0 0.0
      %3823 = vmatprep.subr.mxu0 0.0
      %3824 = vmatpush1.xpose.msra.mxu0 0.0
      %3825 = vmatprep.subr.mxu0 0.0
      %3826 = vmatpush1.xpose.msra.mxu0 0.0
      %3827 = vmatprep.subr.mxu0 0.0
      %3828 = vmatpush1.xpose.msra.mxu0 0.0
      %3829 = vmatprep.subr.mxu0 0.0
      %3830 = vmatpush1.xpose.msra.mxu0 0.0
      %3831 = vmatprep.subr.mxu0 0.0
      %3832 = vmatpush1.xpose.msra.mxu0 0.0
      %3833 = vmatprep.subr.mxu0 0.0
      %3834 = vmatpush1.xpose.msra.mxu0 0.0
      %3835 = vmatprep.subr.mxu0 0.0
      %3836 = vmatpush1.xpose.msra.mxu0 0.0
      %3837 = vmatprep.subr.mxu0 0.0
      %3838 = vmatpush1.xpose.msra.mxu0 0.0
      %3839 = vmatprep.subr.mxu0 0.0
      %3840 = vmatpush1.xpose.msra.mxu0 0.0
      %3841 = vmatprep.subr.mxu0 0.0
      %3842 = vmatpush1.xpose.msra.mxu0 0.0
      %3843 = vmatprep.subr.mxu0 0.0
      %3844 = vmatpush1.xpose.msra.mxu0 0.0
      %3845 = vmatprep.subr.mxu0 0.0
      %3846 = vmatpush1.xpose.msra.mxu0 0.0
      %3847 = vmatprep.subr.mxu0 0.0
      %3848 = vmatpush1.xpose.msra.mxu0 0.0
      %3849 = vmatprep.subr.mxu0 0.0
      %3850 = vmatpush1.xpose.msra.mxu0 0.0
      %3851 = vmatprep.subr.mxu0 0.0
      %3852 = vmatpush1.xpose.msra.mxu0 0.0
      %3853 = vmatprep.subr.mxu0 0.0
      %3854 = vmatpush1.xpose.msra.mxu0 0.0
      %3855 = vmatprep.subr.mxu0 0.0
      %3856 = vmatpush1.xpose.msra.mxu0 0.0
      %3857 = vmatprep.subr.mxu0 0.0
      %3858 = vmatpush1.xpose.msra.mxu0 0.0
      %3859 = vmatprep.subr.mxu0 0.0
      %3860 = vmatpush1.xpose.msra.mxu0 0.0
      %3861 = vmatprep.subr.mxu0 0.0
      %3862 = vmatpush1.xpose.msra.mxu0 0.0
      %3863 = vmatprep.subr.mxu0 0.0
      %3864 = vmatpush1.xpose.msra.mxu0 0.0
      %3865 = vmatprep.subr.mxu0 0.0
      %3866 = vmatpush1.xpose.msra.mxu0 0.0
      %3867 = vmatprep.subr.mxu0 0.0
      %3868 = vmatpush1.xpose.msra.mxu0 0.0
      %3869 = vmatprep.subr.mxu0 0.0
      %3870 = vmatpush1.xpose.msra.mxu0 0.0
      %3871 = vmatprep.subr.mxu0 0.0
      %3872 = vmatpush1.xpose.msra.mxu0 0.0
      %3873 = vmatprep.subr.mxu0 0.0
      %3874 = vmatpush1.xpose.msra.mxu0 0.0
      %3875 = vmatprep.subr.mxu0 0.0
      %3876 = vmatpush1.xpose.msra.mxu0 0.0
      %3877 = vmatprep.subr.mxu0 0.0
      %3878 = vmatpush1.xpose.msra.mxu0 0.0
      %3879 = vmatprep.mubr.f32.mxu0 0.0
      %3880 = vmatmul.mubr.f32.gmra.mrb[0].mxu0 %v3810
      %v3881 = vpop.f32.mrb[0].mxu0
      %v3882 = vadd.f32 0.0, %v3881
      %v3883 = vpop.f32.mrb[0].mxu0
      %3884 = vdwg.mxu0
      %v3886 = vsel %vm2028, %v3106, 0
      %v3889 = vsel %vm2028, %v3386, 0
      %3891 = vmatprep.subr.mxu0 0.0
      %3892 = vmatpush1.xpose.msra.mxu0 %v3889
      %3893 = vmatprep.subr.mxu0 0.0
      %3894 = vmatpush1.xpose.msra.mxu0 0.0
      %3895 = vmatprep.subr.mxu0 0.0
      %3896 = vmatpush1.xpose.msra.mxu0 0.0
      %3897 = vmatprep.subr.mxu0 0.0
      %3898 = vmatpush1.xpose.msra.mxu0 0.0
      %3899 = vmatprep.subr.mxu0 0.0
      %3900 = vmatpush1.xpose.msra.mxu0 0.0
      %3901 = vmatprep.subr.mxu0 0.0
      %3902 = vmatpush1.xpose.msra.mxu0 0.0
      %3903 = vmatprep.subr.mxu0 0.0
      %3904 = vmatpush1.xpose.msra.mxu0 0.0
      %3905 = vmatprep.subr.mxu0 0.0
      %3906 = vmatpush1.xpose.msra.mxu0 0.0
      %3907 = vmatprep.subr.mxu0 0.0
      %3908 = vmatpush1.xpose.msra.mxu0 0.0
      %3909 = vmatprep.subr.mxu0 0.0
      %3910 = vmatpush1.xpose.msra.mxu0 0.0
      %3911 = vmatprep.subr.mxu0 0.0
      %3912 = vmatpush1.xpose.msra.mxu0 0.0
      %3913 = vmatprep.subr.mxu0 0.0
      %3914 = vmatpush1.xpose.msra.mxu0 0.0
      %3915 = vmatprep.subr.mxu0 0.0
      %3916 = vmatpush1.xpose.msra.mxu0 0.0
      %3917 = vmatprep.subr.mxu0 0.0
      %3918 = vmatpush1.xpose.msra.mxu0 0.0
      %3919 = vmatprep.subr.mxu0 0.0
      %3920 = vmatpush1.xpose.msra.mxu0 0.0
      %3921 = vmatprep.subr.mxu0 0.0
      %3922 = vmatpush1.xpose.msra.mxu0 0.0
      %3923 = vmatprep.subr.mxu0 0.0
      %3924 = vmatpush1.xpose.msra.mxu0 0.0
      %3925 = vmatprep.subr.mxu0 0.0
      %3926 = vmatpush1.xpose.msra.mxu0 0.0
      %3927 = vmatprep.subr.mxu0 0.0
      %3928 = vmatpush1.xpose.msra.mxu0 0.0
      %3929 = vmatprep.subr.mxu0 0.0
      %3930 = vmatpush1.xpose.msra.mxu0 0.0
      %3931 = vmatprep.subr.mxu0 0.0
      %3932 = vmatpush1.xpose.msra.mxu0 0.0
      %3933 = vmatprep.subr.mxu0 0.0
      %3934 = vmatpush1.xpose.msra.mxu0 0.0
      %3935 = vmatprep.subr.mxu0 0.0
      %3936 = vmatpush1.xpose.msra.mxu0 0.0
      %3937 = vmatprep.subr.mxu0 0.0
      %3938 = vmatpush1.xpose.msra.mxu0 0.0
      %3939 = vmatprep.subr.mxu0 0.0
      %3940 = vmatpush1.xpose.msra.mxu0 0.0
      %3941 = vmatprep.subr.mxu0 0.0
      %3942 = vmatpush1.xpose.msra.mxu0 0.0
      %3943 = vmatprep.subr.mxu0 0.0
      %3944 = vmatpush1.xpose.msra.mxu0 0.0
      %3945 = vmatprep.subr.mxu0 0.0
      %3946 = vmatpush1.xpose.msra.mxu0 0.0
      %3947 = vmatprep.subr.mxu0 0.0
      %3948 = vmatpush1.xpose.msra.mxu0 0.0
      %3949 = vmatprep.subr.mxu0 0.0
      %3950 = vmatpush1.xpose.msra.mxu0 0.0
      %3951 = vmatprep.subr.mxu0 0.0
      %3952 = vmatpush1.xpose.msra.mxu0 0.0
      %3953 = vmatprep.subr.mxu0 0.0
      %3954 = vmatpush1.xpose.msra.mxu0 0.0
      %3955 = vmatprep.mubr.f32.mxu0 0.0
      %3956 = vmatmul.mubr.f32.gmra.mrb[0].mxu0 %v3886
      %v3957 = vpop.f32.mrb[0].mxu0
      %v3958 = vadd.f32 0.0, %v3957
      %v3959 = vpop.f32.mrb[0].mxu0
      %3960 = vdwg.mxu0
      %v3962 = vsel %vm2028, %v3176, 0
      %v3965 = vsel %vm2028, %v3456, 0
      %3967 = vmatprep.subr.mxu0 0.0
      %3968 = vmatpush1.xpose.msra.mxu0 %v3965
      %3969 = vmatprep.subr.mxu0 0.0
      %3970 = vmatpush1.xpose.msra.mxu0 0.0
      %3971 = vmatprep.subr.mxu0 0.0
      %3972 = vmatpush1.xpose.msra.mxu0 0.0
      %3973 = vmatprep.subr.mxu0 0.0
      %3974 = vmatpush1.xpose.msra.mxu0 0.0
      %3975 = vmatprep.subr.mxu0 0.0
      %3976 = vmatpush1.xpose.msra.mxu0 0.0
      %3977 = vmatprep.subr.mxu0 0.0
      %3978 = vmatpush1.xpose.msra.mxu0 0.0
      %3979 = vmatprep.subr.mxu0 0.0
      %3980 = vmatpush1.xpose.msra.mxu0 0.0
      %3981 = vmatprep.subr.mxu0 0.0
      %3982 = vmatpush1.xpose.msra.mxu0 0.0
      %3983 = vmatprep.subr.mxu0 0.0
      %3984 = vmatpush1.xpose.msra.mxu0 0.0
      %3985 = vmatprep.subr.mxu0 0.0
      %3986 = vmatpush1.xpose.msra.mxu0 0.0
      %3987 = vmatprep.subr.mxu0 0.0
      %3988 = vmatpush1.xpose.msra.mxu0 0.0
      %3989 = vmatprep.subr.mxu0 0.0
      %3990 = vmatpush1.xpose.msra.mxu0 0.0
      %3991 = vmatprep.subr.mxu0 0.0
      %3992 = vmatpush1.xpose.msra.mxu0 0.0
      %3993 = vmatprep.subr.mxu0 0.0
      %3994 = vmatpush1.xpose.msra.mxu0 0.0
      %3995 = vmatprep.subr.mxu0 0.0
      %3996 = vmatpush1.xpose.msra.mxu0 0.0
      %3997 = vmatprep.subr.mxu0 0.0
      %3998 = vmatpush1.xpose.msra.mxu0 0.0
      %3999 = vmatprep.subr.mxu0 0.0
      %4000 = vmatpush1.xpose.msra.mxu0 0.0
      %4001 = vmatprep.subr.mxu0 0.0
      %4002 = vmatpush1.xpose.msra.mxu0 0.0
      %4003 = vmatprep.subr.mxu0 0.0
      %4004 = vmatpush1.xpose.msra.mxu0 0.0
      %4005 = vmatprep.subr.mxu0 0.0
      %4006 = vmatpush1.xpose.msra.mxu0 0.0
      %4007 = vmatprep.subr.mxu0 0.0
      %4008 = vmatpush1.xpose.msra.mxu0 0.0
      %4009 = vmatprep.subr.mxu0 0.0
      %4010 = vmatpush1.xpose.msra.mxu0 0.0
      %4011 = vmatprep.subr.mxu0 0.0
      %4012 = vmatpush1.xpose.msra.mxu0 0.0
      %4013 = vmatprep.subr.mxu0 0.0
      %4014 = vmatpush1.xpose.msra.mxu0 0.0
      %4015 = vmatprep.subr.mxu0 0.0
      %4016 = vmatpush1.xpose.msra.mxu0 0.0
      %4017 = vmatprep.subr.mxu0 0.0
      %4018 = vmatpush1.xpose.msra.mxu0 0.0
      %4019 = vmatprep.subr.mxu0 0.0
      %4020 = vmatpush1.xpose.msra.mxu0 0.0
      %4021 = vmatprep.subr.mxu0 0.0
      %4022 = vmatpush1.xpose.msra.mxu0 0.0
      %4023 = vmatprep.subr.mxu0 0.0
      %4024 = vmatpush1.xpose.msra.mxu0 0.0
      %4025 = vmatprep.subr.mxu0 0.0
      %4026 = vmatpush1.xpose.msra.mxu0 0.0
      %4027 = vmatprep.subr.mxu0 0.0
      %4028 = vmatpush1.xpose.msra.mxu0 0.0
      %4029 = vmatprep.subr.mxu0 0.0
      %4030 = vmatpush1.xpose.msra.mxu0 0.0
      %4031 = vmatprep.mubr.f32.mxu0 0.0
      %4032 = vmatmul.mubr.f32.gmra.mrb[0].mxu0 %v3962
      %v4033 = vpop.f32.mrb[0].mxu0
      %v4034 = vadd.f32 0.0, %v4033
      %v4035 = vpop.f32.mrb[0].mxu0
      %4036 = vdwg.mxu0
      %v4038 = vsel %vm2028, %v3246, 0
      %v4041 = vsel %vm2028, %v3526, 0
      %4043 = vmatprep.subr.mxu0 0.0
      %4044 = vmatpush1.xpose.msra.mxu0 %v4041
      %4045 = vmatprep.subr.mxu0 0.0
      %4046 = vmatpush1.xpose.msra.mxu0 0.0
      %4047 = vmatprep.subr.mxu0 0.0
      %4048 = vmatpush1.xpose.msra.mxu0 0.0
      %4049 = vmatprep.subr.mxu0 0.0
      %4050 = vmatpush1.xpose.msra.mxu0 0.0
      %4051 = vmatprep.subr.mxu0 0.0
      %4052 = vmatpush1.xpose.msra.mxu0 0.0
      %4053 = vmatprep.subr.mxu0 0.0
      %4054 = vmatpush1.xpose.msra.mxu0 0.0
      %4055 = vmatprep.subr.mxu0 0.0
      %4056 = vmatpush1.xpose.msra.mxu0 0.0
      %4057 = vmatprep.subr.mxu0 0.0
      %4058 = vmatpush1.xpose.msra.mxu0 0.0
      %4059 = vmatprep.subr.mxu0 0.0
      %4060 = vmatpush1.xpose.msra.mxu0 0.0
      %4061 = vmatprep.subr.mxu0 0.0
      %4062 = vmatpush1.xpose.msra.mxu0 0.0
      %4063 = vmatprep.subr.mxu0 0.0
      %4064 = vmatpush1.xpose.msra.mxu0 0.0
      %4065 = vmatprep.subr.mxu0 0.0
      %4066 = vmatpush1.xpose.msra.mxu0 0.0
      %4067 = vmatprep.subr.mxu0 0.0
      %4068 = vmatpush1.xpose.msra.mxu0 0.0
      %4069 = vmatprep.subr.mxu0 0.0
      %4070 = vmatpush1.xpose.msra.mxu0 0.0
      %4071 = vmatprep.subr.mxu0 0.0
      %4072 = vmatpush1.xpose.msra.mxu0 0.0
      %4073 = vmatprep.subr.mxu0 0.0
      %4074 = vmatpush1.xpose.msra.mxu0 0.0
      %4075 = vmatprep.subr.mxu0 0.0
      %4076 = vmatpush1.xpose.msra.mxu0 0.0
      %4077 = vmatprep.subr.mxu0 0.0
      %4078 = vmatpush1.xpose.msra.mxu0 0.0
      %4079 = vmatprep.subr.mxu0 0.0
      %4080 = vmatpush1.xpose.msra.mxu0 0.0
      %4081 = vmatprep.subr.mxu0 0.0
      %4082 = vmatpush1.xpose.msra.mxu0 0.0
      %4083 = vmatprep.subr.mxu0 0.0
      %4084 = vmatpush1.xpose.msra.mxu0 0.0
      %4085 = vmatprep.subr.mxu0 0.0
      %4086 = vmatpush1.xpose.msra.mxu0 0.0
      %4087 = vmatprep.subr.mxu0 0.0
      %4088 = vmatpush1.xpose.msra.mxu0 0.0
      %4089 = vmatprep.subr.mxu0 0.0
      %4090 = vmatpush1.xpose.msra.mxu0 0.0
      %4091 = vmatprep.subr.mxu0 0.0
      %4092 = vmatpush1.xpose.msra.mxu0 0.0
      %4093 = vmatprep.subr.mxu0 0.0
      %4094 = vmatpush1.xpose.msra.mxu0 0.0
      %4095 = vmatprep.subr.mxu0 0.0
      %4096 = vmatpush1.xpose.msra.mxu0 0.0
      %4097 = vmatprep.subr.mxu0 0.0
      %4098 = vmatpush1.xpose.msra.mxu0 0.0
      %4099 = vmatprep.subr.mxu0 0.0
      %4100 = vmatpush1.xpose.msra.mxu0 0.0
      %4101 = vmatprep.subr.mxu0 0.0
      %4102 = vmatpush1.xpose.msra.mxu0 0.0
      %4103 = vmatprep.subr.mxu0 0.0
      %4104 = vmatpush1.xpose.msra.mxu0 0.0
      %4105 = vmatprep.subr.mxu0 0.0
      %4106 = vmatpush1.xpose.msra.mxu0 0.0
      %4107 = vmatprep.mubr.f32.mxu0 0.0
      %4108 = vmatmul.mubr.f32.gmra.mrb[0].mxu0 %v4038
      %v4109 = vpop.f32.mrb[0].mxu0
      %v4110 = vadd.f32 0.0, %v4109
      %v4111 = vpop.f32.mrb[0].mxu0
      %4112 = vdwg.mxu0
      %v4113 = vmul.f32 %v3882, 0.125
      %v4114 = vmul.f32 %v3958, 0.125
      %v4115 = vmul.f32 %v4034, 0.125
      %v4116 = vmul.f32 %v4110, 0.125
      %v4117 = vsel %vm2337, %v4113, -inf
      %4118 = vmax.xlane.f32.xlu0 %v4117
      %v4119 = vpop.xlane.xlu0 %4118
      %v4120 = vsel %vm2337, %v4114, -inf
      %4121 = vmax.xlane.f32.xlu0 %v4120
      %v4122 = vpop.xlane.xlu0 %4121
      %v4123 = vsel %vm2337, %v4115, -inf
      %4124 = vmax.xlane.f32.xlu0 %v4123
      %v4125 = vpop.xlane.xlu0 %4124
      %v4126 = vsel %vm2337, %v4116, -inf
      %4127 = vmax.xlane.f32.xlu0 %v4126
      %v4128 = vpop.xlane.xlu0 %4127
      %v4129 = vsub.f32 %v4113, %v4119
      %v4130 = vsub.f32 %v4114, %v4122
      %v4131 = vsub.f32 %v4115, %v4125
      %v4132 = vsub.f32 %v4116, %v4128
      %v4133 = vmul.f32 %v4129, 1.442695
      %v4134 = vpow.pop %v4133
      %v4135 = vmul.f32 %v4130, 1.442695
      %v4136 = vpow.pop %v4135
      %v4137 = vmul.f32 %v4131, 1.442695
      %v4138 = vpow.pop %v4137
      %v4139 = vmul.f32 %v4132, 1.442695
      %v4140 = vpow.pop %v4139
      %v4141 = vsel %vm2337, %v4134, 0.0
      %4142 = vadd.xlane.f32.xlu0 %v4141
      %v4143 = vpop.xlane.xlu0 %4142
      %v4144 = vsel %vm2337, %v4136, 0.0
      %4145 = vadd.xlane.f32.xlu0 %v4144
      %v4146 = vpop.xlane.xlu0 %4145
      %v4147 = vsel %vm2337, %v4138, 0.0
      %4148 = vadd.xlane.f32.xlu0 %v4147
      %v4149 = vpop.xlane.xlu0 %4148
      %v4150 = vsel %vm2337, %v4140, 0.0
      %4151 = vadd.xlane.f32.xlu0 %v4150
      %v4152 = vpop.xlane.xlu0 %4151
      %v4153 = vrcp.pop %v4143
      %v4154 = vrcp.pop %v4146
      %v4155 = vrcp.pop %v4149
      %v4156 = vrcp.pop %v4152
      %v4157 = vmul.f32 %v4134, %v4153
      %v4158 = vmul.f32 %v4136, %v4154
      %v4159 = vmul.f32 %v4138, %v4155
      %v4160 = vmul.f32 %v4140, %v4156
      %v4162 = vsel %vm2337, %v4157, 0
      %4164 = vmatprep.subr.mxu0 0.0
      %4165 = vmatpush1.msra.mxu0 %v3596
      %4166 = vmatprep.subr.mxu0 0.0
      %4167 = vmatpush1.msra.mxu0 0.0
      %4168 = vmatprep.subr.mxu0 0.0
      %4169 = vmatpush1.msra.mxu0 0.0
      %4170 = vmatprep.subr.mxu0 0.0
      %4171 = vmatpush1.msra.mxu0 0.0
      %4172 = vmatprep.subr.mxu0 0.0
      %4173 = vmatpush1.msra.mxu0 0.0
      %4174 = vmatprep.subr.mxu0 0.0
      %4175 = vmatpush1.msra.mxu0 0.0
      %4176 = vmatprep.subr.mxu0 0.0
      %4177 = vmatpush1.msra.mxu0 0.0
      %4178 = vmatprep.subr.mxu0 0.0
      %4179 = vmatpush1.msra.mxu0 0.0
      %4180 = vmatprep.subr.mxu0 0.0
      %4181 = vmatpush1.msra.mxu0 0.0
      %4182 = vmatprep.subr.mxu0 0.0
      %4183 = vmatpush1.msra.mxu0 0.0
      %4184 = vmatprep.subr.mxu0 0.0
      %4185 = vmatpush1.msra.mxu0 0.0
      %4186 = vmatprep.subr.mxu0 0.0
      %4187 = vmatpush1.msra.mxu0 0.0
      %4188 = vmatprep.subr.mxu0 0.0
      %4189 = vmatpush1.msra.mxu0 0.0
      %4190 = vmatprep.subr.mxu0 0.0
      %4191 = vmatpush1.msra.mxu0 0.0
      %4192 = vmatprep.subr.mxu0 0.0
      %4193 = vmatpush1.msra.mxu0 0.0
      %4194 = vmatprep.subr.mxu0 0.0
      %4195 = vmatpush1.msra.mxu0 0.0
      %4196 = vmatprep.subr.mxu0 0.0
      %4197 = vmatpush1.msra.mxu0 0.0
      %4198 = vmatprep.subr.mxu0 0.0
      %4199 = vmatpush1.msra.mxu0 0.0
      %4200 = vmatprep.subr.mxu0 0.0
      %4201 = vmatpush1.msra.mxu0 0.0
      %4202 = vmatprep.subr.mxu0 0.0
      %4203 = vmatpush1.msra.mxu0 0.0
      %4204 = vmatprep.subr.mxu0 0.0
      %4205 = vmatpush1.msra.mxu0 0.0
      %4206 = vmatprep.subr.mxu0 0.0
      %4207 = vmatpush1.msra.mxu0 0.0
      %4208 = vmatprep.subr.mxu0 0.0
      %4209 = vmatpush1.msra.mxu0 0.0
      %4210 = vmatprep.subr.mxu0 0.0
      %4211 = vmatpush1.msra.mxu0 0.0
      %4212 = vmatprep.subr.mxu0 0.0
      %4213 = vmatpush1.msra.mxu0 0.0
      %4214 = vmatprep.subr.mxu0 0.0
      %4215 = vmatpush1.msra.mxu0 0.0
      %4216 = vmatprep.subr.mxu0 0.0
      %4217 = vmatpush1.msra.mxu0 0.0
      %4218 = vmatprep.subr.mxu0 0.0
      %4219 = vmatpush1.msra.mxu0 0.0
      %4220 = vmatprep.subr.mxu0 0.0
      %4221 = vmatpush1.msra.mxu0 0.0
      %4222 = vmatprep.subr.mxu0 0.0
      %4223 = vmatpush1.msra.mxu0 0.0
      %4224 = vmatprep.subr.mxu0 0.0
      %4225 = vmatpush1.msra.mxu0 0.0
      %4226 = vmatprep.subr.mxu0 0.0
      %4227 = vmatpush1.msra.mxu0 0.0
      %4228 = vmatprep.mubr.f32.mxu0 0.0
      %4229 = vmatmul.mubr.f32.gmra.mrb[0].mxu0 %v4162
      %v4230 = vpop.f32.mrb[0].mxu0
      %v4231 = vadd.f32 0.0, %v4230
      %v4232 = vpop.f32.mrb[0].mxu0
      %4233 = vdwg.mxu0
      %v4235 = vsel %vm2337, %v4158, 0
      %4237 = vmatprep.subr.mxu0 0.0
      %4238 = vmatpush1.msra.mxu0 %v3666
      %4239 = vmatprep.subr.mxu0 0.0
      %4240 = vmatpush1.msra.mxu0 0.0
      %4241 = vmatprep.subr.mxu0 0.0
      %4242 = vmatpush1.msra.mxu0 0.0
      %4243 = vmatprep.subr.mxu0 0.0
      %4244 = vmatpush1.msra.mxu0 0.0
      %4245 = vmatprep.subr.mxu0 0.0
      %4246 = vmatpush1.msra.mxu0 0.0
      %4247 = vmatprep.subr.mxu0 0.0
      %4248 = vmatpush1.msra.mxu0 0.0
      %4249 = vmatprep.subr.mxu0 0.0
      %4250 = vmatpush1.msra.mxu0 0.0
      %4251 = vmatprep.subr.mxu0 0.0
      %4252 = vmatpush1.msra.mxu0 0.0
      %4253 = vmatprep.subr.mxu0 0.0
      %4254 = vmatpush1.msra.mxu0 0.0
      %4255 = vmatprep.subr.mxu0 0.0
      %4256 = vmatpush1.msra.mxu0 0.0
      %4257 = vmatprep.subr.mxu0 0.0
      %4258 = vmatpush1.msra.mxu0 0.0
      %4259 = vmatprep.subr.mxu0 0.0
      %4260 = vmatpush1.msra.mxu0 0.0
      %4261 = vmatprep.subr.mxu0 0.0
      %4262 = vmatpush1.msra.mxu0 0.0
      %4263 = vmatprep.subr.mxu0 0.0
      %4264 = vmatpush1.msra.mxu0 0.0
      %4265 = vmatprep.subr.mxu0 0.0
      %4266 = vmatpush1.msra.mxu0 0.0
      %4267 = vmatprep.subr.mxu0 0.0
      %4268 = vmatpush1.msra.mxu0 0.0
      %4269 = vmatprep.subr.mxu0 0.0
      %4270 = vmatpush1.msra.mxu0 0.0
      %4271 = vmatprep.subr.mxu0 0.0
      %4272 = vmatpush1.msra.mxu0 0.0
      %4273 = vmatprep.subr.mxu0 0.0
      %4274 = vmatpush1.msra.mxu0 0.0
      %4275 = vmatprep.subr.mxu0 0.0
      %4276 = vmatpush1.msra.mxu0 0.0
      %4277 = vmatprep.subr.mxu0 0.0
      %4278 = vmatpush1.msra.mxu0 0.0
      %4279 = vmatprep.subr.mxu0 0.0
      %4280 = vmatpush1.msra.mxu0 0.0
      %4281 = vmatprep.subr.mxu0 0.0
      %4282 = vmatpush1.msra.mxu0 0.0
      %4283 = vmatprep.subr.mxu0 0.0
      %4284 = vmatpush1.msra.mxu0 0.0
      %4285 = vmatprep.subr.mxu0 0.0
      %4286 = vmatpush1.msra.mxu0 0.0
      %4287 = vmatprep.subr.mxu0 0.0
      %4288 = vmatpush1.msra.mxu0 0.0
      %4289 = vmatprep.subr.mxu0 0.0
      %4290 = vmatpush1.msra.mxu0 0.0
      %4291 = vmatprep.subr.mxu0 0.0
      %4292 = vmatpush1.msra.mxu0 0.0
      %4293 = vmatprep.subr.mxu0 0.0
      %4294 = vmatpush1.msra.mxu0 0.0
      %4295 = vmatprep.subr.mxu0 0.0
      %4296 = vmatpush1.msra.mxu0 0.0
      %4297 = vmatprep.subr.mxu0 0.0
      %4298 = vmatpush1.msra.mxu0 0.0
      %4299 = vmatprep.subr.mxu0 0.0
      %4300 = vmatpush1.msra.mxu0 0.0
      %4301 = vmatprep.mubr.f32.mxu0 0.0
      %4302 = vmatmul.mubr.f32.gmra.mrb[0].mxu0 %v4235
      %v4303 = vpop.f32.mrb[0].mxu0
      %v4304 = vadd.f32 0.0, %v4303
      %v4305 = vpop.f32.mrb[0].mxu0
      %4306 = vdwg.mxu0
      %v4308 = vsel %vm2337, %v4159, 0
      %4310 = vmatprep.subr.mxu0 0.0
      %4311 = vmatpush1.msra.mxu0 %v3736
      %4312 = vmatprep.subr.mxu0 0.0
      %4313 = vmatpush1.msra.mxu0 0.0
      %4314 = vmatprep.subr.mxu0 0.0
      %4315 = vmatpush1.msra.mxu0 0.0
      %4316 = vmatprep.subr.mxu0 0.0
      %4317 = vmatpush1.msra.mxu0 0.0
      %4318 = vmatprep.subr.mxu0 0.0
      %4319 = vmatpush1.msra.mxu0 0.0
      %4320 = vmatprep.subr.mxu0 0.0
      %4321 = vmatpush1.msra.mxu0 0.0
      %4322 = vmatprep.subr.mxu0 0.0
      %4323 = vmatpush1.msra.mxu0 0.0
      %4324 = vmatprep.subr.mxu0 0.0
      %4325 = vmatpush1.msra.mxu0 0.0
      %4326 = vmatprep.subr.mxu0 0.0
      %4327 = vmatpush1.msra.mxu0 0.0
      %4328 = vmatprep.subr.mxu0 0.0
      %4329 = vmatpush1.msra.mxu0 0.0
      %4330 = vmatprep.subr.mxu0 0.0
      %4331 = vmatpush1.msra.mxu0 0.0
      %4332 = vmatprep.subr.mxu0 0.0
      %4333 = vmatpush1.msra.mxu0 0.0
      %4334 = vmatprep.subr.mxu0 0.0
      %4335 = vmatpush1.msra.mxu0 0.0
      %4336 = vmatprep.subr.mxu0 0.0
      %4337 = vmatpush1.msra.mxu0 0.0
      %4338 = vmatprep.subr.mxu0 0.0
      %4339 = vmatpush1.msra.mxu0 0.0
      %4340 = vmatprep.subr.mxu0 0.0
      %4341 = vmatpush1.msra.mxu0 0.0
      %4342 = vmatprep.subr.mxu0 0.0
      %4343 = vmatpush1.msra.mxu0 0.0
      %4344 = vmatprep.subr.mxu0 0.0
      %4345 = vmatpush1.msra.mxu0 0.0
      %4346 = vmatprep.subr.mxu0 0.0
      %4347 = vmatpush1.msra.mxu0 0.0
      %4348 = vmatprep.subr.mxu0 0.0
      %4349 = vmatpush1.msra.mxu0 0.0
      %4350 = vmatprep.subr.mxu0 0.0
      %4351 = vmatpush1.msra.mxu0 0.0
      %4352 = vmatprep.subr.mxu0 0.0
      %4353 = vmatpush1.msra.mxu0 0.0
      %4354 = vmatprep.subr.mxu0 0.0
      %4355 = vmatpush1.msra.mxu0 0.0
      %4356 = vmatprep.subr.mxu0 0.0
      %4357 = vmatpush1.msra.mxu0 0.0
      %4358 = vmatprep.subr.mxu0 0.0
      %4359 = vmatpush1.msra.mxu0 0.0
      %4360 = vmatprep.subr.mxu0 0.0
      %4361 = vmatpush1.msra.mxu0 0.0
      %4362 = vmatprep.subr.mxu0 0.0
      %4363 = vmatpush1.msra.mxu0 0.0
      %4364 = vmatprep.subr.mxu0 0.0
      %4365 = vmatpush1.msra.mxu0 0.0
      %4366 = vmatprep.subr.mxu0 0.0
      %4367 = vmatpush1.msra.mxu0 0.0
      %4368 = vmatprep.subr.mxu0 0.0
      %4369 = vmatpush1.msra.mxu0 0.0
      %4370 = vmatprep.subr.mxu0 0.0
      %4371 = vmatpush1.msra.mxu0 0.0
      %4372 = vmatprep.subr.mxu0 0.0
      %4373 = vmatpush1.msra.mxu0 0.0
      %4374 = vmatprep.mubr.f32.mxu0 0.0
      %4375 = vmatmul.mubr.f32.gmra.mrb[0].mxu0 %v4308
      %v4376 = vpop.f32.mrb[0].mxu0
      %v4377 = vadd.f32 0.0, %v4376
      %v4378 = vpop.f32.mrb[0].mxu0
      %4379 = vdwg.mxu0
      %v4381 = vsel %vm2337, %v4160, 0
      %4383 = vmatprep.subr.mxu0 0.0
      %4384 = vmatpush1.msra.mxu0 %v3806
      %4385 = vmatprep.subr.mxu0 0.0
      %4386 = vmatpush1.msra.mxu0 0.0
      %4387 = vmatprep.subr.mxu0 0.0
      %4388 = vmatpush1.msra.mxu0 0.0
      %4389 = vmatprep.subr.mxu0 0.0
      %4390 = vmatpush1.msra.mxu0 0.0
      %4391 = vmatprep.subr.mxu0 0.0
      %4392 = vmatpush1.msra.mxu0 0.0
      %4393 = vmatprep.subr.mxu0 0.0
      %4394 = vmatpush1.msra.mxu0 0.0
      %4395 = vmatprep.subr.mxu0 0.0
      %4396 = vmatpush1.msra.mxu0 0.0
      %4397 = vmatprep.subr.mxu0 0.0
      %4398 = vmatpush1.msra.mxu0 0.0
      %4399 = vmatprep.subr.mxu0 0.0
      %4400 = vmatpush1.msra.mxu0 0.0
      %4401 = vmatprep.subr.mxu0 0.0
      %4402 = vmatpush1.msra.mxu0 0.0
      %4403 = vmatprep.subr.mxu0 0.0
      %4404 = vmatpush1.msra.mxu0 0.0
      %4405 = vmatprep.subr.mxu0 0.0
      %4406 = vmatpush1.msra.mxu0 0.0
      %4407 = vmatprep.subr.mxu0 0.0
      %4408 = vmatpush1.msra.mxu0 0.0
      %4409 = vmatprep.subr.mxu0 0.0
      %4410 = vmatpush1.msra.mxu0 0.0
      %4411 = vmatprep.subr.mxu0 0.0
      %4412 = vmatpush1.msra.mxu0 0.0
      %4413 = vmatprep.subr.mxu0 0.0
      %4414 = vmatpush1.msra.mxu0 0.0
      %4415 = vmatprep.subr.mxu0 0.0
      %4416 = vmatpush1.msra.mxu0 0.0
      %4417 = vmatprep.subr.mxu0 0.0
      %4418 = vmatpush1.msra.mxu0 0.0
      %4419 = vmatprep.subr.mxu0 0.0
      %4420 = vmatpush1.msra.mxu0 0.0
      %4421 = vmatprep.subr.mxu0 0.0
      %4422 = vmatpush1.msra.mxu0 0.0
      %4423 = vmatprep.subr.mxu0 0.0
      %4424 = vmatpush1.msra.mxu0 0.0
      %4425 = vmatprep.subr.mxu0 0.0
      %4426 = vmatpush1.msra.mxu0 0.0
      %4427 = vmatprep.subr.mxu0 0.0
      %4428 = vmatpush1.msra.mxu0 0.0
      %4429 = vmatprep.subr.mxu0 0.0
      %4430 = vmatpush1.msra.mxu0 0.0
      %4431 = vmatprep.subr.mxu0 0.0
      %4432 = vmatpush1.msra.mxu0 0.0
      %4433 = vmatprep.subr.mxu0 0.0
      %4434 = vmatpush1.msra.mxu0 0.0
      %4435 = vmatprep.subr.mxu0 0.0
      %4436 = vmatpush1.msra.mxu0 0.0
      %4437 = vmatprep.subr.mxu0 0.0
      %4438 = vmatpush1.msra.mxu0 0.0
      %4439 = vmatprep.subr.mxu0 0.0
      %4440 = vmatpush1.msra.mxu0 0.0
      %4441 = vmatprep.subr.mxu0 0.0
      %4442 = vmatpush1.msra.mxu0 0.0
      %4443 = vmatprep.subr.mxu0 0.0
      %4444 = vmatpush1.msra.mxu0 0.0
      %4445 = vmatprep.subr.mxu0 0.0
      %4446 = vmatpush1.msra.mxu0 0.0
      %4447 = vmatprep.mubr.f32.mxu0 0.0
      %4448 = vmatmul.mubr.f32.gmra.mrb[0].mxu0 %v4381
      %v4449 = vpop.f32.mrb[0].mxu0
      %v4450 = vadd.f32 0.0, %v4449
      %v4451 = vpop.f32.mrb[0].mxu0
      %4452 = vdwg.mxu0
      %v4454 = vsel %vm2028, %v4231, 0
      %4456 = vmatprep.subr.mxu0 0.0
      %4457 = vmatpush1.msra.mxu0 %v1156
      %4458 = vmatprep.subr.mxu0 0.0
      %4459 = vmatpush1.msra.mxu0 %v1157
      %4460 = vmatprep.subr.mxu0 0.0
      %4461 = vmatpush1.msra.mxu0 %v1158
      %4462 = vmatprep.subr.mxu0 0.0
      %4463 = vmatpush1.msra.mxu0 %v1159
      %4464 = vmatprep.subr.mxu0 0.0
      %4465 = vmatpush1.msra.mxu0 %v1160
      %4466 = vmatprep.subr.mxu0 0.0
      %4467 = vmatpush1.msra.mxu0 %v1161
      %4468 = vmatprep.subr.mxu0 0.0
      %4469 = vmatpush1.msra.mxu0 %v1162
      %4470 = vmatprep.subr.mxu0 0.0
      %4471 = vmatpush1.msra.mxu0 %v1163
      %4472 = vmatprep.subr.mxu0 0.0
      %4473 = vmatpush1.msra.mxu0 0.0
      %4474 = vmatprep.subr.mxu0 0.0
      %4475 = vmatpush1.msra.mxu0 0.0
      %4476 = vmatprep.subr.mxu0 0.0
      %4477 = vmatpush1.msra.mxu0 0.0
      %4478 = vmatprep.subr.mxu0 0.0
      %4479 = vmatpush1.msra.mxu0 0.0
      %4480 = vmatprep.subr.mxu0 0.0
      %4481 = vmatpush1.msra.mxu0 0.0
      %4482 = vmatprep.subr.mxu0 0.0
      %4483 = vmatpush1.msra.mxu0 0.0
      %4484 = vmatprep.subr.mxu0 0.0
      %4485 = vmatpush1.msra.mxu0 0.0
      %4486 = vmatprep.subr.mxu0 0.0
      %4487 = vmatpush1.msra.mxu0 0.0
      %4488 = vmatprep.subr.mxu0 0.0
      %4489 = vmatpush1.msra.mxu0 0.0
      %4490 = vmatprep.subr.mxu0 0.0
      %4491 = vmatpush1.msra.mxu0 0.0
      %4492 = vmatprep.subr.mxu0 0.0
      %4493 = vmatpush1.msra.mxu0 0.0
      %4494 = vmatprep.subr.mxu0 0.0
      %4495 = vmatpush1.msra.mxu0 0.0
      %4496 = vmatprep.subr.mxu0 0.0
      %4497 = vmatpush1.msra.mxu0 0.0
      %4498 = vmatprep.subr.mxu0 0.0
      %4499 = vmatpush1.msra.mxu0 0.0
      %4500 = vmatprep.subr.mxu0 0.0
      %4501 = vmatpush1.msra.mxu0 0.0
      %4502 = vmatprep.subr.mxu0 0.0
      %4503 = vmatpush1.msra.mxu0 0.0
      %4504 = vmatprep.subr.mxu0 0.0
      %4505 = vmatpush1.msra.mxu0 0.0
      %4506 = vmatprep.subr.mxu0 0.0
      %4507 = vmatpush1.msra.mxu0 0.0
      %4508 = vmatprep.subr.mxu0 0.0
      %4509 = vmatpush1.msra.mxu0 0.0
      %4510 = vmatprep.subr.mxu0 0.0
      %4511 = vmatpush1.msra.mxu0 0.0
      %4512 = vmatprep.subr.mxu0 0.0
      %4513 = vmatpush1.msra.mxu0 0.0
      %4514 = vmatprep.subr.mxu0 0.0
      %4515 = vmatpush1.msra.mxu0 0.0
      %4516 = vmatprep.subr.mxu0 0.0
      %4517 = vmatpush1.msra.mxu0 0.0
      %4518 = vmatprep.subr.mxu0 0.0
      %4519 = vmatpush1.msra.mxu0 0.0
      %4520 = vmatprep.mubr.f32.mxu0 0.0
      %4521 = vmatmul.mubr.f32.gmra.mrb[0].mxu0 %v4454
      %v4522 = vpop.f32.mrb[0].mxu0
      %v4523 = vadd.f32 0.0, %v4522
      %v4524 = vpop.f32.mrb[0].mxu0
      %4525 = vdwg.mxu0
      %v4527 = vsel %vm2028, %v4304, 0
      %4529 = vmatprep.subr.mxu0 0.0
      %4530 = vmatpush1.msra.mxu0 %v1164
      %4531 = vmatprep.subr.mxu0 0.0
      %4532 = vmatpush1.msra.mxu0 %v1165
      %4533 = vmatprep.subr.mxu0 0.0
      %4534 = vmatpush1.msra.mxu0 %v1166
      %4535 = vmatprep.subr.mxu0 0.0
      %4536 = vmatpush1.msra.mxu0 %v1167
      %4537 = vmatprep.subr.mxu0 0.0
      %4538 = vmatpush1.msra.mxu0 %v1168
      %4539 = vmatprep.subr.mxu0 0.0
      %4540 = vmatpush1.msra.mxu0 %v1169
      %4541 = vmatprep.subr.mxu0 0.0
      %4542 = vmatpush1.msra.mxu0 %v1170
      %4543 = vmatprep.subr.mxu0 0.0
      %4544 = vmatpush1.msra.mxu0 %v1171
      %4545 = vmatprep.subr.mxu0 0.0
      %4546 = vmatpush1.msra.mxu0 0.0
      %4547 = vmatprep.subr.mxu0 0.0
      %4548 = vmatpush1.msra.mxu0 0.0
      %4549 = vmatprep.subr.mxu0 0.0
      %4550 = vmatpush1.msra.mxu0 0.0
      %4551 = vmatprep.subr.mxu0 0.0
      %4552 = vmatpush1.msra.mxu0 0.0
      %4553 = vmatprep.subr.mxu0 0.0
      %4554 = vmatpush1.msra.mxu0 0.0
      %4555 = vmatprep.subr.mxu0 0.0
      %4556 = vmatpush1.msra.mxu0 0.0
      %4557 = vmatprep.subr.mxu0 0.0
      %4558 = vmatpush1.msra.mxu0 0.0
      %4559 = vmatprep.subr.mxu0 0.0
      %4560 = vmatpush1.msra.mxu0 0.0
      %4561 = vmatprep.subr.mxu0 0.0
      %4562 = vmatpush1.msra.mxu0 0.0
      %4563 = vmatprep.subr.mxu0 0.0
      %4564 = vmatpush1.msra.mxu0 0.0
      %4565 = vmatprep.subr.mxu0 0.0
      %4566 = vmatpush1.msra.mxu0 0.0
      %4567 = vmatprep.subr.mxu0 0.0
      %4568 = vmatpush1.msra.mxu0 0.0
      %4569 = vmatprep.subr.mxu0 0.0
      %4570 = vmatpush1.msra.mxu0 0.0
      %4571 = vmatprep.subr.mxu0 0.0
      %4572 = vmatpush1.msra.mxu0 0.0
      %4573 = vmatprep.subr.mxu0 0.0
      %4574 = vmatpush1.msra.mxu0 0.0
      %4575 = vmatprep.subr.mxu0 0.0
      %4576 = vmatpush1.msra.mxu0 0.0
      %4577 = vmatprep.subr.mxu0 0.0
      %4578 = vmatpush1.msra.mxu0 0.0
      %4579 = vmatprep.subr.mxu0 0.0
      %4580 = vmatpush1.msra.mxu0 0.0
      %4581 = vmatprep.subr.mxu0 0.0
      %4582 = vmatpush1.msra.mxu0 0.0
      %4583 = vmatprep.subr.mxu0 0.0
      %4584 = vmatpush1.msra.mxu0 0.0
      %4585 = vmatprep.subr.mxu0 0.0
      %4586 = vmatpush1.msra.mxu0 0.0
      %4587 = vmatprep.subr.mxu0 0.0
      %4588 = vmatpush1.msra.mxu0 0.0
      %4589 = vmatprep.subr.mxu0 0.0
      %4590 = vmatpush1.msra.mxu0 0.0
      %4591 = vmatprep.subr.mxu0 0.0
      %4592 = vmatpush1.msra.mxu0 0.0
      %4593 = vmatprep.mubr.f32.mxu0 0.0
      %4594 = vmatmul.mubr.f32.gmra.mrb[0].mxu0 %v4527
      %v4595 = vpop.f32.mrb[0].mxu0
      %v4596 = vadd.f32 0.0, %v4595
      %v4597 = vpop.f32.mrb[0].mxu0
      %4598 = vdwg.mxu0
      %v4600 = vsel %vm2028, %v4377, 0
      %4602 = vmatprep.subr.mxu0 0.0
      %4603 = vmatpush1.msra.mxu0 %v1172
      %4604 = vmatprep.subr.mxu0 0.0
      %4605 = vmatpush1.msra.mxu0 %v1173
      %4606 = vmatprep.subr.mxu0 0.0
      %4607 = vmatpush1.msra.mxu0 %v1174
      %4608 = vmatprep.subr.mxu0 0.0
      %4609 = vmatpush1.msra.mxu0 %v1175
      %4610 = vmatprep.subr.mxu0 0.0
      %4611 = vmatpush1.msra.mxu0 %v1176
      %4612 = vmatprep.subr.mxu0 0.0
      %4613 = vmatpush1.msra.mxu0 %v1177
      %4614 = vmatprep.subr.mxu0 0.0
      %4615 = vmatpush1.msra.mxu0 %v1178
      %4616 = vmatprep.subr.mxu0 0.0
      %4617 = vmatpush1.msra.mxu0 %v1179
      %4618 = vmatprep.subr.mxu0 0.0
      %4619 = vmatpush1.msra.mxu0 0.0
      %4620 = vmatprep.subr.mxu0 0.0
      %4621 = vmatpush1.msra.mxu0 0.0
      %4622 = vmatprep.subr.mxu0 0.0
      %4623 = vmatpush1.msra.mxu0 0.0
      %4624 = vmatprep.subr.mxu0 0.0
      %4625 = vmatpush1.msra.mxu0 0.0
      %4626 = vmatprep.subr.mxu0 0.0
      %4627 = vmatpush1.msra.mxu0 0.0
      %4628 = vmatprep.subr.mxu0 0.0
      %4629 = vmatpush1.msra.mxu0 0.0
      %4630 = vmatprep.subr.mxu0 0.0
      %4631 = vmatpush1.msra.mxu0 0.0
      %4632 = vmatprep.subr.mxu0 0.0
      %4633 = vmatpush1.msra.mxu0 0.0
      %4634 = vmatprep.subr.mxu0 0.0
      %4635 = vmatpush1.msra.mxu0 0.0
      %4636 = vmatprep.subr.mxu0 0.0
      %4637 = vmatpush1.msra.mxu0 0.0
      %4638 = vmatprep.subr.mxu0 0.0
      %4639 = vmatpush1.msra.mxu0 0.0
      %4640 = vmatprep.subr.mxu0 0.0
      %4641 = vmatpush1.msra.mxu0 0.0
      %4642 = vmatprep.subr.mxu0 0.0
      %4643 = vmatpush1.msra.mxu0 0.0
      %4644 = vmatprep.subr.mxu0 0.0
      %4645 = vmatpush1.msra.mxu0 0.0
      %4646 = vmatprep.subr.mxu0 0.0
      %4647 = vmatpush1.msra.mxu0 0.0
      %4648 = vmatprep.subr.mxu0 0.0
      %4649 = vmatpush1.msra.mxu0 0.0
      %4650 = vmatprep.subr.mxu0 0.0
      %4651 = vmatpush1.msra.mxu0 0.0
      %4652 = vmatprep.subr.mxu0 0.0
      %4653 = vmatpush1.msra.mxu0 0.0
      %4654 = vmatprep.subr.mxu0 0.0
      %4655 = vmatpush1.msra.mxu0 0.0
      %4656 = vmatprep.subr.mxu0 0.0
      %4657 = vmatpush1.msra.mxu0 0.0
      %4658 = vmatprep.subr.mxu0 0.0
      %4659 = vmatpush1.msra.mxu0 0.0
      %4660 = vmatprep.subr.mxu0 0.0
      %4661 = vmatpush1.msra.mxu0 0.0
      %4662 = vmatprep.subr.mxu0 0.0
      %4663 = vmatpush1.msra.mxu0 0.0
      %4664 = vmatprep.subr.mxu0 0.0
      %4665 = vmatpush1.msra.mxu0 0.0
      %4666 = vmatprep.mubr.f32.mxu0 0.0
      %4667 = vmatmul.mubr.f32.gmra.mrb[0].mxu0 %v4600
      %v4668 = vpop.f32.mrb[0].mxu0
      %v4669 = vadd.f32 0.0, %v4668
      %v4670 = vpop.f32.mrb[0].mxu0
      %4671 = vdwg.mxu0
      %v4673 = vsel %vm2028, %v4450, 0
      %4675 = vmatprep.subr.mxu0 0.0
      %4676 = vmatpush1.msra.mxu0 %v1180
      %4677 = vmatprep.subr.mxu0 0.0
      %4678 = vmatpush1.msra.mxu0 %v1181
      %4679 = vmatprep.subr.mxu0 0.0
      %4680 = vmatpush1.msra.mxu0 %v1182
      %4681 = vmatprep.subr.mxu0 0.0
      %4682 = vmatpush1.msra.mxu0 %v1183
      %4683 = vmatprep.subr.mxu0 0.0
      %4684 = vmatpush1.msra.mxu0 %v1184
      %4685 = vmatprep.subr.mxu0 0.0
      %4686 = vmatpush1.msra.mxu0 %v1185
      %4687 = vmatprep.subr.mxu0 0.0
      %4688 = vmatpush1.msra.mxu0 %v1186
      %4689 = vmatprep.subr.mxu0 0.0
      %4690 = vmatpush1.msra.mxu0 %v1187
      %4691 = vmatprep.subr.mxu0 0.0
      %4692 = vmatpush1.msra.mxu0 0.0
      %4693 = vmatprep.subr.mxu0 0.0
      %4694 = vmatpush1.msra.mxu0 0.0
      %4695 = vmatprep.subr.mxu0 0.0
      %4696 = vmatpush1.msra.mxu0 0.0
      %4697 = vmatprep.subr.mxu0 0.0
      %4698 = vmatpush1.msra.mxu0 0.0
      %4699 = vmatprep.subr.mxu0 0.0
      %4700 = vmatpush1.msra.mxu0 0.0
      %4701 = vmatprep.subr.mxu0 0.0
      %4702 = vmatpush1.msra.mxu0 0.0
      %4703 = vmatprep.subr.mxu0 0.0
      %4704 = vmatpush1.msra.mxu0 0.0
      %4705 = vmatprep.subr.mxu0 0.0
      %4706 = vmatpush1.msra.mxu0 0.0
      %4707 = vmatprep.subr.mxu0 0.0
      %4708 = vmatpush1.msra.mxu0 0.0
      %4709 = vmatprep.subr.mxu0 0.0
      %4710 = vmatpush1.msra.mxu0 0.0
      %4711 = vmatprep.subr.mxu0 0.0
      %4712 = vmatpush1.msra.mxu0 0.0
      %4713 = vmatprep.subr.mxu0 0.0
      %4714 = vmatpush1.msra.mxu0 0.0
      %4715 = vmatprep.subr.mxu0 0.0
      %4716 = vmatpush1.msra.mxu0 0.0
      %4717 = vmatprep.subr.mxu0 0.0
      %4718 = vmatpush1.msra.mxu0 0.0
      %4719 = vmatprep.subr.mxu0 0.0
      %4720 = vmatpush1.msra.mxu0 0.0
      %4721 = vmatprep.subr.mxu0 0.0
      %4722 = vmatpush1.msra.mxu0 0.0
      %4723 = vmatprep.subr.mxu0 0.0
      %4724 = vmatpush1.msra.mxu0 0.0
      %4725 = vmatprep.subr.mxu0 0.0
      %4726 = vmatpush1.msra.mxu0 0.0
      %4727 = vmatprep.subr.mxu0 0.0
      %4728 = vmatpush1.msra.mxu0 0.0
      %4729 = vmatprep.subr.mxu0 0.0
      %4730 = vmatpush1.msra.mxu0 0.0
      %4731 = vmatprep.subr.mxu0 0.0
      %4732 = vmatpush1.msra.mxu0 0.0
      %4733 = vmatprep.subr.mxu0 0.0
      %4734 = vmatpush1.msra.mxu0 0.0
      %4735 = vmatprep.subr.mxu0 0.0
      %4736 = vmatpush1.msra.mxu0 0.0
      %4737 = vmatprep.subr.mxu0 0.0
      %4738 = vmatpush1.msra.mxu0 0.0
      %4739 = vmatprep.mubr.f32.mxu0 0.0
      %4740 = vmatmul.mubr.f32.gmra.mrb[0].mxu0 %v4673
      %v4741 = vpop.f32.mrb[0].mxu0
      %v4742 = vadd.f32 0.0, %v4741
      %v4743 = vpop.f32.mrb[0].mxu0
      %4744 = vdwg.mxu0
      %v4745 = vadd.f32 %v4523, %v4596
      %v4746 = vadd.f32 %v4745, %v4669
      %v4747 = vadd.f32 %v4746, %v4742
      %v4748 = vld [vmem:[%s790] sm:$0x1]
      %v4750 = vlaneseq
      %v4751 = vshrl.u32 %v4750, 7
      %v4752 = vsub.s32 0, %v4751
      %v4753 = vrot.slane %v4748, %v4752
      %v4755 = vadd.f32 %v2968, %v4753
      %v4756 = vadd.f32 %v4747, %v4753
      %v4757 = vadd.f32 %v917, %v4755
      %v4758 = vadd.f32 %v918, %v4756
      %v4759 = vld [vmem:[%s793] sm:$0x1]
      %v4760 = vld [vmem:[%s796] sm:$0x1]
      %4761 = vadd.xlane.f32.xlu0 %v4757
      %v4762 = vpop.xlane.xlu0 %4761
      %4763 = vadd.xlane.f32.xlu0 %v4758
      %v4764 = vpop.xlane.xlu0 %4763
      %v4765 = vmul.f32 %v4762, %v925
      %v4766 = vmul.f32 %v4764, %v925
      %v4767 = vmul.f32 %v4757, %v4757
      %v4768 = vmul.f32 %v4758, %v4758
      %4769 = vadd.xlane.f32.xlu0 %v4767
      %v4770 = vpop.xlane.xlu0 %4769
      %4771 = vadd.xlane.f32.xlu0 %v4768
      %v4772 = vpop.xlane.xlu0 %4771
      %v4773 = vmul.f32 %v4770, %v925
      %v4774 = vmul.f32 %v4772, %v925
      %v4775 = vmul.f32 %v4765, %v4765
      %v4776 = vmul.f32 %v4766, %v4766
      %v4777 = vsub.f32 %v4773, %v4775
      %v4778 = vsub.f32 %v4774, %v4776
      %v4779 = vsub.f32 %v4757, %v4765
      %v4780 = vsub.f32 %v4758, %v4766
      %v4781 = vadd.f32 %v4777, 1e-05
      %v4782 = vadd.f32 %v4778, 1e-05
      %v4783 = vrsqrt.pop %v4781
      %v4784 = vrsqrt.pop %v4782
      %v4785 = vmul.f32 %v4779, %v4783
      %v4786 = vmul.f32 %v4780, %v4784
      %v4788 = vlaneseq
      %v4789 = vshrl.u32 %v4788, 7
      %v4790 = vsub.s32 0, %v4789
      %v4791 = vrot.slane %v4759, %v4790
      %v4793 = vmul.f32 %v4785, %v4791
      %v4794 = vmul.f32 %v4786, %v4791
      %v4796 = vlaneseq
      %v4797 = vshrl.u32 %v4796, 7
      %v4798 = vsub.s32 0, %v4797
      %v4799 = vrot.slane %v4760, %v4798
      %v4801 = vadd.f32 %v4793, %v4799
      %v4802 = vadd.f32 %v4794, %v4799
      %v4803 = vld [vmem:[%s801] sm:$0xff]
      %v4804 = vld [vmem:[%s801 + $0x8] sm:$0xff]
      %v4805 = vld [vmem:[%s801 + $0x10] sm:$0xff]
      %v4806 = vld [vmem:[%s801 + $0x18] sm:$0xff]
      %v4807 = vld [vmem:[%s801 + $0x20] sm:$0xff]
      %v4808 = vld [vmem:[%s801 + $0x28] sm:$0xff]
      %v4809 = vld [vmem:[%s801 + $0x30] sm:$0xff]
      %v4810 = vld [vmem:[%s801 + $0x38] sm:$0xff]
      %v4811 = vld [vmem:[%s801 + $0x40] sm:$0xff]
      %v4812 = vld [vmem:[%s801 + $0x48] sm:$0xff]
      %v4813 = vld [vmem:[%s801 + $0x50] sm:$0xff]
      %v4814 = vld [vmem:[%s801 + $0x58] sm:$0xff]
      %v4815 = vld [vmem:[%s801 + $0x60] sm:$0xff]
      %v4816 = vld [vmem:[%s801 + $0x68] sm:$0xff]
      %v4817 = vld [vmem:[%s801 + $0x70] sm:$0xff]
      %v4818 = vld [vmem:[%s801 + $0x78] sm:$0xff]
      %v4819 = vld [vmem:[%s804] sm:$0x1]
      %v4821 = vlaneseq
      %v4822 = vshrl.u32 %v4821, 7
      %v4823 = vsub.s32 0, %v4822
      %v4824 = vrot.slane %v4819, %v4823
      %4826 = vmatprep.subr.mxu0 0.0
      %4827 = vmatpush1.msra.mxu0 %v4803
      %4828 = vmatprep.subr.mxu0 0.0
      %4829 = vmatpush1.msra.mxu0 %v4804
      %4830 = vmatprep.subr.mxu0 0.0
      %4831 = vmatpush1.msra.mxu0 %v4805
      %4832 = vmatprep.subr.mxu0 0.0
      %4833 = vmatpush1.msra.mxu0 %v4806
      %4834 = vmatprep.subr.mxu0 0.0
      %4835 = vmatpush1.msra.mxu0 %v4807
      %4836 = vmatprep.subr.mxu0 0.0
      %4837 = vmatpush1.msra.mxu0 %v4808
      %4838 = vmatprep.subr.mxu0 0.0
      %4839 = vmatpush1.msra.mxu0 %v4809
      %4840 = vmatprep.subr.mxu0 0.0
      %4841 = vmatpush1.msra.mxu0 %v4810
      %4842 = vmatprep.subr.mxu0 0.0
      %4843 = vmatpush1.msra.mxu0 %v4811
      %4844 = vmatprep.subr.mxu0 0.0
      %4845 = vmatpush1.msra.mxu0 %v4812
      %4846 = vmatprep.subr.mxu0 0.0
      %4847 = vmatpush1.msra.mxu0 %v4813
      %4848 = vmatprep.subr.mxu0 0.0
      %4849 = vmatpush1.msra.mxu0 %v4814
      %4850 = vmatprep.subr.mxu0 0.0
      %4851 = vmatpush1.msra.mxu0 %v4815
      %4852 = vmatprep.subr.mxu0 0.0
      %4853 = vmatpush1.msra.mxu0 %v4816
      %4854 = vmatprep.subr.mxu0 0.0
      %4855 = vmatpush1.msra.mxu0 %v4817
      %4856 = vmatprep.subr.mxu0 0.0
      %4857 = vmatpush1.msra.mxu0 %v4818
      %4858 = vmatprep.subr.mxu0 0.0
      %4859 = vmatpush1.msra.mxu0 0.0
      %4860 = vmatprep.subr.mxu0 0.0
      %4861 = vmatpush1.msra.mxu0 0.0
      %4862 = vmatprep.subr.mxu0 0.0
      %4863 = vmatpush1.msra.mxu0 0.0
      %4864 = vmatprep.subr.mxu0 0.0
      %4865 = vmatpush1.msra.mxu0 0.0
      %4866 = vmatprep.subr.mxu0 0.0
      %4867 = vmatpush1.msra.mxu0 0.0
      %4868 = vmatprep.subr.mxu0 0.0
      %4869 = vmatpush1.msra.mxu0 0.0
      %4870 = vmatprep.subr.mxu0 0.0
      %4871 = vmatpush1.msra.mxu0 0.0
      %4872 = vmatprep.subr.mxu0 0.0
      %4873 = vmatpush1.msra.mxu0 0.0
      %4874 = vmatprep.subr.mxu0 0.0
      %4875 = vmatpush1.msra.mxu0 0.0
      %4876 = vmatprep.subr.mxu0 0.0
      %4877 = vmatpush1.msra.mxu0 0.0
      %4878 = vmatprep.subr.mxu0 0.0
      %4879 = vmatpush1.msra.mxu0 0.0
      %4880 = vmatprep.subr.mxu0 0.0
      %4881 = vmatpush1.msra.mxu0 0.0
      %4882 = vmatprep.subr.mxu0 0.0
      %4883 = vmatpush1.msra.mxu0 0.0
      %4884 = vmatprep.subr.mxu0 0.0
      %4885 = vmatpush1.msra.mxu0 0.0
      %4886 = vmatprep.subr.mxu0 0.0
      %4887 = vmatpush1.msra.mxu0 0.0
      %4888 = vmatprep.subr.mxu0 0.0
      %4889 = vmatpush1.msra.mxu0 0.0
      %4890 = vmatprep.mubr.f32.mxu0 0.0
      %4891 = vmatmul.mubr.f32.gmra.mrb[0].mxu0 %v4801
      %v4892 = vpop.f32.mrb[0].mxu0
      %v4893 = vadd.f32 %v4824, %v4892
      %v4894 = vpop.f32.mrb[0].mxu0
      %4895 = vmatprep.mubr.f32.mxu0 0.0
      %4896 = vmatmul.mubr.f32.gmra.mrb[0].mxu0 %v4802
      %v4897 = vpop.f32.mrb[0].mxu0
      %v4898 = vadd.f32 %v4824, %v4897
      %v4899 = vpop.f32.mrb[0].mxu0
      %4900 = vdwg.mxu0
      %v4901 = vmul.f32 %v4893, 0.5
      %v4902 = vmul.f32 %v4898, 0.5
      %v4903 = vmul.f32 %v4893, 0.70710677
      %v4904 = vmul.f32 %v4898, 0.70710677
      %v4905 = verf.f32.pop %v4903
      %v4906 = verf.f32.pop %v4904
      %v4907 = vadd.f32 %v4905, 1.0
      %v4908 = vadd.f32 %v4906, 1.0
      %v4909 = vmul.f32 %v4901, %v4907
      %v4910 = vmul.f32 %v4902, %v4908
      %v4911 = vld [vmem:[%s809] sm:$0xff]
      %v4912 = vld [vmem:[%s809 + $0x8] sm:$0xff]
      %v4913 = vld [vmem:[%s809 + $0x10] sm:$0xff]
      %v4914 = vld [vmem:[%s809 + $0x18] sm:$0xff]
      %v4915 = vld [vmem:[%s809 + $0x20] sm:$0xff]
      %v4916 = vld [vmem:[%s809 + $0x28] sm:$0xff]
      %v4917 = vld [vmem:[%s809 + $0x30] sm:$0xff]
      %v4918 = vld [vmem:[%s809 + $0x38] sm:$0xff]
      %v4919 = vld [vmem:[%s812] sm:$0x1]
      %v4921 = vlaneseq
      %v4922 = vshrl.u32 %v4921, 7
      %v4923 = vsub.s32 0, %v4922
      %v4924 = vrot.slane %v4919, %v4923
      %v4927 = vsel %vm2028, %v4909, 0
      %v4930 = vsel %vm2028, %v4910, 0
      %4932 = vmatprep.subr.mxu0 0.0
      %4933 = vmatpush1.msra.mxu0 %v4911
      %4934 = vmatprep.subr.mxu0 0.0
      %4935 = vmatpush1.msra.mxu0 %v4912
      %4936 = vmatprep.subr.mxu0 0.0
      %4937 = vmatpush1.msra.mxu0 %v4913
      %4938 = vmatprep.subr.mxu0 0.0
      %4939 = vmatpush1.msra.mxu0 %v4914
      %4940 = vmatprep.subr.mxu0 0.0
      %4941 = vmatpush1.msra.mxu0 %v4915
      %4942 = vmatprep.subr.mxu0 0.0
      %4943 = vmatpush1.msra.mxu0 %v4916
      %4944 = vmatprep.subr.mxu0 0.0
      %4945 = vmatpush1.msra.mxu0 %v4917
      %4946 = vmatprep.subr.mxu0 0.0
      %4947 = vmatpush1.msra.mxu0 %v4918
      %4948 = vmatprep.subr.mxu0 0.0
      %4949 = vmatpush1.msra.mxu0 0.0
      %4950 = vmatprep.subr.mxu0 0.0
      %4951 = vmatpush1.msra.mxu0 0.0
      %4952 = vmatprep.subr.mxu0 0.0
      %4953 = vmatpush1.msra.mxu0 0.0
      %4954 = vmatprep.subr.mxu0 0.0
      %4955 = vmatpush1.msra.mxu0 0.0
      %4956 = vmatprep.subr.mxu0 0.0
      %4957 = vmatpush1.msra.mxu0 0.0
      %4958 = vmatprep.subr.mxu0 0.0
      %4959 = vmatpush1.msra.mxu0 0.0
      %4960 = vmatprep.subr.mxu0 0.0
      %4961 = vmatpush1.msra.mxu0 0.0
      %4962 = vmatprep.subr.mxu0 0.0
      %4963 = vmatpush1.msra.mxu0 0.0
      %4964 = vmatprep.subr.mxu0 0.0
      %4965 = vmatpush1.msra.mxu0 0.0
      %4966 = vmatprep.subr.mxu0 0.0
      %4967 = vmatpush1.msra.mxu0 0.0
      %4968 = vmatprep.subr.mxu0 0.0
      %4969 = vmatpush1.msra.mxu0 0.0
      %4970 = vmatprep.subr.mxu0 0.0
      %4971 = vmatpush1.msra.mxu0 0.0
      %4972 = vmatprep.subr.mxu0 0.0
      %4973 = vmatpush1.msra.mxu0 0.0
      %4974 = vmatprep.subr.mxu0 0.0
      %4975 = vmatpush1.msra.mxu0 0.0
      %4976 = vmatprep.subr.mxu0 0.0
      %4977 = vmatpush1.msra.mxu0 0.0
      %4978 = vmatprep.subr.mxu0 0.0
      %4979 = vmatpush1.msra.mxu0 0.0
      %4980 = vmatprep.subr.mxu0 0.0
      %4981 = vmatpush1.msra.mxu0 0.0
      %4982 = vmatprep.subr.mxu0 0.0
      %4983 = vmatpush1.msra.mxu0 0.0
      %4984 = vmatprep.subr.mxu0 0.0
      %4985 = vmatpush1.msra.mxu0 0.0
      %4986 = vmatprep.subr.mxu0 0.0
      %4987 = vmatpush1.msra.mxu0 0.0
      %4988 = vmatprep.subr.mxu0 0.0
      %4989 = vmatpush1.msra.mxu0 0.0
      %4990 = vmatprep.subr.mxu0 0.0
      %4991 = vmatpush1.msra.mxu0 0.0
      %4992 = vmatprep.subr.mxu0 0.0
      %4993 = vmatpush1.msra.mxu0 0.0
      %4994 = vmatprep.subr.mxu0 0.0
      %4995 = vmatpush1.msra.mxu0 0.0
      %4996 = vmatprep.mubr.f32.mxu0 0.0
      %4997 = vmatmul.mubr.f32.gmra.mrb[0].mxu0 %v4927
      %v4998 = vpop.f32.mrb[0].mxu0
      %v4999 = vadd.f32 %v4924, %v4998
      %v5000 = vpop.f32.mrb[0].mxu0
      %5001 = vmatprep.mubr.f32.mxu0 0.0
      %5002 = vmatmul.mubr.f32.gmra.mrb[0].mxu0 %v4930
      %v5003 = vpop.f32.mrb[0].mxu0
      %v5004 = vadd.f32 %v4924, %v5003
      %v5005 = vpop.f32.mrb[0].mxu0
      %5006 = vdwg.mxu0
      %v5007 = vadd.f32 %v4757, %v4999
      %v5008 = vadd.f32 %v4758, %v5004
      %5009 = vst [vmem:[#allocation2] sm:$0xff] %v5007
      %5010 = vst [vmem:[#allocation2 + $0x8] sm:$0xff] %v5008
      %p5011 = scmp.eq.s32.totalorder %s31, 1
      // Predicated region
      $region105: #{tpu_custom_call.1} parent=99 // pred_check
        %p5012 = pneg %p5011
      $region106: #{tpu_custom_call.1} parent=99 // pred_check_branch
        %5014 = sbr.rel (%p5012) target = $region108
      $region107: #{tpu_custom_call.1} parent=99 // pred_region
        %v5015 = vld [vmem:[%s16] sm:$0x1]
        %v5016 = vld [vmem:[%s17] sm:$0x1]
        %5017 = vadd.xlane.f32.xlu0 %v5007
        %v5018 = vpop.xlane.xlu0 %5017
        %5019 = vadd.xlane.f32.xlu0 %v5008
        %v5020 = vpop.xlane.xlu0 %5019
        %v5021 = vmul.f32 %v5018, %v925
        %v5022 = vmul.f32 %v5020, %v925
        %v5023 = vmul.f32 %v5007, %v5007
        %v5024 = vmul.f32 %v5008, %v5008
        %5025 = vadd.xlane.f32.xlu0 %v5023
        %v5026 = vpop.xlane.xlu0 %5025
        %5027 = vadd.xlane.f32.xlu0 %v5024
        %v5028 = vpop.xlane.xlu0 %5027
        %v5029 = vmul.f32 %v5026, %v925
        %v5030 = vmul.f32 %v5028, %v925
        %v5031 = vmul.f32 %v5021, %v5021
        %v5032 = vmul.f32 %v5022, %v5022
        %v5033 = vsub.f32 %v5029, %v5031
        %v5034 = vsub.f32 %v5030, %v5032
        %v5035 = vsub.f32 %v5007, %v5021
        %v5036 = vsub.f32 %v5008, %v5022
        %v5037 = vadd.f32 %v5033, 1e-05
        %v5038 = vadd.f32 %v5034, 1e-05
        %v5039 = vrsqrt.pop %v5037
        %v5040 = vrsqrt.pop %v5038
        %v5041 = vmul.f32 %v5035, %v5039
        %v5042 = vmul.f32 %v5036, %v5040
        %v5044 = vlaneseq
        %v5045 = vshrl.u32 %v5044, 7
        %v5046 = vsub.s32 0, %v5045
        %v5047 = vrot.slane %v5015, %v5046
        %v5049 = vmul.f32 %v5041, %v5047
        %v5050 = vmul.f32 %v5042, %v5047
        %v5052 = vlaneseq
        %v5053 = vshrl.u32 %v5052, 7
        %v5054 = vsub.s32 0, %v5053
        %v5055 = vrot.slane %v5016, %v5054
        %v5057 = vadd.f32 %v5049, %v5055
        %v5058 = vadd.f32 %v5050, %v5055
        %v5059 = vld [vmem:[%s18] sm:$0xff]
        %v5060 = vld [vmem:[%s18 + $0x8] sm:$0xff]
        %v5061 = vld [vmem:[%s18 + $0x10] sm:$0xff]
        %v5062 = vld [vmem:[%s18 + $0x18] sm:$0xff]
        %v5063 = vld [vmem:[%s18 + $0x20] sm:$0xff]
        %v5064 = vld [vmem:[%s18 + $0x28] sm:$0xff]
        %v5065 = vld [vmem:[%s18 + $0x30] sm:$0xff]
        %v5066 = vld [vmem:[%s18 + $0x38] sm:$0xff]
        %v5067 = vld [vmem:[%s18 + $0x40] sm:$0xff]
        %v5068 = vld [vmem:[%s18 + $0x48] sm:$0xff]
        %v5069 = vld [vmem:[%s18 + $0x50] sm:$0xff]
        %v5070 = vld [vmem:[%s18 + $0x58] sm:$0xff]
        %v5071 = vld [vmem:[%s18 + $0x60] sm:$0xff]
        %v5072 = vld [vmem:[%s18 + $0x68] sm:$0xff]
        %v5073 = vld [vmem:[%s18 + $0x70] sm:$0xff]
        %v5074 = vld [vmem:[%s18 + $0x78] sm:$0xff]
        %v5075 = vld [vmem:[%s19] sm:$0x1]
        %v5077 = vlaneseq
        %v5078 = vshrl.u32 %v5077, 7
        %v5079 = vsub.s32 0, %v5078
        %v5080 = vrot.slane %v5075, %v5079
        %5082 = vmatprep.subr.mxu0 0.0
        %5083 = vmatpush1.msra.mxu0 %v5059
        %5084 = vmatprep.subr.mxu0 0.0
        %5085 = vmatpush1.msra.mxu0 %v5060
        %5086 = vmatprep.subr.mxu0 0.0
        %5087 = vmatpush1.msra.mxu0 %v5061
        %5088 = vmatprep.subr.mxu0 0.0
        %5089 = vmatpush1.msra.mxu0 %v5062
        %5090 = vmatprep.subr.mxu0 0.0
        %5091 = vmatpush1.msra.mxu0 %v5063
        %5092 = vmatprep.subr.mxu0 0.0
        %5093 = vmatpush1.msra.mxu0 %v5064
        %5094 = vmatprep.subr.mxu0 0.0
        %5095 = vmatpush1.msra.mxu0 %v5065
        %5096 = vmatprep.subr.mxu0 0.0
        %5097 = vmatpush1.msra.mxu0 %v5066
        %5098 = vmatprep.subr.mxu0 0.0
        %5099 = vmatpush1.msra.mxu0 %v5067
        %5100 = vmatprep.subr.mxu0 0.0
        %5101 = vmatpush1.msra.mxu0 %v5068
        %5102 = vmatprep.subr.mxu0 0.0
        %5103 = vmatpush1.msra.mxu0 %v5069
        %5104 = vmatprep.subr.mxu0 0.0
        %5105 = vmatpush1.msra.mxu0 %v5070
        %5106 = vmatprep.subr.mxu0 0.0
        %5107 = vmatpush1.msra.mxu0 %v5071
        %5108 = vmatprep.subr.mxu0 0.0
        %5109 = vmatpush1.msra.mxu0 %v5072
        %5110 = vmatprep.subr.mxu0 0.0
        %5111 = vmatpush1.msra.mxu0 %v5073
        %5112 = vmatprep.subr.mxu0 0.0
        %5113 = vmatpush1.msra.mxu0 %v5074
        %5114 = vmatprep.subr.mxu0 0.0
        %5115 = vmatpush1.msra.mxu0 0.0
        %5116 = vmatprep.subr.mxu0 0.0
        %5117 = vmatpush1.msra.mxu0 0.0
        %5118 = vmatprep.subr.mxu0 0.0
        %5119 = vmatpush1.msra.mxu0 0.0
        %5120 = vmatprep.subr.mxu0 0.0
        %5121 = vmatpush1.msra.mxu0 0.0
        %5122 = vmatprep.subr.mxu0 0.0
        %5123 = vmatpush1.msra.mxu0 0.0
        %5124 = vmatprep.subr.mxu0 0.0
        %5125 = vmatpush1.msra.mxu0 0.0
        %5126 = vmatprep.subr.mxu0 0.0
        %5127 = vmatpush1.msra.mxu0 0.0
        %5128 = vmatprep.subr.mxu0 0.0
        %5129 = vmatpush1.msra.mxu0 0.0
        %5130 = vmatprep.subr.mxu0 0.0
        %5131 = vmatpush1.msra.mxu0 0.0
        %5132 = vmatprep.subr.mxu0 0.0
        %5133 = vmatpush1.msra.mxu0 0.0
        %5134 = vmatprep.subr.mxu0 0.0
        %5135 = vmatpush1.msra.mxu0 0.0
        %5136 = vmatprep.subr.mxu0 0.0
        %5137 = vmatpush1.msra.mxu0 0.0
        %5138 = vmatprep.subr.mxu0 0.0
        %5139 = vmatpush1.msra.mxu0 0.0
        %5140 = vmatprep.subr.mxu0 0.0
        %5141 = vmatpush1.msra.mxu0 0.0
        %5142 = vmatprep.subr.mxu0 0.0
        %5143 = vmatpush1.msra.mxu0 0.0
        %5144 = vmatprep.subr.mxu0 0.0
        %5145 = vmatpush1.msra.mxu0 0.0
        %5146 = vmatprep.mubr.f32.mxu0 0.0
        %5147 = vmatmul.mubr.f32.gmra.mrb[0].mxu0 %v5057
        %v5148 = vpop.f32.mrb[0].mxu0
        %v5149 = vadd.f32 %v5080, %v5148
        %v5150 = vpop.f32.mrb[0].mxu0
        %5151 = vmatprep.mubr.f32.mxu0 0.0
        %5152 = vmatmul.mubr.f32.gmra.mrb[0].mxu0 %v5058
        %v5153 = vpop.f32.mrb[0].mxu0
        %v5154 = vadd.f32 %v5080, %v5153
        %v5155 = vpop.f32.mrb[0].mxu0
        %5156 = vdwg.mxu0
        %vm5157 = vcmask 15360
        %5158 = vst.msk [vmem:[%s20] sm:$0xff] %vm5157, %v5149
        %5159 = vst.msk [vmem:[%s20 + $0x8] sm:$0xff] %vm5157, %v5154
      $region108: #{tpu_custom_call.1} parent=99 // pred_fallthru
        _
      // Predicated region
      $region109: #{tpu_custom_call.1} parent=99 // pred_check
        %p5160 = pneg %p529
      $region110: #{tpu_custom_call.1} parent=99 // pred_check_branch
        %5162 = sbr.rel (%p5160) target = $region112
      $region111: #{tpu_custom_call.1} parent=99 // pred_region
        _
      $region112: #{tpu_custom_call.1} parent=99 // pred_fallthru
        _
      // Predicated region
      $region113: #{tpu_custom_call.1} parent=99 // pred_check
        %p5163 = pneg %p529
      $region114: #{tpu_custom_call.1} parent=99 // pred_check_branch
        %5165 = sbr.rel (%p5163) target = $region116
      $region115: #{tpu_custom_call.1} parent=99 // pred_region
        _
      $region116: #{tpu_custom_call.1} parent=99 // pred_fallthru
        _
    $region100: #{tpu_custom_call.1} parent=5 // pred_fallthru
      _
    %p5166 = scmp.le.s32.totalorder 2, %s26
    // Predicated region
    $region117: #{tpu_custom_call.1} parent=5 // pred_check
      %p5167 = pneg %p5166
    $region118: #{tpu_custom_call.1} parent=5 // pred_check_branch
      %5169 = sbr.rel (%p5167) target = $region120
    $region119: #{tpu_custom_call.1} parent=5 // pred_region
      %s5170 = ssub.s32 %s26, 2
    $region120: #{tpu_custom_call.1} parent=5 // pred_fallthru
      _
  $region6: #{tpu_custom_call.1} parent=0 // loop_footer
    %s30 = sadd.s32 1, %s26
  $region7: #{tpu_custom_call.1} parent=0 // loop_footer_branch
    %25 = sbr.rel target = $region3
  $region8: #{tpu_custom_call.1} parent=0 // loop_exit
    _

</llo_original>
